<compile_context>
chip_gen: v7x
topology: tpu7x:2x2x1
jax: 0.10.0
libtpu: 0.0.40
codegen_flags: <defaults>
</compile_context>

<pallas_src>
import itertools
import math

import jax
import jax.numpy as jnp
from jax.experimental import pallas as pl
from jax.experimental.pallas import tpu as pltpu

# -------------------- small, deterministic hyper-parameters --------------------
VOCAB = 50
EMB = 32
BATCH = 2
BP = 8              # batch padded to one sublane group
SEQ = 8             # seq_length
HID = 32            # hidden_dim
FEAT = 2 * HID      # bidirectional feature size / packed per-gate width (fwd|bwd)
SBP = SEQ * BP      # padded time-major row count
NUM_CAPS = 8
DIM_CAPS = 8
NCDC = NUM_CAPS * DIM_CAPS
ROUTINGS = 4
OUT_HID = 32        # out_hidden_dim
N_FIRST = 5
COMBOS = list(itertools.combinations(range(N_FIRST), 2))   # 10 second-order pairs

# -------------------- packed parameter buffer layout (rows, width 256) --------------------
PW = 256
EMB_OFF = 0        # (VOCAB, EMB)
LWIH_OFF = 56      # (EMB, 8H)
LWHH_OFF = 88      # (2H, 8H)
LB_OFF = 152       # (1, 8H)
GWIH_OFF = 160     # (2H, 6H)
GWHH_OFF = 224     # (2H, 6H)
GBIH_OFF = 288     # (1, 6H)
GBHH_OFF = 296     # (1, 6H)
ATTW_OFF = 304     # (2, FEAT): row 0 = lstm att w, row 1 = gru att w
ATTB_OFF = 312     # (SBP, 2): col 0 = lstm att bias (expanded), col 1 = gru
CAPSW_OFF = 376    # (FEAT, NCDC)
CFCW_OFF = 440     # (NCDC, FEAT)
CFCB_OFF = 504     # (1, FEAT)
FCB_OFF = 512      # (1, OUT_HID)
OUTW_OFF = 520     # (OUT_HID, 128), column 0 = real out_w
OUTB_OFF = 552     # (1, 128),       column 0 = real out_b
P_OFF = 560        # (BP, SBP) per-batch sum-over-time selector
MGRP_OFF = 568     # (NCDC, NCDC) block-diagonal capsule-group ones
DML_OFF = 632      # (1, 8H) fwd-direction lane mask (LSTM gates)
DMG_OFF = 640      # (1, 6H) fwd-direction lane mask (GRU gates)
HALF_OFF = 648     # (1, FEAT) fwd-half lane mask
P_ROWS = 656


def _vmem():
    return pl.BlockSpec(memory_space=pltpu.MemorySpace.VMEM)


# ------------------------------ fused kernel ------------------------------
def capsule_rnn_kernel(tok_ref, p_ref, fcw_ref, out_ref):
    f32 = jnp.float32

    tok = tok_ref[...]                                        # (SBP, 1) int32 (tiny masked load)
    mask = (tok != 0).astype(f32)                             # get_non_pad_mask, (SBP, 1)

    # ---- unpack parameters: static slices of the single packed VMEM buffer ----
    emb = p_ref[EMB_OFF:EMB_OFF + VOCAB, :EMB]
    lwih = p_ref[LWIH_OFF:LWIH_OFF + EMB, :8 * HID]
    lwhh = p_ref[LWHH_OFF:LWHH_OFF + FEAT, :8 * HID]
    lb = p_ref[LB_OFF:LB_OFF + 1, :8 * HID]
    gwih = p_ref[GWIH_OFF:GWIH_OFF + FEAT, :6 * HID]
    gwhh = p_ref[GWHH_OFF:GWHH_OFF + FEAT, :6 * HID]
    gbih = p_ref[GBIH_OFF:GBIH_OFF + 1, :6 * HID]
    gbhh = p_ref[GBHH_OFF:GBHH_OFF + 1, :6 * HID]
    att_w = p_ref[ATTW_OFF:ATTW_OFF + 2, :FEAT]
    att_b = p_ref[ATTB_OFF:ATTB_OFF + SBP, :2]
    caps_w = p_ref[CAPSW_OFF:CAPSW_OFF + FEAT, :NCDC]
    capsfc_w = p_ref[CFCW_OFF:CFCW_OFF + NCDC, :FEAT]
    capsfc_b = p_ref[CFCB_OFF:CFCB_OFF + 1, :FEAT]
    fc_b = p_ref[FCB_OFF:FCB_OFF + 1, :OUT_HID]
    out_w = p_ref[OUTW_OFF:OUTW_OFF + OUT_HID, :128]
    out_b = p_ref[OUTB_OFF:OUTB_OFF + 1, :128]
    P = p_ref[P_OFF:P_OFF + BP, :SBP]
    Mgrp = p_ref[MGRP_OFF:MGRP_OFF + NCDC, :NCDC]
    dmask_l = p_ref[DML_OFF:DML_OFF + 1, :8 * HID] > 0.5      # fwd lanes of the LSTM gates
    dmask_g = p_ref[DMG_OFF:DMG_OFF + 1, :6 * HID] > 0.5      # fwd lanes of the GRU gates
    half_m = p_ref[HALF_OFF:HALF_OFF + 1, :FEAT] > 0.5        # fwd half of the hidden state

    # ---- embedding lookup as a one-hot matmul (Dropout2d is identity at inference) ----
    vocab_iota = jax.lax.broadcasted_iota(jnp.int32, (SBP, VOCAB), 1)
    onehot = (vocab_iota == tok).astype(f32)                  # (SBP, VOCAB)
    x_emb = jnp.dot(onehot, emb, preferred_element_type=f32)  # (SBP, EMB)

    def reverse_time(x):
        # rows are grouped as full (BP, W) sublane blocks per timestep, so this is
        # a pure aligned-vreg permutation (no XLU sublane surgery).
        return jnp.concatenate(
            [x[(SEQ - 1 - t) * BP:(SEQ - t) * BP] for t in range(SEQ)], axis=0)

    # ---------------- fused bidirectional LSTM ----------------
    # hoisted input projection; direction-select + time reversal applied ONCE.
    gx = jnp.dot(x_emb, lwih, preferred_element_type=f32) + lb        # (SBP, 8H)
    gx = jnp.where(dmask_l, gx, reverse_time(gx))

    h = jnp.zeros((BP, FEAT), f32)                                    # packed [h_fwd | h_bwd]
    c = jnp.zeros((BP, FEAT), f32)
    hs = []
    for t in range(SEQ):
        gates = gx[t * BP:(t + 1) * BP] + jnp.dot(h, lwhh, preferred_element_type=f32)  # (BP, 8H)
        sif = jax.nn.sigmoid(gates[:, :2 * FEAT])                     # i | f  (single vreg)
        g_g = jnp.tanh(gates[:, 2 * FEAT:3 * FEAT])                   # tanh only on the g block
        o_g = jax.nn.sigmoid(gates[:, 3 * FEAT:])
        c = sif[:, FEAT:] * c + sif[:, :FEAT] * g_g
        h = o_g * jnp.tanh(c)
        hs.append(h)
    H = jnp.concatenate(hs, axis=0)                                   # (SBP, FEAT), iteration-major
    # per-time output: fwd half from iteration t, bwd half from iteration S-1-t
    XL = jnp.where(half_m, H, reverse_time(H))                        # unmasked biLSTM output

    # ---------------- fused bidirectional GRU (input = unmasked biLSTM output) ----------------
    ggx = jnp.dot(XL, gwih, preferred_element_type=f32) + gbih        # (SBP, 6H)
    ggx = jnp.where(dmask_g, ggx, reverse_time(ggx))

    h = jnp.zeros((BP, FEAT), f32)
    gs = []
    for t in range(SEQ):
        gxt = ggx[t * BP:(t + 1) * BP]
        gh = jnp.dot(h, gwhh, preferred_element_type=f32) + gbhh      # (BP, 6H)
        rz = jax.nn.sigmoid(gxt[:, :2 * FEAT] + gh[:, :2 * FEAT])     # r | z
        n = jnp.tanh(gxt[:, 2 * FEAT:] + rz[:, :FEAT] * gh[:, 2 * FEAT:])
        h = (1.0 - rz[:, FEAT:]) * n + rz[:, FEAT:] * h
        gs.append(h)
    G = jnp.concatenate(gs, axis=0)
    XG = jnp.where(half_m, G, reverse_time(G))

    # ---------------- mask applied after the RNNs (matches reference ordering) ----------------
    XLm = XL * mask
    XGm = XG * mask

    def attention(Xm, w_row, b_col):
        # eij = <x, w> + b ; a = exp(tanh(eij)); normalised over time per batch element.
        e = jnp.sum(Xm * w_row, axis=1, keepdims=True) + b_col        # (SBP, 1)
        a = jnp.exp(jnp.tanh(e))
        num = jnp.dot(P, Xm * a, preferred_element_type=f32)          # (BP, FEAT)
        den = jnp.dot(P, a, preferred_element_type=f32)               # (BP, 1)
        return num / (den + 1e-10)

    x_lstm_att = attention(XLm, att_w[0:1, :], att_b[:, 0:1])
    x_gru_att = attention(XGm, att_w[1:2, :], att_b[:, 1:2])

    x_avg = jnp.dot(P, XGm, preferred_element_type=f32) * (1.0 / SEQ)  # mean over time
    x_max = XGm[0:BP]
    for t in range(1, SEQ):
        x_max = jnp.maximum(x_max, XGm[t * BP:(t + 1) * BP])           # max over time

    # ---------------- CapsuleUnit: shared-weight predictions + lane-dense dynamic routing ----
    u = jnp.dot(XGm, caps_w, preferred_element_type=f32)               # (SBP, NC*DC)

    def squash(s):
        ssq = jnp.dot(s * s, Mgrp, preferred_element_type=f32)         # per-capsule |s|^2, replicated
        return s * jax.lax.rsqrt(ssq + 1e-7)

    # iteration 0: routing logits are zero -> coupling is the constant 1/NUM_CAPS
    v = squash(jnp.dot(P, u, preferred_element_type=f32) * (1.0 / NUM_CAPS))
    for _ in range(1, ROUTINGS):
        v_rep = jnp.concatenate([v] * SEQ, axis=0)                     # aligned 8-row replication
        b_rep = jnp.dot(u * v_rep, Mgrp, preferred_element_type=f32)   # agreement logits, replicated
        m = jnp.max(b_rep, axis=1, keepdims=True)
        e = jnp.exp(b_rep - m)
        cc = e * DIM_CAPS / jnp.sum(e, axis=1, keepdims=True)          # softmax over capsules
        v = squash(jnp.dot(P, cc * u, preferred_element_type=f32))

    x_caps = jnp.maximum(
        jnp.dot(v, capsfc_w, preferred_element_type=f32) + capsfc_b, 0.0)   # (BP, FEAT)

    # ---------------- FM-style head: single (BP, 15*2H) x (15*2H, OUT_HID) matmul ----------------
    firsts = [x_lstm_att, x_gru_att, x_avg, x_max, x_caps]
    feats = list(firsts)
    for a_i, b_i in COMBOS:                                            # pairwise products
        feats.append(firsts[a_i] * firsts[b_i])
    fm = jnp.concatenate(feats, axis=1)                                # (BP, 960)
    hdd = jnp.maximum(
        jnp.dot(fm, fcw_ref[...], preferred_element_type=f32) + fc_b, 0.0)  # ReLU; dropout = id
    # lane-dense output: column 0 carries the real logit, the rest are zero.
    out_ref[...] = jnp.dot(hdd, out_w, preferred_element_type=f32) + out_b  # (BP, 128)


# ------------------------------ weight packing (init time) ------------------------------
def _pack_dirs(w_f, w_b, n_gates):
    # interleave per-gate column blocks: [g0_fwd | g0_bwd | g1_fwd | g1_bwd | ...]
    blocks = []
    for k in range(n_gates):
        blocks.append(w_f[:, k * HID:(k + 1) * HID])
        blocks.append(w_b[:, k * HID:(k + 1) * HID])
    return jnp.concatenate(blocks, axis=1)


def _pack_hh(w_f, w_b, n_gates):
    # block-diagonal recurrent weights for the packed [h_fwd | h_bwd] state
    z = jnp.zeros((HID, HID), jnp.float32)
    top, bot = [], []
    for k in range(n_gates):
        top += [w_f[:, k * HID:(k + 1) * HID], z]
        bot += [z, w_b[:, k * HID:(k + 1) * HID]]
    return jnp.concatenate([jnp.concatenate(top, axis=1),
                            jnp.concatenate(bot, axis=1)], axis=0)


def init_params(key):
    keys = iter(jax.random.split(key, 32))

    def uni(shape, scale):
        return jax.random.uniform(next(keys), shape, jnp.float32, -scale, scale)

    sc = 1.0 / math.sqrt(HID)
    emb = jax.random.normal(next(keys), (VOCAB, EMB), jnp.float32) * 0.1
    emb = emb.at[0].set(0.0)                                  # PAD row

    lstm = {d: {"wih": uni((EMB, 4 * HID), sc), "whh": uni((HID, 4 * HID), sc),
                "b": uni((1, 4 * HID), sc)} for d in ("fwd", "bwd")}
    gru = {d: {"wih": uni((FEAT, 3 * HID), sc), "whh": uni((HID, 3 * HID), sc),
               "bih": uni((1, 3 * HID), sc), "bhh": uni((1, 3 * HID), sc)}
           for d in ("fwd", "bwd")}

    att_lstm_w = uni((1, FEAT), 0.1)
    att_lstm_b = jnp.zeros((SEQ,), jnp.float32)               # per-time-position bias
    att_gru_w = uni((1, FEAT), 0.1)
    att_gru_b = jnp.zeros((SEQ,), jnp.float32)
    caps_w = uni((FEAT, NCDC), 0.1)
    capsfc_w = uni((NCDC, FEAT), 0.1)
    capsfc_b = jnp.zeros((1, FEAT), jnp.float32)
    fc_w = uni(((N_FIRST + len(COMBOS)) * FEAT, OUT_HID), 0.1)
    fc_b = jnp.zeros((1, OUT_HID), jnp.float32)
    out_w = uni((OUT_HID, 1), 0.1)
    out_b = jnp.zeros((1, 1), jnp.float32)

    # ---- pack everything except fc_w into one tile-aligned (P_ROWS, 256) buffer ----
    buf = jnp.zeros((P_ROWS, PW), jnp.float32)

    def place(b, off, arr):
        r, c = arr.shape
        return b.at[off:off + r, :c].set(arr)

    buf = place(buf, EMB_OFF, emb)
    buf = place(buf, LWIH_OFF, _pack_dirs(lstm["fwd"]["wih"], lstm["bwd"]["wih"], 4))
    buf = place(buf, LWHH_OFF, _pack_hh(lstm["fwd"]["whh"], lstm["bwd"]["whh"], 4))
    buf = place(buf, LB_OFF, _pack_dirs(lstm["fwd"]["b"], lstm["bwd"]["b"], 4))
    buf = place(buf, GWIH_OFF, _pack_dirs(gru["fwd"]["wih"], gru["bwd"]["wih"], 3))
    buf = place(buf, GWHH_OFF, _pack_hh(gru["fwd"]["whh"], gru["bwd"]["whh"], 3))
    buf = place(buf, GBIH_OFF, _pack_dirs(gru["fwd"]["bih"], gru["bwd"]["bih"], 3))
    buf = place(buf, GBHH_OFF, _pack_dirs(gru["fwd"]["bhh"], gru["bwd"]["bhh"], 3))
    buf = place(buf, ATTW_OFF, jnp.concatenate([att_lstm_w, att_gru_w], axis=0))
    att_b_exp = jnp.stack([jnp.repeat(att_lstm_b, BP), jnp.repeat(att_gru_b, BP)], axis=1)
    buf = place(buf, ATTB_OFF, att_b_exp)                               # (SBP, 2)
    buf = place(buf, CAPSW_OFF, caps_w)
    buf = place(buf, CFCW_OFF, capsfc_w)
    buf = place(buf, CFCB_OFF, capsfc_b)
    buf = place(buf, FCB_OFF, fc_b)
    buf = place(buf, OUTW_OFF, jnp.zeros((OUT_HID, 128), jnp.float32).at[:, :1].set(out_w))
    buf = place(buf, OUTB_OFF, jnp.zeros((1, 128), jnp.float32).at[:, :1].set(out_b))

    # ---- selector / mask constants (plain arange math; no power-of-two bit tricks) ----
    rows = jnp.arange(SBP)
    P = (rows[None, :] % BP == jnp.arange(BP)[:, None]).astype(jnp.float32)        # (BP, SBP)
    cap_id = jnp.arange(NCDC) // DIM_CAPS
    Mgrp = (cap_id[:, None] == cap_id[None, :]).astype(jnp.float32)                # (NCDC, NCDC)
    dmask_l = ((jnp.arange(8 * HID) % FEAT) < HID).astype(jnp.float32)[None, :]
    dmask_g = ((jnp.arange(6 * HID) % FEAT) < HID).astype(jnp.float32)[None, :]
    half = (jnp.arange(FEAT) < HID).astype(jnp.float32)[None, :]
    buf = place(buf, P_OFF, P)
    buf = place(buf, MGRP_OFF, Mgrp)
    buf = place(buf, DML_OFF, dmask_l)
    buf = place(buf, DMG_OFF, dmask_g)
    buf = place(buf, HALF_OFF, half)

    return {"packed": buf, "fc_w": fc_w}


# ------------------------------- forward --------------------------------
def capsule_rnn_forward(params, inputs):
    # time-major token layout with the batch padded to a full sublane group (rows = t*BP + b;
    # padded rows hold PAD=0 and never mix into the real batch rows).
    tok = jnp.zeros((SEQ, BP), jnp.int32).at[:, :BATCH].set(jnp.transpose(inputs))
    tok = tok.reshape(SBP, 1)
    out = pl.pallas_call(
        capsule_rnn_kernel,
        out_shape=jax.ShapeDtypeStruct((BP, 128), jnp.float32),
        in_specs=[_vmem(), _vmem(), _vmem()],
        out_specs=_vmem(),
    )(tok, params["packed"], params["fc_w"])
    return out[:BATCH, :1]


if __name__ == "__main__":
    key = jax.random.PRNGKey(0)
    pkey, ikey = jax.random.split(key)
    params = init_params(pkey)
    inputs = jax.random.randint(ikey, (BATCH, SEQ), 0, VOCAB, dtype=jnp.int32)
    inputs = inputs.at[:, -2:].set(0)     # some PAD tokens to exercise the mask
    out = jax.jit(capsule_rnn_forward)(params, inputs)
    jax.block_until_ready(out)
    assert out.shape == (BATCH, 1) and out.dtype == jnp.float32
    print("KERNEL_OK")
</pallas_src>

<mosaic_0001>
module attributes {stable_mosaic.version = 11 : i64} {
  func.func @capsule_rnn_kernel(%arg0: memref<64x1xi32, #tpu.memory_space<vmem>>, %arg1: memref<656x256xf32, #tpu.memory_space<vmem>>, %arg2: memref<960x32xf32, #tpu.memory_space<vmem>>, %arg3: memref<8x128xf32, #tpu.memory_space<vmem>>) attributes {dimension_semantics = [], scalar_prefetch = 0 : i64, scratch_operands = 0 : i64, tpu.core_type = #tpu.core_type<tc>} {
    %c0 = arith.constant 0 : index
    %c0_0 = arith.constant 0 : index
    %0 = vector.load %arg0[%c0, %c0_0] : memref<64x1xi32, #tpu.memory_space<vmem>>, vector<64x1xi32>
    %c0_i32 = arith.constant 0 : i32
    %1 = vector.broadcast %c0_i32 : i32 to vector<64x1xi32>
    %2 = arith.cmpi ne, %0, %1 : vector<64x1xi32>
    %3 = arith.extui %2 : vector<64x1xi1> to vector<64x1xi32>
    %4 = arith.sitofp %3 : vector<64x1xi32> to vector<64x1xf32>
    %c0_1 = arith.constant 0 : index
    %c0_2 = arith.constant 0 : index
    %5 = vector.load %arg1[%c0_1, %c0_2] : memref<656x256xf32, #tpu.memory_space<vmem>>, vector<50x32xf32>
    %c56 = arith.constant 56 : index
    %c0_3 = arith.constant 0 : index
    %6 = vector.load %arg1[%c56, %c0_3] : memref<656x256xf32, #tpu.memory_space<vmem>>, vector<32x256xf32>
    %c88 = arith.constant 88 : index
    %c0_4 = arith.constant 0 : index
    %7 = vector.load %arg1[%c88, %c0_4] : memref<656x256xf32, #tpu.memory_space<vmem>>, vector<64x256xf32>
    %c152 = arith.constant 152 : index
    %c0_5 = arith.constant 0 : index
    %8 = vector.load %arg1[%c152, %c0_5] : memref<656x256xf32, #tpu.memory_space<vmem>>, vector<1x256xf32>
    %c160 = arith.constant 160 : index
    %c0_6 = arith.constant 0 : index
    %9 = vector.load %arg1[%c160, %c0_6] : memref<656x256xf32, #tpu.memory_space<vmem>>, vector<64x192xf32>
    %c224 = arith.constant 224 : index
    %c0_7 = arith.constant 0 : index
    %10 = vector.load %arg1[%c224, %c0_7] : memref<656x256xf32, #tpu.memory_space<vmem>>, vector<64x192xf32>
    %c288 = arith.constant 288 : index
    %c0_8 = arith.constant 0 : index
    %11 = vector.load %arg1[%c288, %c0_8] : memref<656x256xf32, #tpu.memory_space<vmem>>, vector<1x192xf32>
    %c296 = arith.constant 296 : index
    %c0_9 = arith.constant 0 : index
    %12 = vector.load %arg1[%c296, %c0_9] : memref<656x256xf32, #tpu.memory_space<vmem>>, vector<1x192xf32>
    %c304 = arith.constant 304 : index
    %c0_10 = arith.constant 0 : index
    %13 = vector.load %arg1[%c304, %c0_10] : memref<656x256xf32, #tpu.memory_space<vmem>>, vector<2x64xf32>
    %c312 = arith.constant 312 : index
    %c0_11 = arith.constant 0 : index
    %14 = vector.load %arg1[%c312, %c0_11] : memref<656x256xf32, #tpu.memory_space<vmem>>, vector<64x2xf32>
    %c376 = arith.constant 376 : index
    %c0_12 = arith.constant 0 : index
    %15 = vector.load %arg1[%c376, %c0_12] : memref<656x256xf32, #tpu.memory_space<vmem>>, vector<64x64xf32>
    %c440 = arith.constant 440 : index
    %c0_13 = arith.constant 0 : index
    %16 = vector.load %arg1[%c440, %c0_13] : memref<656x256xf32, #tpu.memory_space<vmem>>, vector<64x64xf32>
    %c504 = arith.constant 504 : index
    %c0_14 = arith.constant 0 : index
    %17 = vector.load %arg1[%c504, %c0_14] : memref<656x256xf32, #tpu.memory_space<vmem>>, vector<1x64xf32>
    %c512 = arith.constant 512 : index
    %c0_15 = arith.constant 0 : index
    %18 = vector.load %arg1[%c512, %c0_15] : memref<656x256xf32, #tpu.memory_space<vmem>>, vector<1x32xf32>
    %c520 = arith.constant 520 : index
    %c0_16 = arith.constant 0 : index
    %19 = vector.load %arg1[%c520, %c0_16] : memref<656x256xf32, #tpu.memory_space<vmem>>, vector<32x128xf32>
    %c552 = arith.constant 552 : index
    %c0_17 = arith.constant 0 : index
    %20 = vector.load %arg1[%c552, %c0_17] : memref<656x256xf32, #tpu.memory_space<vmem>>, vector<1x128xf32>
    %c560 = arith.constant 560 : index
    %c0_18 = arith.constant 0 : index
    %21 = vector.load %arg1[%c560, %c0_18] : memref<656x256xf32, #tpu.memory_space<vmem>>, vector<8x64xf32>
    %c568 = arith.constant 568 : index
    %c0_19 = arith.constant 0 : index
    %22 = vector.load %arg1[%c568, %c0_19] : memref<656x256xf32, #tpu.memory_space<vmem>>, vector<64x64xf32>
    %c632 = arith.constant 632 : index
    %c0_20 = arith.constant 0 : index
    %23 = vector.load %arg1[%c632, %c0_20] : memref<656x256xf32, #tpu.memory_space<vmem>>, vector<1x256xf32>
    %cst = arith.constant 5.000000e-01 : f32
    %24 = vector.broadcast %cst : f32 to vector<1x256xf32>
    %25 = arith.cmpf ogt, %23, %24 : vector<1x256xf32>
    %c640 = arith.constant 640 : index
    %c0_21 = arith.constant 0 : index
    %26 = vector.load %arg1[%c640, %c0_21] : memref<656x256xf32, #tpu.memory_space<vmem>>, vector<1x192xf32>
    %cst_22 = arith.constant 5.000000e-01 : f32
    %27 = vector.broadcast %cst_22 : f32 to vector<1x192xf32>
    %28 = arith.cmpf ogt, %26, %27 : vector<1x192xf32>
    %c648 = arith.constant 648 : index
    %c0_23 = arith.constant 0 : index
    %29 = vector.load %arg1[%c648, %c0_23] : memref<656x256xf32, #tpu.memory_space<vmem>>, vector<1x64xf32>
    %cst_24 = arith.constant 5.000000e-01 : f32
    %30 = vector.broadcast %cst_24 : f32 to vector<1x64xf32>
    %31 = arith.cmpf ogt, %29, %30 : vector<1x64xf32>
    %32 = tpu.iota {dimensions = array<i32: 1>} : vector<64x50xi32>
    %33 = vector.broadcast %0 : vector<64x1xi32> to vector<64x50xi32>
    %34 = arith.cmpi eq, %32, %33 : vector<64x50xi32>
    %35 = arith.extui %34 : vector<64x50xi1> to vector<64x50xi32>
    %36 = arith.sitofp %35 : vector<64x50xi32> to vector<64x50xf32>
    %cst_25 = arith.constant dense<0.000000e+00> : vector<64x32xf32>
    %37 = tpu.matmul %36, %5, %cst_25 {dimension_numbers = #tpu.dot_dimension_numbers<[1], [0], [0], [1], [0, 0, 1, 1], [], []>} : vector<64x50xf32>, vector<50x32xf32>, vector<64x32xf32> -> vector<64x32xf32>
    %cst_26 = arith.constant dense<0.000000e+00> : vector<64x256xf32>
    %38 = tpu.matmul %37, %6, %cst_26 {dimension_numbers = #tpu.dot_dimension_numbers<[1], [0], [0], [1], [0, 0, 1, 1], [], []>} : vector<64x32xf32>, vector<32x256xf32>, vector<64x256xf32> -> vector<64x256xf32>
    %39 = vector.broadcast %8 : vector<1x256xf32> to vector<64x256xf32>
    %40 = arith.addf %38, %39 : vector<64x256xf32>
    %41 = vector.extract_strided_slice %40 {offsets = [56, 0], sizes = [8, 256], strides = [1, 1]} : vector<64x256xf32> to vector<8x256xf32>
    %42 = vector.extract_strided_slice %40 {offsets = [48, 0], sizes = [8, 256], strides = [1, 1]} : vector<64x256xf32> to vector<8x256xf32>
    %43 = vector.extract_strided_slice %40 {offsets = [40, 0], sizes = [8, 256], strides = [1, 1]} : vector<64x256xf32> to vector<8x256xf32>
    %44 = vector.extract_strided_slice %40 {offsets = [32, 0], sizes = [8, 256], strides = [1, 1]} : vector<64x256xf32> to vector<8x256xf32>
    %45 = vector.extract_strided_slice %40 {offsets = [24, 0], sizes = [8, 256], strides = [1, 1]} : vector<64x256xf32> to vector<8x256xf32>
    %46 = vector.extract_strided_slice %40 {offsets = [16, 0], sizes = [8, 256], strides = [1, 1]} : vector<64x256xf32> to vector<8x256xf32>
    %47 = vector.extract_strided_slice %40 {offsets = [8, 0], sizes = [8, 256], strides = [1, 1]} : vector<64x256xf32> to vector<8x256xf32>
    %48 = vector.extract_strided_slice %40 {offsets = [0, 0], sizes = [8, 256], strides = [1, 1]} : vector<64x256xf32> to vector<8x256xf32>
    %49 = tpu.concatenate %41, %42, %43, %44, %45, %46, %47, %48 in 0 : vector<8x256xf32>, vector<8x256xf32>, vector<8x256xf32>, vector<8x256xf32>, vector<8x256xf32>, vector<8x256xf32>, vector<8x256xf32>, vector<8x256xf32> -> vector<64x256xf32>
    %50 = vector.shape_cast %25 : vector<1x256xi1> to vector<1x256xi1>
    %51 = vector.broadcast %50 : vector<1x256xi1> to vector<64x256xi1>
    %52 = arith.select %51, %40, %49 : vector<64x256xi1>, vector<64x256xf32>
    %cst_27 = arith.constant 0.000000e+00 : f32
    %53 = vector.broadcast %cst_27 : f32 to vector<8x64xf32>
    %cst_28 = arith.constant 0.000000e+00 : f32
    %54 = vector.broadcast %cst_28 : f32 to vector<8x64xf32>
    %55 = vector.extract_strided_slice %52 {offsets = [0, 0], sizes = [8, 256], strides = [1, 1]} : vector<64x256xf32> to vector<8x256xf32>
    %cst_29 = arith.constant dense<0.000000e+00> : vector<8x256xf32>
    %56 = tpu.matmul %53, %7, %cst_29 {dimension_numbers = #tpu.dot_dimension_numbers<[1], [0], [0], [1], [0, 0, 1, 1], [], []>} : vector<8x64xf32>, vector<64x256xf32>, vector<8x256xf32> -> vector<8x256xf32>
    %57 = arith.addf %55, %56 : vector<8x256xf32>
    %58 = vector.extract_strided_slice %57 {offsets = [0, 0], sizes = [8, 128], strides = [1, 1]} : vector<8x256xf32> to vector<8x128xf32>
    %59 = arith.negf %58 : vector<8x128xf32>
    %60 = math.exp %59 : vector<8x128xf32>
    %cst_30 = arith.constant 1.000000e+00 : f32
    %61 = vector.broadcast %cst_30 : f32 to vector<8x128xf32>
    %62 = arith.addf %61, %60 : vector<8x128xf32>
    %63 = arith.divf %61, %62 : vector<8x128xf32>
    %64 = vector.extract_strided_slice %57 {offsets = [0, 128], sizes = [8, 64], strides = [1, 1]} : vector<8x256xf32> to vector<8x64xf32>
    %65 = math.tanh %64 : vector<8x64xf32>
    %66 = vector.extract_strided_slice %57 {offsets = [0, 192], sizes = [8, 64], strides = [1, 1]} : vector<8x256xf32> to vector<8x64xf32>
    %67 = arith.negf %66 : vector<8x64xf32>
    %68 = math.exp %67 : vector<8x64xf32>
    %cst_31 = arith.constant 1.000000e+00 : f32
    %69 = vector.broadcast %cst_31 : f32 to vector<8x64xf32>
    %70 = arith.addf %69, %68 : vector<8x64xf32>
    %71 = arith.divf %69, %70 : vector<8x64xf32>
    %72 = vector.extract_strided_slice %63 {offsets = [0, 64], sizes = [8, 64], strides = [1, 1]} : vector<8x128xf32> to vector<8x64xf32>
    %73 = arith.mulf %72, %54 : vector<8x64xf32>
    %74 = vector.extract_strided_slice %63 {offsets = [0, 0], sizes = [8, 64], strides = [1, 1]} : vector<8x128xf32> to vector<8x64xf32>
    %75 = arith.mulf %74, %65 : vector<8x64xf32>
    %76 = arith.addf %73, %75 : vector<8x64xf32>
    %77 = math.tanh %76 : vector<8x64xf32>
    %78 = arith.mulf %71, %77 : vector<8x64xf32>
    %79 = vector.extract_strided_slice %52 {offsets = [8, 0], sizes = [8, 256], strides = [1, 1]} : vector<64x256xf32> to vector<8x256xf32>
    %cst_32 = arith.constant dense<0.000000e+00> : vector<8x256xf32>
    %80 = tpu.matmul %78, %7, %cst_32 {dimension_numbers = #tpu.dot_dimension_numbers<[1], [0], [0], [1], [0, 0, 1, 1], [], []>} : vector<8x64xf32>, vector<64x256xf32>, vector<8x256xf32> -> vector<8x256xf32>
    %81 = arith.addf %79, %80 : vector<8x256xf32>
    %82 = vector.extract_strided_slice %81 {offsets = [0, 0], sizes = [8, 128], strides = [1, 1]} : vector<8x256xf32> to vector<8x128xf32>
    %83 = arith.negf %82 : vector<8x128xf32>
    %84 = math.exp %83 : vector<8x128xf32>
    %cst_33 = arith.constant 1.000000e+00 : f32
    %85 = vector.broadcast %cst_33 : f32 to vector<8x128xf32>
    %86 = arith.addf %85, %84 : vector<8x128xf32>
    %87 = arith.divf %85, %86 : vector<8x128xf32>
    %88 = vector.extract_strided_slice %81 {offsets = [0, 128], sizes = [8, 64], strides = [1, 1]} : vector<8x256xf32> to vector<8x64xf32>
    %89 = math.tanh %88 : vector<8x64xf32>
    %90 = vector.extract_strided_slice %81 {offsets = [0, 192], sizes = [8, 64], strides = [1, 1]} : vector<8x256xf32> to vector<8x64xf32>
    %91 = arith.negf %90 : vector<8x64xf32>
    %92 = math.exp %91 : vector<8x64xf32>
    %cst_34 = arith.constant 1.000000e+00 : f32
    %93 = vector.broadcast %cst_34 : f32 to vector<8x64xf32>
    %94 = arith.addf %93, %92 : vector<8x64xf32>
    %95 = arith.divf %93, %94 : vector<8x64xf32>
    %96 = vector.extract_strided_slice %87 {offsets = [0, 64], sizes = [8, 64], strides = [1, 1]} : vector<8x128xf32> to vector<8x64xf32>
    %97 = arith.mulf %96, %76 : vector<8x64xf32>
    %98 = vector.extract_strided_slice %87 {offsets = [0, 0], sizes = [8, 64], strides = [1, 1]} : vector<8x128xf32> to vector<8x64xf32>
    %99 = arith.mulf %98, %89 : vector<8x64xf32>
    %100 = arith.addf %97, %99 : vector<8x64xf32>
    %101 = math.tanh %100 : vector<8x64xf32>
    %102 = arith.mulf %95, %101 : vector<8x64xf32>
    %103 = vector.extract_strided_slice %52 {offsets = [16, 0], sizes = [8, 256], strides = [1, 1]} : vector<64x256xf32> to vector<8x256xf32>
    %cst_35 = arith.constant dense<0.000000e+00> : vector<8x256xf32>
    %104 = tpu.matmul %102, %7, %cst_35 {dimension_numbers = #tpu.dot_dimension_numbers<[1], [0], [0], [1], [0, 0, 1, 1], [], []>} : vector<8x64xf32>, vector<64x256xf32>, vector<8x256xf32> -> vector<8x256xf32>
    %105 = arith.addf %103, %104 : vector<8x256xf32>
    %106 = vector.extract_strided_slice %105 {offsets = [0, 0], sizes = [8, 128], strides = [1, 1]} : vector<8x256xf32> to vector<8x128xf32>
    %107 = arith.negf %106 : vector<8x128xf32>
    %108 = math.exp %107 : vector<8x128xf32>
    %cst_36 = arith.constant 1.000000e+00 : f32
    %109 = vector.broadcast %cst_36 : f32 to vector<8x128xf32>
    %110 = arith.addf %109, %108 : vector<8x128xf32>
    %111 = arith.divf %109, %110 : vector<8x128xf32>
    %112 = vector.extract_strided_slice %105 {offsets = [0, 128], sizes = [8, 64], strides = [1, 1]} : vector<8x256xf32> to vector<8x64xf32>
    %113 = math.tanh %112 : vector<8x64xf32>
    %114 = vector.extract_strided_slice %105 {offsets = [0, 192], sizes = [8, 64], strides = [1, 1]} : vector<8x256xf32> to vector<8x64xf32>
    %115 = arith.negf %114 : vector<8x64xf32>
    %116 = math.exp %115 : vector<8x64xf32>
    %cst_37 = arith.constant 1.000000e+00 : f32
    %117 = vector.broadcast %cst_37 : f32 to vector<8x64xf32>
    %118 = arith.addf %117, %116 : vector<8x64xf32>
    %119 = arith.divf %117, %118 : vector<8x64xf32>
    %120 = vector.extract_strided_slice %111 {offsets = [0, 64], sizes = [8, 64], strides = [1, 1]} : vector<8x128xf32> to vector<8x64xf32>
    %121 = arith.mulf %120, %100 : vector<8x64xf32>
    %122 = vector.extract_strided_slice %111 {offsets = [0, 0], sizes = [8, 64], strides = [1, 1]} : vector<8x128xf32> to vector<8x64xf32>
    %123 = arith.mulf %122, %113 : vector<8x64xf32>
    %124 = arith.addf %121, %123 : vector<8x64xf32>
    %125 = math.tanh %124 : vector<8x64xf32>
    %126 = arith.mulf %119, %125 : vector<8x64xf32>
    %127 = vector.extract_strided_slice %52 {offsets = [24, 0], sizes = [8, 256], strides = [1, 1]} : vector<64x256xf32> to vector<8x256xf32>
    %cst_38 = arith.constant dense<0.000000e+00> : vector<8x256xf32>
    %128 = tpu.matmul %126, %7, %cst_38 {dimension_numbers = #tpu.dot_dimension_numbers<[1], [0], [0], [1], [0, 0, 1, 1], [], []>} : vector<8x64xf32>, vector<64x256xf32>, vector<8x256xf32> -> vector<8x256xf32>
    %129 = arith.addf %127, %128 : vector<8x256xf32>
    %130 = vector.extract_strided_slice %129 {offsets = [0, 0], sizes = [8, 128], strides = [1, 1]} : vector<8x256xf32> to vector<8x128xf32>
    %131 = arith.negf %130 : vector<8x128xf32>
    %132 = math.exp %131 : vector<8x128xf32>
    %cst_39 = arith.constant 1.000000e+00 : f32
    %133 = vector.broadcast %cst_39 : f32 to vector<8x128xf32>
    %134 = arith.addf %133, %132 : vector<8x128xf32>
    %135 = arith.divf %133, %134 : vector<8x128xf32>
    %136 = vector.extract_strided_slice %129 {offsets = [0, 128], sizes = [8, 64], strides = [1, 1]} : vector<8x256xf32> to vector<8x64xf32>
    %137 = math.tanh %136 : vector<8x64xf32>
    %138 = vector.extract_strided_slice %129 {offsets = [0, 192], sizes = [8, 64], strides = [1, 1]} : vector<8x256xf32> to vector<8x64xf32>
    %139 = arith.negf %138 : vector<8x64xf32>
    %140 = math.exp %139 : vector<8x64xf32>
    %cst_40 = arith.constant 1.000000e+00 : f32
    %141 = vector.broadcast %cst_40 : f32 to vector<8x64xf32>
    %142 = arith.addf %141, %140 : vector<8x64xf32>
    %143 = arith.divf %141, %142 : vector<8x64xf32>
    %144 = vector.extract_strided_slice %135 {offsets = [0, 64], sizes = [8, 64], strides = [1, 1]} : vector<8x128xf32> to vector<8x64xf32>
    %145 = arith.mulf %144, %124 : vector<8x64xf32>
    %146 = vector.extract_strided_slice %135 {offsets = [0, 0], sizes = [8, 64], strides = [1, 1]} : vector<8x128xf32> to vector<8x64xf32>
    %147 = arith.mulf %146, %137 : vector<8x64xf32>
    %148 = arith.addf %145, %147 : vector<8x64xf32>
    %149 = math.tanh %148 : vector<8x64xf32>
    %150 = arith.mulf %143, %149 : vector<8x64xf32>
    %151 = vector.extract_strided_slice %52 {offsets = [32, 0], sizes = [8, 256], strides = [1, 1]} : vector<64x256xf32> to vector<8x256xf32>
    %cst_41 = arith.constant dense<0.000000e+00> : vector<8x256xf32>
    %152 = tpu.matmul %150, %7, %cst_41 {dimension_numbers = #tpu.dot_dimension_numbers<[1], [0], [0], [1], [0, 0, 1, 1], [], []>} : vector<8x64xf32>, vector<64x256xf32>, vector<8x256xf32> -> vector<8x256xf32>
    %153 = arith.addf %151, %152 : vector<8x256xf32>
    %154 = vector.extract_strided_slice %153 {offsets = [0, 0], sizes = [8, 128], strides = [1, 1]} : vector<8x256xf32> to vector<8x128xf32>
    %155 = arith.negf %154 : vector<8x128xf32>
    %156 = math.exp %155 : vector<8x128xf32>
    %cst_42 = arith.constant 1.000000e+00 : f32
    %157 = vector.broadcast %cst_42 : f32 to vector<8x128xf32>
    %158 = arith.addf %157, %156 : vector<8x128xf32>
    %159 = arith.divf %157, %158 : vector<8x128xf32>
    %160 = vector.extract_strided_slice %153 {offsets = [0, 128], sizes = [8, 64], strides = [1, 1]} : vector<8x256xf32> to vector<8x64xf32>
    %161 = math.tanh %160 : vector<8x64xf32>
    %162 = vector.extract_strided_slice %153 {offsets = [0, 192], sizes = [8, 64], strides = [1, 1]} : vector<8x256xf32> to vector<8x64xf32>
    %163 = arith.negf %162 : vector<8x64xf32>
    %164 = math.exp %163 : vector<8x64xf32>
    %cst_43 = arith.constant 1.000000e+00 : f32
    %165 = vector.broadcast %cst_43 : f32 to vector<8x64xf32>
    %166 = arith.addf %165, %164 : vector<8x64xf32>
    %167 = arith.divf %165, %166 : vector<8x64xf32>
    %168 = vector.extract_strided_slice %159 {offsets = [0, 64], sizes = [8, 64], strides = [1, 1]} : vector<8x128xf32> to vector<8x64xf32>
    %169 = arith.mulf %168, %148 : vector<8x64xf32>
    %170 = vector.extract_strided_slice %159 {offsets = [0, 0], sizes = [8, 64], strides = [1, 1]} : vector<8x128xf32> to vector<8x64xf32>
    %171 = arith.mulf %170, %161 : vector<8x64xf32>
    %172 = arith.addf %169, %171 : vector<8x64xf32>
    %173 = math.tanh %172 : vector<8x64xf32>
    %174 = arith.mulf %167, %173 : vector<8x64xf32>
    %175 = vector.extract_strided_slice %52 {offsets = [40, 0], sizes = [8, 256], strides = [1, 1]} : vector<64x256xf32> to vector<8x256xf32>
    %cst_44 = arith.constant dense<0.000000e+00> : vector<8x256xf32>
    %176 = tpu.matmul %174, %7, %cst_44 {dimension_numbers = #tpu.dot_dimension_numbers<[1], [0], [0], [1], [0, 0, 1, 1], [], []>} : vector<8x64xf32>, vector<64x256xf32>, vector<8x256xf32> -> vector<8x256xf32>
    %177 = arith.addf %175, %176 : vector<8x256xf32>
    %178 = vector.extract_strided_slice %177 {offsets = [0, 0], sizes = [8, 128], strides = [1, 1]} : vector<8x256xf32> to vector<8x128xf32>
    %179 = arith.negf %178 : vector<8x128xf32>
    %180 = math.exp %179 : vector<8x128xf32>
    %cst_45 = arith.constant 1.000000e+00 : f32
    %181 = vector.broadcast %cst_45 : f32 to vector<8x128xf32>
    %182 = arith.addf %181, %180 : vector<8x128xf32>
    %183 = arith.divf %181, %182 : vector<8x128xf32>
    %184 = vector.extract_strided_slice %177 {offsets = [0, 128], sizes = [8, 64], strides = [1, 1]} : vector<8x256xf32> to vector<8x64xf32>
    %185 = math.tanh %184 : vector<8x64xf32>
    %186 = vector.extract_strided_slice %177 {offsets = [0, 192], sizes = [8, 64], strides = [1, 1]} : vector<8x256xf32> to vector<8x64xf32>
    %187 = arith.negf %186 : vector<8x64xf32>
    %188 = math.exp %187 : vector<8x64xf32>
    %cst_46 = arith.constant 1.000000e+00 : f32
    %189 = vector.broadcast %cst_46 : f32 to vector<8x64xf32>
    %190 = arith.addf %189, %188 : vector<8x64xf32>
    %191 = arith.divf %189, %190 : vector<8x64xf32>
    %192 = vector.extract_strided_slice %183 {offsets = [0, 64], sizes = [8, 64], strides = [1, 1]} : vector<8x128xf32> to vector<8x64xf32>
    %193 = arith.mulf %192, %172 : vector<8x64xf32>
    %194 = vector.extract_strided_slice %183 {offsets = [0, 0], sizes = [8, 64], strides = [1, 1]} : vector<8x128xf32> to vector<8x64xf32>
    %195 = arith.mulf %194, %185 : vector<8x64xf32>
    %196 = arith.addf %193, %195 : vector<8x64xf32>
    %197 = math.tanh %196 : vector<8x64xf32>
    %198 = arith.mulf %191, %197 : vector<8x64xf32>
    %199 = vector.extract_strided_slice %52 {offsets = [48, 0], sizes = [8, 256], strides = [1, 1]} : vector<64x256xf32> to vector<8x256xf32>
    %cst_47 = arith.constant dense<0.000000e+00> : vector<8x256xf32>
    %200 = tpu.matmul %198, %7, %cst_47 {dimension_numbers = #tpu.dot_dimension_numbers<[1], [0], [0], [1], [0, 0, 1, 1], [], []>} : vector<8x64xf32>, vector<64x256xf32>, vector<8x256xf32> -> vector<8x256xf32>
    %201 = arith.addf %199, %200 : vector<8x256xf32>
    %202 = vector.extract_strided_slice %201 {offsets = [0, 0], sizes = [8, 128], strides = [1, 1]} : vector<8x256xf32> to vector<8x128xf32>
    %203 = arith.negf %202 : vector<8x128xf32>
    %204 = math.exp %203 : vector<8x128xf32>
    %cst_48 = arith.constant 1.000000e+00 : f32
    %205 = vector.broadcast %cst_48 : f32 to vector<8x128xf32>
    %206 = arith.addf %205, %204 : vector<8x128xf32>
    %207 = arith.divf %205, %206 : vector<8x128xf32>
    %208 = vector.extract_strided_slice %201 {offsets = [0, 128], sizes = [8, 64], strides = [1, 1]} : vector<8x256xf32> to vector<8x64xf32>
    %209 = math.tanh %208 : vector<8x64xf32>
    %210 = vector.extract_strided_slice %201 {offsets = [0, 192], sizes = [8, 64], strides = [1, 1]} : vector<8x256xf32> to vector<8x64xf32>
    %211 = arith.negf %210 : vector<8x64xf32>
    %212 = math.exp %211 : vector<8x64xf32>
    %cst_49 = arith.constant 1.000000e+00 : f32
    %213 = vector.broadcast %cst_49 : f32 to vector<8x64xf32>
    %214 = arith.addf %213, %212 : vector<8x64xf32>
    %215 = arith.divf %213, %214 : vector<8x64xf32>
    %216 = vector.extract_strided_slice %207 {offsets = [0, 64], sizes = [8, 64], strides = [1, 1]} : vector<8x128xf32> to vector<8x64xf32>
    %217 = arith.mulf %216, %196 : vector<8x64xf32>
    %218 = vector.extract_strided_slice %207 {offsets = [0, 0], sizes = [8, 64], strides = [1, 1]} : vector<8x128xf32> to vector<8x64xf32>
    %219 = arith.mulf %218, %209 : vector<8x64xf32>
    %220 = arith.addf %217, %219 : vector<8x64xf32>
    %221 = math.tanh %220 : vector<8x64xf32>
    %222 = arith.mulf %215, %221 : vector<8x64xf32>
    %223 = vector.extract_strided_slice %52 {offsets = [56, 0], sizes = [8, 256], strides = [1, 1]} : vector<64x256xf32> to vector<8x256xf32>
    %cst_50 = arith.constant dense<0.000000e+00> : vector<8x256xf32>
    %224 = tpu.matmul %222, %7, %cst_50 {dimension_numbers = #tpu.dot_dimension_numbers<[1], [0], [0], [1], [0, 0, 1, 1], [], []>} : vector<8x64xf32>, vector<64x256xf32>, vector<8x256xf32> -> vector<8x256xf32>
    %225 = arith.addf %223, %224 : vector<8x256xf32>
    %226 = vector.extract_strided_slice %225 {offsets = [0, 0], sizes = [8, 128], strides = [1, 1]} : vector<8x256xf32> to vector<8x128xf32>
    %227 = arith.negf %226 : vector<8x128xf32>
    %228 = math.exp %227 : vector<8x128xf32>
    %cst_51 = arith.constant 1.000000e+00 : f32
    %229 = vector.broadcast %cst_51 : f32 to vector<8x128xf32>
    %230 = arith.addf %229, %228 : vector<8x128xf32>
    %231 = arith.divf %229, %230 : vector<8x128xf32>
    %232 = vector.extract_strided_slice %225 {offsets = [0, 128], sizes = [8, 64], strides = [1, 1]} : vector<8x256xf32> to vector<8x64xf32>
    %233 = math.tanh %232 : vector<8x64xf32>
    %234 = vector.extract_strided_slice %225 {offsets = [0, 192], sizes = [8, 64], strides = [1, 1]} : vector<8x256xf32> to vector<8x64xf32>
    %235 = arith.negf %234 : vector<8x64xf32>
    %236 = math.exp %235 : vector<8x64xf32>
    %cst_52 = arith.constant 1.000000e+00 : f32
    %237 = vector.broadcast %cst_52 : f32 to vector<8x64xf32>
    %238 = arith.addf %237, %236 : vector<8x64xf32>
    %239 = arith.divf %237, %238 : vector<8x64xf32>
    %240 = vector.extract_strided_slice %231 {offsets = [0, 64], sizes = [8, 64], strides = [1, 1]} : vector<8x128xf32> to vector<8x64xf32>
    %241 = arith.mulf %240, %220 : vector<8x64xf32>
    %242 = vector.extract_strided_slice %231 {offsets = [0, 0], sizes = [8, 64], strides = [1, 1]} : vector<8x128xf32> to vector<8x64xf32>
    %243 = arith.mulf %242, %233 : vector<8x64xf32>
    %244 = arith.addf %241, %243 : vector<8x64xf32>
    %245 = math.tanh %244 : vector<8x64xf32>
    %246 = arith.mulf %239, %245 : vector<8x64xf32>
    %247 = tpu.concatenate %78, %102, %126, %150, %174, %198, %222, %246 in 0 : vector<8x64xf32>, vector<8x64xf32>, vector<8x64xf32>, vector<8x64xf32>, vector<8x64xf32>, vector<8x64xf32>, vector<8x64xf32>, vector<8x64xf32> -> vector<64x64xf32>
    %248 = vector.extract_strided_slice %247 {offsets = [56, 0], sizes = [8, 64], strides = [1, 1]} : vector<64x64xf32> to vector<8x64xf32>
    %249 = vector.extract_strided_slice %247 {offsets = [48, 0], sizes = [8, 64], strides = [1, 1]} : vector<64x64xf32> to vector<8x64xf32>
    %250 = vector.extract_strided_slice %247 {offsets = [40, 0], sizes = [8, 64], strides = [1, 1]} : vector<64x64xf32> to vector<8x64xf32>
    %251 = vector.extract_strided_slice %247 {offsets = [32, 0], sizes = [8, 64], strides = [1, 1]} : vector<64x64xf32> to vector<8x64xf32>
    %252 = vector.extract_strided_slice %247 {offsets = [24, 0], sizes = [8, 64], strides = [1, 1]} : vector<64x64xf32> to vector<8x64xf32>
    %253 = vector.extract_strided_slice %247 {offsets = [16, 0], sizes = [8, 64], strides = [1, 1]} : vector<64x64xf32> to vector<8x64xf32>
    %254 = vector.extract_strided_slice %247 {offsets = [8, 0], sizes = [8, 64], strides = [1, 1]} : vector<64x64xf32> to vector<8x64xf32>
    %255 = vector.extract_strided_slice %247 {offsets = [0, 0], sizes = [8, 64], strides = [1, 1]} : vector<64x64xf32> to vector<8x64xf32>
    %256 = tpu.concatenate %248, %249, %250, %251, %252, %253, %254, %255 in 0 : vector<8x64xf32>, vector<8x64xf32>, vector<8x64xf32>, vector<8x64xf32>, vector<8x64xf32>, vector<8x64xf32>, vector<8x64xf32>, vector<8x64xf32> -> vector<64x64xf32>
    %257 = vector.shape_cast %31 : vector<1x64xi1> to vector<1x64xi1>
    %258 = vector.broadcast %257 : vector<1x64xi1> to vector<64x64xi1>
    %259 = arith.select %258, %247, %256 : vector<64x64xi1>, vector<64x64xf32>
    %cst_53 = arith.constant dense<0.000000e+00> : vector<64x192xf32>
    %260 = tpu.matmul %259, %9, %cst_53 {dimension_numbers = #tpu.dot_dimension_numbers<[1], [0], [0], [1], [0, 0, 1, 1], [], []>} : vector<64x64xf32>, vector<64x192xf32>, vector<64x192xf32> -> vector<64x192xf32>
    %261 = vector.broadcast %11 : vector<1x192xf32> to vector<64x192xf32>
    %262 = arith.addf %260, %261 : vector<64x192xf32>
    %263 = vector.extract_strided_slice %262 {offsets = [56, 0], sizes = [8, 192], strides = [1, 1]} : vector<64x192xf32> to vector<8x192xf32>
    %264 = vector.extract_strided_slice %262 {offsets = [48, 0], sizes = [8, 192], strides = [1, 1]} : vector<64x192xf32> to vector<8x192xf32>
    %265 = vector.extract_strided_slice %262 {offsets = [40, 0], sizes = [8, 192], strides = [1, 1]} : vector<64x192xf32> to vector<8x192xf32>
    %266 = vector.extract_strided_slice %262 {offsets = [32, 0], sizes = [8, 192], strides = [1, 1]} : vector<64x192xf32> to vector<8x192xf32>
    %267 = vector.extract_strided_slice %262 {offsets = [24, 0], sizes = [8, 192], strides = [1, 1]} : vector<64x192xf32> to vector<8x192xf32>
    %268 = vector.extract_strided_slice %262 {offsets = [16, 0], sizes = [8, 192], strides = [1, 1]} : vector<64x192xf32> to vector<8x192xf32>
    %269 = vector.extract_strided_slice %262 {offsets = [8, 0], sizes = [8, 192], strides = [1, 1]} : vector<64x192xf32> to vector<8x192xf32>
    %270 = vector.extract_strided_slice %262 {offsets = [0, 0], sizes = [8, 192], strides = [1, 1]} : vector<64x192xf32> to vector<8x192xf32>
    %271 = tpu.concatenate %263, %264, %265, %266, %267, %268, %269, %270 in 0 : vector<8x192xf32>, vector<8x192xf32>, vector<8x192xf32>, vector<8x192xf32>, vector<8x192xf32>, vector<8x192xf32>, vector<8x192xf32>, vector<8x192xf32> -> vector<64x192xf32>
    %272 = vector.shape_cast %28 : vector<1x192xi1> to vector<1x192xi1>
    %273 = vector.broadcast %272 : vector<1x192xi1> to vector<64x192xi1>
    %274 = arith.select %273, %262, %271 : vector<64x192xi1>, vector<64x192xf32>
    %cst_54 = arith.constant 0.000000e+00 : f32
    %275 = vector.broadcast %cst_54 : f32 to vector<8x64xf32>
    %276 = vector.extract_strided_slice %274 {offsets = [0, 0], sizes = [8, 192], strides = [1, 1]} : vector<64x192xf32> to vector<8x192xf32>
    %cst_55 = arith.constant dense<0.000000e+00> : vector<8x192xf32>
    %277 = tpu.matmul %275, %10, %cst_55 {dimension_numbers = #tpu.dot_dimension_numbers<[1], [0], [0], [1], [0, 0, 1, 1], [], []>} : vector<8x64xf32>, vector<64x192xf32>, vector<8x192xf32> -> vector<8x192xf32>
    %278 = vector.broadcast %12 : vector<1x192xf32> to vector<8x192xf32>
    %279 = arith.addf %277, %278 : vector<8x192xf32>
    %280 = vector.extract_strided_slice %276 {offsets = [0, 0], sizes = [8, 128], strides = [1, 1]} : vector<8x192xf32> to vector<8x128xf32>
    %281 = vector.extract_strided_slice %279 {offsets = [0, 0], sizes = [8, 128], strides = [1, 1]} : vector<8x192xf32> to vector<8x128xf32>
    %282 = arith.addf %280, %281 : vector<8x128xf32>
    %283 = arith.negf %282 : vector<8x128xf32>
    %284 = math.exp %283 : vector<8x128xf32>
    %cst_56 = arith.constant 1.000000e+00 : f32
    %285 = vector.broadcast %cst_56 : f32 to vector<8x128xf32>
    %286 = arith.addf %285, %284 : vector<8x128xf32>
    %287 = arith.divf %285, %286 : vector<8x128xf32>
    %288 = vector.extract_strided_slice %276 {offsets = [0, 128], sizes = [8, 64], strides = [1, 1]} : vector<8x192xf32> to vector<8x64xf32>
    %289 = vector.extract_strided_slice %287 {offsets = [0, 0], sizes = [8, 64], strides = [1, 1]} : vector<8x128xf32> to vector<8x64xf32>
    %290 = vector.extract_strided_slice %279 {offsets = [0, 128], sizes = [8, 64], strides = [1, 1]} : vector<8x192xf32> to vector<8x64xf32>
    %291 = arith.mulf %289, %290 : vector<8x64xf32>
    %292 = arith.addf %288, %291 : vector<8x64xf32>
    %293 = math.tanh %292 : vector<8x64xf32>
    %294 = vector.extract_strided_slice %287 {offsets = [0, 64], sizes = [8, 64], strides = [1, 1]} : vector<8x128xf32> to vector<8x64xf32>
    %cst_57 = arith.constant 1.000000e+00 : f32
    %295 = vector.broadcast %cst_57 : f32 to vector<8x64xf32>
    %296 = arith.subf %295, %294 : vector<8x64xf32>
    %297 = arith.mulf %296, %293 : vector<8x64xf32>
    %298 = vector.extract_strided_slice %287 {offsets = [0, 64], sizes = [8, 64], strides = [1, 1]} : vector<8x128xf32> to vector<8x64xf32>
    %299 = arith.mulf %298, %275 : vector<8x64xf32>
    %300 = arith.addf %297, %299 : vector<8x64xf32>
    %301 = vector.extract_strided_slice %274 {offsets = [8, 0], sizes = [8, 192], strides = [1, 1]} : vector<64x192xf32> to vector<8x192xf32>
    %cst_58 = arith.constant dense<0.000000e+00> : vector<8x192xf32>
    %302 = tpu.matmul %300, %10, %cst_58 {dimension_numbers = #tpu.dot_dimension_numbers<[1], [0], [0], [1], [0, 0, 1, 1], [], []>} : vector<8x64xf32>, vector<64x192xf32>, vector<8x192xf32> -> vector<8x192xf32>
    %303 = vector.broadcast %12 : vector<1x192xf32> to vector<8x192xf32>
    %304 = arith.addf %302, %303 : vector<8x192xf32>
    %305 = vector.extract_strided_slice %301 {offsets = [0, 0], sizes = [8, 128], strides = [1, 1]} : vector<8x192xf32> to vector<8x128xf32>
    %306 = vector.extract_strided_slice %304 {offsets = [0, 0], sizes = [8, 128], strides = [1, 1]} : vector<8x192xf32> to vector<8x128xf32>
    %307 = arith.addf %305, %306 : vector<8x128xf32>
    %308 = arith.negf %307 : vector<8x128xf32>
    %309 = math.exp %308 : vector<8x128xf32>
    %cst_59 = arith.constant 1.000000e+00 : f32
    %310 = vector.broadcast %cst_59 : f32 to vector<8x128xf32>
    %311 = arith.addf %310, %309 : vector<8x128xf32>
    %312 = arith.divf %310, %311 : vector<8x128xf32>
    %313 = vector.extract_strided_slice %301 {offsets = [0, 128], sizes = [8, 64], strides = [1, 1]} : vector<8x192xf32> to vector<8x64xf32>
    %314 = vector.extract_strided_slice %312 {offsets = [0, 0], sizes = [8, 64], strides = [1, 1]} : vector<8x128xf32> to vector<8x64xf32>
    %315 = vector.extract_strided_slice %304 {offsets = [0, 128], sizes = [8, 64], strides = [1, 1]} : vector<8x192xf32> to vector<8x64xf32>
    %316 = arith.mulf %314, %315 : vector<8x64xf32>
    %317 = arith.addf %313, %316 : vector<8x64xf32>
    %318 = math.tanh %317 : vector<8x64xf32>
    %319 = vector.extract_strided_slice %312 {offsets = [0, 64], sizes = [8, 64], strides = [1, 1]} : vector<8x128xf32> to vector<8x64xf32>
    %cst_60 = arith.constant 1.000000e+00 : f32
    %320 = vector.broadcast %cst_60 : f32 to vector<8x64xf32>
    %321 = arith.subf %320, %319 : vector<8x64xf32>
    %322 = arith.mulf %321, %318 : vector<8x64xf32>
    %323 = vector.extract_strided_slice %312 {offsets = [0, 64], sizes = [8, 64], strides = [1, 1]} : vector<8x128xf32> to vector<8x64xf32>
    %324 = arith.mulf %323, %300 : vector<8x64xf32>
    %325 = arith.addf %322, %324 : vector<8x64xf32>
    %326 = vector.extract_strided_slice %274 {offsets = [16, 0], sizes = [8, 192], strides = [1, 1]} : vector<64x192xf32> to vector<8x192xf32>
    %cst_61 = arith.constant dense<0.000000e+00> : vector<8x192xf32>
    %327 = tpu.matmul %325, %10, %cst_61 {dimension_numbers = #tpu.dot_dimension_numbers<[1], [0], [0], [1], [0, 0, 1, 1], [], []>} : vector<8x64xf32>, vector<64x192xf32>, vector<8x192xf32> -> vector<8x192xf32>
    %328 = vector.broadcast %12 : vector<1x192xf32> to vector<8x192xf32>
    %329 = arith.addf %327, %328 : vector<8x192xf32>
    %330 = vector.extract_strided_slice %326 {offsets = [0, 0], sizes = [8, 128], strides = [1, 1]} : vector<8x192xf32> to vector<8x128xf32>
    %331 = vector.extract_strided_slice %329 {offsets = [0, 0], sizes = [8, 128], strides = [1, 1]} : vector<8x192xf32> to vector<8x128xf32>
    %332 = arith.addf %330, %331 : vector<8x128xf32>
    %333 = arith.negf %332 : vector<8x128xf32>
    %334 = math.exp %333 : vector<8x128xf32>
    %cst_62 = arith.constant 1.000000e+00 : f32
    %335 = vector.broadcast %cst_62 : f32 to vector<8x128xf32>
    %336 = arith.addf %335, %334 : vector<8x128xf32>
    %337 = arith.divf %335, %336 : vector<8x128xf32>
    %338 = vector.extract_strided_slice %326 {offsets = [0, 128], sizes = [8, 64], strides = [1, 1]} : vector<8x192xf32> to vector<8x64xf32>
    %339 = vector.extract_strided_slice %337 {offsets = [0, 0], sizes = [8, 64], strides = [1, 1]} : vector<8x128xf32> to vector<8x64xf32>
    %340 = vector.extract_strided_slice %329 {offsets = [0, 128], sizes = [8, 64], strides = [1, 1]} : vector<8x192xf32> to vector<8x64xf32>
    %341 = arith.mulf %339, %340 : vector<8x64xf32>
    %342 = arith.addf %338, %341 : vector<8x64xf32>
    %343 = math.tanh %342 : vector<8x64xf32>
    %344 = vector.extract_strided_slice %337 {offsets = [0, 64], sizes = [8, 64], strides = [1, 1]} : vector<8x128xf32> to vector<8x64xf32>
    %cst_63 = arith.constant 1.000000e+00 : f32
    %345 = vector.broadcast %cst_63 : f32 to vector<8x64xf32>
    %346 = arith.subf %345, %344 : vector<8x64xf32>
    %347 = arith.mulf %346, %343 : vector<8x64xf32>
    %348 = vector.extract_strided_slice %337 {offsets = [0, 64], sizes = [8, 64], strides = [1, 1]} : vector<8x128xf32> to vector<8x64xf32>
    %349 = arith.mulf %348, %325 : vector<8x64xf32>
    %350 = arith.addf %347, %349 : vector<8x64xf32>
    %351 = vector.extract_strided_slice %274 {offsets = [24, 0], sizes = [8, 192], strides = [1, 1]} : vector<64x192xf32> to vector<8x192xf32>
    %cst_64 = arith.constant dense<0.000000e+00> : vector<8x192xf32>
    %352 = tpu.matmul %350, %10, %cst_64 {dimension_numbers = #tpu.dot_dimension_numbers<[1], [0], [0], [1], [0, 0, 1, 1], [], []>} : vector<8x64xf32>, vector<64x192xf32>, vector<8x192xf32> -> vector<8x192xf32>
    %353 = vector.broadcast %12 : vector<1x192xf32> to vector<8x192xf32>
    %354 = arith.addf %352, %353 : vector<8x192xf32>
    %355 = vector.extract_strided_slice %351 {offsets = [0, 0], sizes = [8, 128], strides = [1, 1]} : vector<8x192xf32> to vector<8x128xf32>
    %356 = vector.extract_strided_slice %354 {offsets = [0, 0], sizes = [8, 128], strides = [1, 1]} : vector<8x192xf32> to vector<8x128xf32>
    %357 = arith.addf %355, %356 : vector<8x128xf32>
    %358 = arith.negf %357 : vector<8x128xf32>
    %359 = math.exp %358 : vector<8x128xf32>
    %cst_65 = arith.constant 1.000000e+00 : f32
    %360 = vector.broadcast %cst_65 : f32 to vector<8x128xf32>
    %361 = arith.addf %360, %359 : vector<8x128xf32>
    %362 = arith.divf %360, %361 : vector<8x128xf32>
    %363 = vector.extract_strided_slice %351 {offsets = [0, 128], sizes = [8, 64], strides = [1, 1]} : vector<8x192xf32> to vector<8x64xf32>
    %364 = vector.extract_strided_slice %362 {offsets = [0, 0], sizes = [8, 64], strides = [1, 1]} : vector<8x128xf32> to vector<8x64xf32>
    %365 = vector.extract_strided_slice %354 {offsets = [0, 128], sizes = [8, 64], strides = [1, 1]} : vector<8x192xf32> to vector<8x64xf32>
    %366 = arith.mulf %364, %365 : vector<8x64xf32>
    %367 = arith.addf %363, %366 : vector<8x64xf32>
    %368 = math.tanh %367 : vector<8x64xf32>
    %369 = vector.extract_strided_slice %362 {offsets = [0, 64], sizes = [8, 64], strides = [1, 1]} : vector<8x128xf32> to vector<8x64xf32>
    %cst_66 = arith.constant 1.000000e+00 : f32
    %370 = vector.broadcast %cst_66 : f32 to vector<8x64xf32>
    %371 = arith.subf %370, %369 : vector<8x64xf32>
    %372 = arith.mulf %371, %368 : vector<8x64xf32>
    %373 = vector.extract_strided_slice %362 {offsets = [0, 64], sizes = [8, 64], strides = [1, 1]} : vector<8x128xf32> to vector<8x64xf32>
    %374 = arith.mulf %373, %350 : vector<8x64xf32>
    %375 = arith.addf %372, %374 : vector<8x64xf32>
    %376 = vector.extract_strided_slice %274 {offsets = [32, 0], sizes = [8, 192], strides = [1, 1]} : vector<64x192xf32> to vector<8x192xf32>
    %cst_67 = arith.constant dense<0.000000e+00> : vector<8x192xf32>
    %377 = tpu.matmul %375, %10, %cst_67 {dimension_numbers = #tpu.dot_dimension_numbers<[1], [0], [0], [1], [0, 0, 1, 1], [], []>} : vector<8x64xf32>, vector<64x192xf32>, vector<8x192xf32> -> vector<8x192xf32>
    %378 = vector.broadcast %12 : vector<1x192xf32> to vector<8x192xf32>
    %379 = arith.addf %377, %378 : vector<8x192xf32>
    %380 = vector.extract_strided_slice %376 {offsets = [0, 0], sizes = [8, 128], strides = [1, 1]} : vector<8x192xf32> to vector<8x128xf32>
    %381 = vector.extract_strided_slice %379 {offsets = [0, 0], sizes = [8, 128], strides = [1, 1]} : vector<8x192xf32> to vector<8x128xf32>
    %382 = arith.addf %380, %381 : vector<8x128xf32>
    %383 = arith.negf %382 : vector<8x128xf32>
    %384 = math.exp %383 : vector<8x128xf32>
    %cst_68 = arith.constant 1.000000e+00 : f32
    %385 = vector.broadcast %cst_68 : f32 to vector<8x128xf32>
    %386 = arith.addf %385, %384 : vector<8x128xf32>
    %387 = arith.divf %385, %386 : vector<8x128xf32>
    %388 = vector.extract_strided_slice %376 {offsets = [0, 128], sizes = [8, 64], strides = [1, 1]} : vector<8x192xf32> to vector<8x64xf32>
    %389 = vector.extract_strided_slice %387 {offsets = [0, 0], sizes = [8, 64], strides = [1, 1]} : vector<8x128xf32> to vector<8x64xf32>
    %390 = vector.extract_strided_slice %379 {offsets = [0, 128], sizes = [8, 64], strides = [1, 1]} : vector<8x192xf32> to vector<8x64xf32>
    %391 = arith.mulf %389, %390 : vector<8x64xf32>
    %392 = arith.addf %388, %391 : vector<8x64xf32>
    %393 = math.tanh %392 : vector<8x64xf32>
    %394 = vector.extract_strided_slice %387 {offsets = [0, 64], sizes = [8, 64], strides = [1, 1]} : vector<8x128xf32> to vector<8x64xf32>
    %cst_69 = arith.constant 1.000000e+00 : f32
    %395 = vector.broadcast %cst_69 : f32 to vector<8x64xf32>
    %396 = arith.subf %395, %394 : vector<8x64xf32>
    %397 = arith.mulf %396, %393 : vector<8x64xf32>
    %398 = vector.extract_strided_slice %387 {offsets = [0, 64], sizes = [8, 64], strides = [1, 1]} : vector<8x128xf32> to vector<8x64xf32>
    %399 = arith.mulf %398, %375 : vector<8x64xf32>
    %400 = arith.addf %397, %399 : vector<8x64xf32>
    %401 = vector.extract_strided_slice %274 {offsets = [40, 0], sizes = [8, 192], strides = [1, 1]} : vector<64x192xf32> to vector<8x192xf32>
    %cst_70 = arith.constant dense<0.000000e+00> : vector<8x192xf32>
    %402 = tpu.matmul %400, %10, %cst_70 {dimension_numbers = #tpu.dot_dimension_numbers<[1], [0], [0], [1], [0, 0, 1, 1], [], []>} : vector<8x64xf32>, vector<64x192xf32>, vector<8x192xf32> -> vector<8x192xf32>
    %403 = vector.broadcast %12 : vector<1x192xf32> to vector<8x192xf32>
    %404 = arith.addf %402, %403 : vector<8x192xf32>
    %405 = vector.extract_strided_slice %401 {offsets = [0, 0], sizes = [8, 128], strides = [1, 1]} : vector<8x192xf32> to vector<8x128xf32>
    %406 = vector.extract_strided_slice %404 {offsets = [0, 0], sizes = [8, 128], strides = [1, 1]} : vector<8x192xf32> to vector<8x128xf32>
    %407 = arith.addf %405, %406 : vector<8x128xf32>
    %408 = arith.negf %407 : vector<8x128xf32>
    %409 = math.exp %408 : vector<8x128xf32>
    %cst_71 = arith.constant 1.000000e+00 : f32
    %410 = vector.broadcast %cst_71 : f32 to vector<8x128xf32>
    %411 = arith.addf %410, %409 : vector<8x128xf32>
    %412 = arith.divf %410, %411 : vector<8x128xf32>
    %413 = vector.extract_strided_slice %401 {offsets = [0, 128], sizes = [8, 64], strides = [1, 1]} : vector<8x192xf32> to vector<8x64xf32>
    %414 = vector.extract_strided_slice %412 {offsets = [0, 0], sizes = [8, 64], strides = [1, 1]} : vector<8x128xf32> to vector<8x64xf32>
    %415 = vector.extract_strided_slice %404 {offsets = [0, 128], sizes = [8, 64], strides = [1, 1]} : vector<8x192xf32> to vector<8x64xf32>
    %416 = arith.mulf %414, %415 : vector<8x64xf32>
    %417 = arith.addf %413, %416 : vector<8x64xf32>
    %418 = math.tanh %417 : vector<8x64xf32>
    %419 = vector.extract_strided_slice %412 {offsets = [0, 64], sizes = [8, 64], strides = [1, 1]} : vector<8x128xf32> to vector<8x64xf32>
    %cst_72 = arith.constant 1.000000e+00 : f32
    %420 = vector.broadcast %cst_72 : f32 to vector<8x64xf32>
    %421 = arith.subf %420, %419 : vector<8x64xf32>
    %422 = arith.mulf %421, %418 : vector<8x64xf32>
    %423 = vector.extract_strided_slice %412 {offsets = [0, 64], sizes = [8, 64], strides = [1, 1]} : vector<8x128xf32> to vector<8x64xf32>
    %424 = arith.mulf %423, %400 : vector<8x64xf32>
    %425 = arith.addf %422, %424 : vector<8x64xf32>
    %426 = vector.extract_strided_slice %274 {offsets = [48, 0], sizes = [8, 192], strides = [1, 1]} : vector<64x192xf32> to vector<8x192xf32>
    %cst_73 = arith.constant dense<0.000000e+00> : vector<8x192xf32>
    %427 = tpu.matmul %425, %10, %cst_73 {dimension_numbers = #tpu.dot_dimension_numbers<[1], [0], [0], [1], [0, 0, 1, 1], [], []>} : vector<8x64xf32>, vector<64x192xf32>, vector<8x192xf32> -> vector<8x192xf32>
    %428 = vector.broadcast %12 : vector<1x192xf32> to vector<8x192xf32>
    %429 = arith.addf %427, %428 : vector<8x192xf32>
    %430 = vector.extract_strided_slice %426 {offsets = [0, 0], sizes = [8, 128], strides = [1, 1]} : vector<8x192xf32> to vector<8x128xf32>
    %431 = vector.extract_strided_slice %429 {offsets = [0, 0], sizes = [8, 128], strides = [1, 1]} : vector<8x192xf32> to vector<8x128xf32>
    %432 = arith.addf %430, %431 : vector<8x128xf32>
    %433 = arith.negf %432 : vector<8x128xf32>
    %434 = math.exp %433 : vector<8x128xf32>
    %cst_74 = arith.constant 1.000000e+00 : f32
    %435 = vector.broadcast %cst_74 : f32 to vector<8x128xf32>
    %436 = arith.addf %435, %434 : vector<8x128xf32>
    %437 = arith.divf %435, %436 : vector<8x128xf32>
    %438 = vector.extract_strided_slice %426 {offsets = [0, 128], sizes = [8, 64], strides = [1, 1]} : vector<8x192xf32> to vector<8x64xf32>
    %439 = vector.extract_strided_slice %437 {offsets = [0, 0], sizes = [8, 64], strides = [1, 1]} : vector<8x128xf32> to vector<8x64xf32>
    %440 = vector.extract_strided_slice %429 {offsets = [0, 128], sizes = [8, 64], strides = [1, 1]} : vector<8x192xf32> to vector<8x64xf32>
    %441 = arith.mulf %439, %440 : vector<8x64xf32>
    %442 = arith.addf %438, %441 : vector<8x64xf32>
    %443 = math.tanh %442 : vector<8x64xf32>
    %444 = vector.extract_strided_slice %437 {offsets = [0, 64], sizes = [8, 64], strides = [1, 1]} : vector<8x128xf32> to vector<8x64xf32>
    %cst_75 = arith.constant 1.000000e+00 : f32
    %445 = vector.broadcast %cst_75 : f32 to vector<8x64xf32>
    %446 = arith.subf %445, %444 : vector<8x64xf32>
    %447 = arith.mulf %446, %443 : vector<8x64xf32>
    %448 = vector.extract_strided_slice %437 {offsets = [0, 64], sizes = [8, 64], strides = [1, 1]} : vector<8x128xf32> to vector<8x64xf32>
    %449 = arith.mulf %448, %425 : vector<8x64xf32>
    %450 = arith.addf %447, %449 : vector<8x64xf32>
    %451 = vector.extract_strided_slice %274 {offsets = [56, 0], sizes = [8, 192], strides = [1, 1]} : vector<64x192xf32> to vector<8x192xf32>
    %cst_76 = arith.constant dense<0.000000e+00> : vector<8x192xf32>
    %452 = tpu.matmul %450, %10, %cst_76 {dimension_numbers = #tpu.dot_dimension_numbers<[1], [0], [0], [1], [0, 0, 1, 1], [], []>} : vector<8x64xf32>, vector<64x192xf32>, vector<8x192xf32> -> vector<8x192xf32>
    %453 = vector.broadcast %12 : vector<1x192xf32> to vector<8x192xf32>
    %454 = arith.addf %452, %453 : vector<8x192xf32>
    %455 = vector.extract_strided_slice %451 {offsets = [0, 0], sizes = [8, 128], strides = [1, 1]} : vector<8x192xf32> to vector<8x128xf32>
    %456 = vector.extract_strided_slice %454 {offsets = [0, 0], sizes = [8, 128], strides = [1, 1]} : vector<8x192xf32> to vector<8x128xf32>
    %457 = arith.addf %455, %456 : vector<8x128xf32>
    %458 = arith.negf %457 : vector<8x128xf32>
    %459 = math.exp %458 : vector<8x128xf32>
    %cst_77 = arith.constant 1.000000e+00 : f32
    %460 = vector.broadcast %cst_77 : f32 to vector<8x128xf32>
    %461 = arith.addf %460, %459 : vector<8x128xf32>
    %462 = arith.divf %460, %461 : vector<8x128xf32>
    %463 = vector.extract_strided_slice %451 {offsets = [0, 128], sizes = [8, 64], strides = [1, 1]} : vector<8x192xf32> to vector<8x64xf32>
    %464 = vector.extract_strided_slice %462 {offsets = [0, 0], sizes = [8, 64], strides = [1, 1]} : vector<8x128xf32> to vector<8x64xf32>
    %465 = vector.extract_strided_slice %454 {offsets = [0, 128], sizes = [8, 64], strides = [1, 1]} : vector<8x192xf32> to vector<8x64xf32>
    %466 = arith.mulf %464, %465 : vector<8x64xf32>
    %467 = arith.addf %463, %466 : vector<8x64xf32>
    %468 = math.tanh %467 : vector<8x64xf32>
    %469 = vector.extract_strided_slice %462 {offsets = [0, 64], sizes = [8, 64], strides = [1, 1]} : vector<8x128xf32> to vector<8x64xf32>
    %cst_78 = arith.constant 1.000000e+00 : f32
    %470 = vector.broadcast %cst_78 : f32 to vector<8x64xf32>
    %471 = arith.subf %470, %469 : vector<8x64xf32>
    %472 = arith.mulf %471, %468 : vector<8x64xf32>
    %473 = vector.extract_strided_slice %462 {offsets = [0, 64], sizes = [8, 64], strides = [1, 1]} : vector<8x128xf32> to vector<8x64xf32>
    %474 = arith.mulf %473, %450 : vector<8x64xf32>
    %475 = arith.addf %472, %474 : vector<8x64xf32>
    %476 = tpu.concatenate %300, %325, %350, %375, %400, %425, %450, %475 in 0 : vector<8x64xf32>, vector<8x64xf32>, vector<8x64xf32>, vector<8x64xf32>, vector<8x64xf32>, vector<8x64xf32>, vector<8x64xf32>, vector<8x64xf32> -> vector<64x64xf32>
    %477 = vector.extract_strided_slice %476 {offsets = [56, 0], sizes = [8, 64], strides = [1, 1]} : vector<64x64xf32> to vector<8x64xf32>
    %478 = vector.extract_strided_slice %476 {offsets = [48, 0], sizes = [8, 64], strides = [1, 1]} : vector<64x64xf32> to vector<8x64xf32>
    %479 = vector.extract_strided_slice %476 {offsets = [40, 0], sizes = [8, 64], strides = [1, 1]} : vector<64x64xf32> to vector<8x64xf32>
    %480 = vector.extract_strided_slice %476 {offsets = [32, 0], sizes = [8, 64], strides = [1, 1]} : vector<64x64xf32> to vector<8x64xf32>
    %481 = vector.extract_strided_slice %476 {offsets = [24, 0], sizes = [8, 64], strides = [1, 1]} : vector<64x64xf32> to vector<8x64xf32>
    %482 = vector.extract_strided_slice %476 {offsets = [16, 0], sizes = [8, 64], strides = [1, 1]} : vector<64x64xf32> to vector<8x64xf32>
    %483 = vector.extract_strided_slice %476 {offsets = [8, 0], sizes = [8, 64], strides = [1, 1]} : vector<64x64xf32> to vector<8x64xf32>
    %484 = vector.extract_strided_slice %476 {offsets = [0, 0], sizes = [8, 64], strides = [1, 1]} : vector<64x64xf32> to vector<8x64xf32>
    %485 = tpu.concatenate %477, %478, %479, %480, %481, %482, %483, %484 in 0 : vector<8x64xf32>, vector<8x64xf32>, vector<8x64xf32>, vector<8x64xf32>, vector<8x64xf32>, vector<8x64xf32>, vector<8x64xf32>, vector<8x64xf32> -> vector<64x64xf32>
    %486 = vector.shape_cast %31 : vector<1x64xi1> to vector<1x64xi1>
    %487 = vector.broadcast %486 : vector<1x64xi1> to vector<64x64xi1>
    %488 = arith.select %487, %476, %485 : vector<64x64xi1>, vector<64x64xf32>
    %489 = vector.broadcast %4 : vector<64x1xf32> to vector<64x64xf32>
    %490 = arith.mulf %259, %489 : vector<64x64xf32>
    %491 = vector.broadcast %4 : vector<64x1xf32> to vector<64x64xf32>
    %492 = arith.mulf %488, %491 : vector<64x64xf32>
    %493 = vector.extract_strided_slice %13 {offsets = [0, 0], sizes = [1, 64], strides = [1, 1]} : vector<2x64xf32> to vector<1x64xf32>
    %494 = vector.extract_strided_slice %14 {offsets = [0, 0], sizes = [64, 1], strides = [1, 1]} : vector<64x2xf32> to vector<64x1xf32>
    %495 = vector.broadcast %493 : vector<1x64xf32> to vector<64x64xf32>
    %496 = arith.mulf %490, %495 : vector<64x64xf32>
    %cst_79 = arith.constant dense<0.000000e+00> : vector<64xf32>
    %497 = vector.multi_reduction <add>, %496, %cst_79 [1] : vector<64x64xf32> to vector<64xf32>
    %498 = vector.shape_cast %497 : vector<64xf32> to vector<64x1xf32>
    %499 = arith.addf %498, %494 : vector<64x1xf32>
    %500 = math.tanh %499 : vector<64x1xf32>
    %501 = math.exp %500 : vector<64x1xf32>
    %502 = vector.broadcast %501 : vector<64x1xf32> to vector<64x64xf32>
    %503 = arith.mulf %490, %502 : vector<64x64xf32>
    %cst_80 = arith.constant dense<0.000000e+00> : vector<8x64xf32>
    %504 = tpu.matmul %21, %503, %cst_80 {dimension_numbers = #tpu.dot_dimension_numbers<[1], [0], [0], [1], [0, 0, 1, 1], [], []>} : vector<8x64xf32>, vector<64x64xf32>, vector<8x64xf32> -> vector<8x64xf32>
    %cst_81 = arith.constant dense<0.000000e+00> : vector<8x1xf32>
    %505 = tpu.matmul %21, %501, %cst_81 {dimension_numbers = #tpu.dot_dimension_numbers<[1], [0], [0], [1], [0, 0, 1, 1], [], []>} : vector<8x64xf32>, vector<64x1xf32>, vector<8x1xf32> -> vector<8x1xf32>
    %cst_82 = arith.constant 1.000000e-10 : f32
    %506 = vector.broadcast %cst_82 : f32 to vector<8x1xf32>
    %507 = arith.addf %505, %506 : vector<8x1xf32>
    %508 = vector.broadcast %507 : vector<8x1xf32> to vector<8x64xf32>
    %509 = arith.divf %504, %508 : vector<8x64xf32>
    %510 = vector.extract_strided_slice %13 {offsets = [1, 0], sizes = [1, 64], strides = [1, 1]} : vector<2x64xf32> to vector<1x64xf32>
    %511 = vector.extract_strided_slice %14 {offsets = [0, 1], sizes = [64, 1], strides = [1, 1]} : vector<64x2xf32> to vector<64x1xf32>
    %512 = vector.broadcast %510 : vector<1x64xf32> to vector<64x64xf32>
    %513 = arith.mulf %492, %512 : vector<64x64xf32>
    %cst_83 = arith.constant dense<0.000000e+00> : vector<64xf32>
    %514 = vector.multi_reduction <add>, %513, %cst_83 [1] : vector<64x64xf32> to vector<64xf32>
    %515 = vector.shape_cast %514 : vector<64xf32> to vector<64x1xf32>
    %516 = arith.addf %515, %511 : vector<64x1xf32>
    %517 = math.tanh %516 : vector<64x1xf32>
    %518 = math.exp %517 : vector<64x1xf32>
    %519 = vector.broadcast %518 : vector<64x1xf32> to vector<64x64xf32>
    %520 = arith.mulf %492, %519 : vector<64x64xf32>
    %cst_84 = arith.constant dense<0.000000e+00> : vector<8x64xf32>
    %521 = tpu.matmul %21, %520, %cst_84 {dimension_numbers = #tpu.dot_dimension_numbers<[1], [0], [0], [1], [0, 0, 1, 1], [], []>} : vector<8x64xf32>, vector<64x64xf32>, vector<8x64xf32> -> vector<8x64xf32>
    %cst_85 = arith.constant dense<0.000000e+00> : vector<8x1xf32>
    %522 = tpu.matmul %21, %518, %cst_85 {dimension_numbers = #tpu.dot_dimension_numbers<[1], [0], [0], [1], [0, 0, 1, 1], [], []>} : vector<8x64xf32>, vector<64x1xf32>, vector<8x1xf32> -> vector<8x1xf32>
    %cst_86 = arith.constant 1.000000e-10 : f32
    %523 = vector.broadcast %cst_86 : f32 to vector<8x1xf32>
    %524 = arith.addf %522, %523 : vector<8x1xf32>
    %525 = vector.broadcast %524 : vector<8x1xf32> to vector<8x64xf32>
    %526 = arith.divf %521, %525 : vector<8x64xf32>
    %cst_87 = arith.constant dense<0.000000e+00> : vector<8x64xf32>
    %527 = tpu.matmul %21, %492, %cst_87 {dimension_numbers = #tpu.dot_dimension_numbers<[1], [0], [0], [1], [0, 0, 1, 1], [], []>} : vector<8x64xf32>, vector<64x64xf32>, vector<8x64xf32> -> vector<8x64xf32>
    %cst_88 = arith.constant 1.250000e-01 : f32
    %528 = vector.broadcast %cst_88 : f32 to vector<8x64xf32>
    %529 = arith.mulf %527, %528 : vector<8x64xf32>
    %530 = vector.extract_strided_slice %492 {offsets = [0, 0], sizes = [8, 64], strides = [1, 1]} : vector<64x64xf32> to vector<8x64xf32>
    %531 = vector.extract_strided_slice %492 {offsets = [8, 0], sizes = [8, 64], strides = [1, 1]} : vector<64x64xf32> to vector<8x64xf32>
    %532 = arith.maximumf %530, %531 : vector<8x64xf32>
    %533 = vector.extract_strided_slice %492 {offsets = [16, 0], sizes = [8, 64], strides = [1, 1]} : vector<64x64xf32> to vector<8x64xf32>
    %534 = arith.maximumf %532, %533 : vector<8x64xf32>
    %535 = vector.extract_strided_slice %492 {offsets = [24, 0], sizes = [8, 64], strides = [1, 1]} : vector<64x64xf32> to vector<8x64xf32>
    %536 = arith.maximumf %534, %535 : vector<8x64xf32>
    %537 = vector.extract_strided_slice %492 {offsets = [32, 0], sizes = [8, 64], strides = [1, 1]} : vector<64x64xf32> to vector<8x64xf32>
    %538 = arith.maximumf %536, %537 : vector<8x64xf32>
    %539 = vector.extract_strided_slice %492 {offsets = [40, 0], sizes = [8, 64], strides = [1, 1]} : vector<64x64xf32> to vector<8x64xf32>
    %540 = arith.maximumf %538, %539 : vector<8x64xf32>
    %541 = vector.extract_strided_slice %492 {offsets = [48, 0], sizes = [8, 64], strides = [1, 1]} : vector<64x64xf32> to vector<8x64xf32>
    %542 = arith.maximumf %540, %541 : vector<8x64xf32>
    %543 = vector.extract_strided_slice %492 {offsets = [56, 0], sizes = [8, 64], strides = [1, 1]} : vector<64x64xf32> to vector<8x64xf32>
    %544 = arith.maximumf %542, %543 : vector<8x64xf32>
    %cst_89 = arith.constant dense<0.000000e+00> : vector<64x64xf32>
    %545 = tpu.matmul %492, %15, %cst_89 {dimension_numbers = #tpu.dot_dimension_numbers<[1], [0], [0], [1], [0, 0, 1, 1], [], []>} : vector<64x64xf32>, vector<64x64xf32>, vector<64x64xf32> -> vector<64x64xf32>
    %cst_90 = arith.constant dense<0.000000e+00> : vector<8x64xf32>
    %546 = tpu.matmul %21, %545, %cst_90 {dimension_numbers = #tpu.dot_dimension_numbers<[1], [0], [0], [1], [0, 0, 1, 1], [], []>} : vector<8x64xf32>, vector<64x64xf32>, vector<8x64xf32> -> vector<8x64xf32>
    %cst_91 = arith.constant 1.250000e-01 : f32
    %547 = vector.broadcast %cst_91 : f32 to vector<8x64xf32>
    %548 = arith.mulf %546, %547 : vector<8x64xf32>
    %549 = arith.mulf %548, %548 : vector<8x64xf32>
    %cst_92 = arith.constant dense<0.000000e+00> : vector<8x64xf32>
    %550 = tpu.matmul %549, %22, %cst_92 {dimension_numbers = #tpu.dot_dimension_numbers<[1], [0], [0], [1], [0, 0, 1, 1], [], []>} : vector<8x64xf32>, vector<64x64xf32>, vector<8x64xf32> -> vector<8x64xf32>
    %cst_93 = arith.constant 1.000000e-07 : f32
    %551 = vector.broadcast %cst_93 : f32 to vector<8x64xf32>
    %552 = arith.addf %550, %551 : vector<8x64xf32>
    %553 = math.rsqrt %552 : vector<8x64xf32>
    %554 = arith.mulf %548, %553 : vector<8x64xf32>
    %555 = tpu.concatenate %554, %554, %554, %554, %554, %554, %554, %554 in 0 : vector<8x64xf32>, vector<8x64xf32>, vector<8x64xf32>, vector<8x64xf32>, vector<8x64xf32>, vector<8x64xf32>, vector<8x64xf32>, vector<8x64xf32> -> vector<64x64xf32>
    %556 = arith.mulf %545, %555 : vector<64x64xf32>
    %cst_94 = arith.constant dense<0.000000e+00> : vector<64x64xf32>
    %557 = tpu.matmul %556, %22, %cst_94 {dimension_numbers = #tpu.dot_dimension_numbers<[1], [0], [0], [1], [0, 0, 1, 1], [], []>} : vector<64x64xf32>, vector<64x64xf32>, vector<64x64xf32> -> vector<64x64xf32>
    %cst_95 = arith.constant dense<0xFF800000> : vector<64xf32>
    %558 = vector.multi_reduction <maximumf>, %557, %cst_95 [1] : vector<64x64xf32> to vector<64xf32>
    %559 = vector.shape_cast %558 : vector<64xf32> to vector<64x1xf32>
    %560 = vector.broadcast %559 : vector<64x1xf32> to vector<64x64xf32>
    %561 = arith.subf %557, %560 : vector<64x64xf32>
    %562 = math.exp %561 : vector<64x64xf32>
    %cst_96 = arith.constant 8.000000e+00 : f32
    %563 = vector.broadcast %cst_96 : f32 to vector<64x64xf32>
    %564 = arith.mulf %562, %563 : vector<64x64xf32>
    %cst_97 = arith.constant dense<0.000000e+00> : vector<64xf32>
    %565 = vector.multi_reduction <add>, %562, %cst_97 [1] : vector<64x64xf32> to vector<64xf32>
    %566 = vector.shape_cast %565 : vector<64xf32> to vector<64x1xf32>
    %567 = vector.broadcast %566 : vector<64x1xf32> to vector<64x64xf32>
    %568 = arith.divf %564, %567 : vector<64x64xf32>
    %569 = arith.mulf %568, %545 : vector<64x64xf32>
    %cst_98 = arith.constant dense<0.000000e+00> : vector<8x64xf32>
    %570 = tpu.matmul %21, %569, %cst_98 {dimension_numbers = #tpu.dot_dimension_numbers<[1], [0], [0], [1], [0, 0, 1, 1], [], []>} : vector<8x64xf32>, vector<64x64xf32>, vector<8x64xf32> -> vector<8x64xf32>
    %571 = arith.mulf %570, %570 : vector<8x64xf32>
    %cst_99 = arith.constant dense<0.000000e+00> : vector<8x64xf32>
    %572 = tpu.matmul %571, %22, %cst_99 {dimension_numbers = #tpu.dot_dimension_numbers<[1], [0], [0], [1], [0, 0, 1, 1], [], []>} : vector<8x64xf32>, vector<64x64xf32>, vector<8x64xf32> -> vector<8x64xf32>
    %cst_100 = arith.constant 1.000000e-07 : f32
    %573 = vector.broadcast %cst_100 : f32 to vector<8x64xf32>
    %574 = arith.addf %572, %573 : vector<8x64xf32>
    %575 = math.rsqrt %574 : vector<8x64xf32>
    %576 = arith.mulf %570, %575 : vector<8x64xf32>
    %577 = tpu.concatenate %576, %576, %576, %576, %576, %576, %576, %576 in 0 : vector<8x64xf32>, vector<8x64xf32>, vector<8x64xf32>, vector<8x64xf32>, vector<8x64xf32>, vector<8x64xf32>, vector<8x64xf32>, vector<8x64xf32> -> vector<64x64xf32>
    %578 = arith.mulf %545, %577 : vector<64x64xf32>
    %cst_101 = arith.constant dense<0.000000e+00> : vector<64x64xf32>
    %579 = tpu.matmul %578, %22, %cst_101 {dimension_numbers = #tpu.dot_dimension_numbers<[1], [0], [0], [1], [0, 0, 1, 1], [], []>} : vector<64x64xf32>, vector<64x64xf32>, vector<64x64xf32> -> vector<64x64xf32>
    %cst_102 = arith.constant dense<0xFF800000> : vector<64xf32>
    %580 = vector.multi_reduction <maximumf>, %579, %cst_102 [1] : vector<64x64xf32> to vector<64xf32>
    %581 = vector.shape_cast %580 : vector<64xf32> to vector<64x1xf32>
    %582 = vector.broadcast %581 : vector<64x1xf32> to vector<64x64xf32>
    %583 = arith.subf %579, %582 : vector<64x64xf32>
    %584 = math.exp %583 : vector<64x64xf32>
    %cst_103 = arith.constant 8.000000e+00 : f32
    %585 = vector.broadcast %cst_103 : f32 to vector<64x64xf32>
    %586 = arith.mulf %584, %585 : vector<64x64xf32>
    %cst_104 = arith.constant dense<0.000000e+00> : vector<64xf32>
    %587 = vector.multi_reduction <add>, %584, %cst_104 [1] : vector<64x64xf32> to vector<64xf32>
    %588 = vector.shape_cast %587 : vector<64xf32> to vector<64x1xf32>
    %589 = vector.broadcast %588 : vector<64x1xf32> to vector<64x64xf32>
    %590 = arith.divf %586, %589 : vector<64x64xf32>
    %591 = arith.mulf %590, %545 : vector<64x64xf32>
    %cst_105 = arith.constant dense<0.000000e+00> : vector<8x64xf32>
    %592 = tpu.matmul %21, %591, %cst_105 {dimension_numbers = #tpu.dot_dimension_numbers<[1], [0], [0], [1], [0, 0, 1, 1], [], []>} : vector<8x64xf32>, vector<64x64xf32>, vector<8x64xf32> -> vector<8x64xf32>
    %593 = arith.mulf %592, %592 : vector<8x64xf32>
    %cst_106 = arith.constant dense<0.000000e+00> : vector<8x64xf32>
    %594 = tpu.matmul %593, %22, %cst_106 {dimension_numbers = #tpu.dot_dimension_numbers<[1], [0], [0], [1], [0, 0, 1, 1], [], []>} : vector<8x64xf32>, vector<64x64xf32>, vector<8x64xf32> -> vector<8x64xf32>
    %cst_107 = arith.constant 1.000000e-07 : f32
    %595 = vector.broadcast %cst_107 : f32 to vector<8x64xf32>
    %596 = arith.addf %594, %595 : vector<8x64xf32>
    %597 = math.rsqrt %596 : vector<8x64xf32>
    %598 = arith.mulf %592, %597 : vector<8x64xf32>
    %599 = tpu.concatenate %598, %598, %598, %598, %598, %598, %598, %598 in 0 : vector<8x64xf32>, vector<8x64xf32>, vector<8x64xf32>, vector<8x64xf32>, vector<8x64xf32>, vector<8x64xf32>, vector<8x64xf32>, vector<8x64xf32> -> vector<64x64xf32>
    %600 = arith.mulf %545, %599 : vector<64x64xf32>
    %cst_108 = arith.constant dense<0.000000e+00> : vector<64x64xf32>
    %601 = tpu.matmul %600, %22, %cst_108 {dimension_numbers = #tpu.dot_dimension_numbers<[1], [0], [0], [1], [0, 0, 1, 1], [], []>} : vector<64x64xf32>, vector<64x64xf32>, vector<64x64xf32> -> vector<64x64xf32>
    %cst_109 = arith.constant dense<0xFF800000> : vector<64xf32>
    %602 = vector.multi_reduction <maximumf>, %601, %cst_109 [1] : vector<64x64xf32> to vector<64xf32>
    %603 = vector.shape_cast %602 : vector<64xf32> to vector<64x1xf32>
    %604 = vector.broadcast %603 : vector<64x1xf32> to vector<64x64xf32>
    %605 = arith.subf %601, %604 : vector<64x64xf32>
    %606 = math.exp %605 : vector<64x64xf32>
    %cst_110 = arith.constant 8.000000e+00 : f32
    %607 = vector.broadcast %cst_110 : f32 to vector<64x64xf32>
    %608 = arith.mulf %606, %607 : vector<64x64xf32>
    %cst_111 = arith.constant dense<0.000000e+00> : vector<64xf32>
    %609 = vector.multi_reduction <add>, %606, %cst_111 [1] : vector<64x64xf32> to vector<64xf32>
    %610 = vector.shape_cast %609 : vector<64xf32> to vector<64x1xf32>
    %611 = vector.broadcast %610 : vector<64x1xf32> to vector<64x64xf32>
    %612 = arith.divf %608, %611 : vector<64x64xf32>
    %613 = arith.mulf %612, %545 : vector<64x64xf32>
    %cst_112 = arith.constant dense<0.000000e+00> : vector<8x64xf32>
    %614 = tpu.matmul %21, %613, %cst_112 {dimension_numbers = #tpu.dot_dimension_numbers<[1], [0], [0], [1], [0, 0, 1, 1], [], []>} : vector<8x64xf32>, vector<64x64xf32>, vector<8x64xf32> -> vector<8x64xf32>
    %615 = arith.mulf %614, %614 : vector<8x64xf32>
    %cst_113 = arith.constant dense<0.000000e+00> : vector<8x64xf32>
    %616 = tpu.matmul %615, %22, %cst_113 {dimension_numbers = #tpu.dot_dimension_numbers<[1], [0], [0], [1], [0, 0, 1, 1], [], []>} : vector<8x64xf32>, vector<64x64xf32>, vector<8x64xf32> -> vector<8x64xf32>
    %cst_114 = arith.constant 1.000000e-07 : f32
    %617 = vector.broadcast %cst_114 : f32 to vector<8x64xf32>
    %618 = arith.addf %616, %617 : vector<8x64xf32>
    %619 = math.rsqrt %618 : vector<8x64xf32>
    %620 = arith.mulf %614, %619 : vector<8x64xf32>
    %cst_115 = arith.constant dense<0.000000e+00> : vector<8x64xf32>
    %621 = tpu.matmul %620, %16, %cst_115 {dimension_numbers = #tpu.dot_dimension_numbers<[1], [0], [0], [1], [0, 0, 1, 1], [], []>} : vector<8x64xf32>, vector<64x64xf32>, vector<8x64xf32> -> vector<8x64xf32>
    %622 = vector.broadcast %17 : vector<1x64xf32> to vector<8x64xf32>
    %623 = arith.addf %621, %622 : vector<8x64xf32>
    %cst_116 = arith.constant 0.000000e+00 : f32
    %624 = vector.broadcast %cst_116 : f32 to vector<8x64xf32>
    %625 = arith.maximumf %623, %624 : vector<8x64xf32>
    %626 = arith.mulf %509, %526 : vector<8x64xf32>
    %627 = arith.mulf %509, %529 : vector<8x64xf32>
    %628 = arith.mulf %509, %544 : vector<8x64xf32>
    %629 = arith.mulf %509, %625 : vector<8x64xf32>
    %630 = arith.mulf %526, %529 : vector<8x64xf32>
    %631 = arith.mulf %526, %544 : vector<8x64xf32>
    %632 = arith.mulf %526, %625 : vector<8x64xf32>
    %633 = arith.mulf %529, %544 : vector<8x64xf32>
    %634 = arith.mulf %529, %625 : vector<8x64xf32>
    %635 = arith.mulf %544, %625 : vector<8x64xf32>
    %636 = tpu.concatenate %509, %526, %529, %544, %625, %626, %627, %628, %629, %630, %631, %632, %633, %634, %635 in 1 : vector<8x64xf32>, vector<8x64xf32>, vector<8x64xf32>, vector<8x64xf32>, vector<8x64xf32>, vector<8x64xf32>, vector<8x64xf32>, vector<8x64xf32>, vector<8x64xf32>, vector<8x64xf32>, vector<8x64xf32>, vector<8x64xf32>, vector<8x64xf32>, vector<8x64xf32>, vector<8x64xf32> -> vector<8x960xf32>
    %c0_117 = arith.constant 0 : index
    %c0_118 = arith.constant 0 : index
    %637 = vector.load %arg2[%c0_117, %c0_118] : memref<960x32xf32, #tpu.memory_space<vmem>>, vector<960x32xf32>
    %cst_119 = arith.constant dense<0.000000e+00> : vector<8x32xf32>
    %638 = tpu.matmul %636, %637, %cst_119 {dimension_numbers = #tpu.dot_dimension_numbers<[1], [0], [0], [1], [0, 0, 1, 1], [], []>} : vector<8x960xf32>, vector<960x32xf32>, vector<8x32xf32> -> vector<8x32xf32>
    %639 = vector.broadcast %18 : vector<1x32xf32> to vector<8x32xf32>
    %640 = arith.addf %638, %639 : vector<8x32xf32>
    %cst_120 = arith.constant 0.000000e+00 : f32
    %641 = vector.broadcast %cst_120 : f32 to vector<8x32xf32>
    %642 = arith.maximumf %640, %641 : vector<8x32xf32>
    %cst_121 = arith.constant dense<0.000000e+00> : vector<8x128xf32>
    %643 = tpu.matmul %642, %19, %cst_121 {dimension_numbers = #tpu.dot_dimension_numbers<[1], [0], [0], [1], [0, 0, 1, 1], [], []>} : vector<8x32xf32>, vector<32x128xf32>, vector<8x128xf32> -> vector<8x128xf32>
    %644 = vector.broadcast %20 : vector<1x128xf32> to vector<8x128xf32>
    %645 = arith.addf %643, %644 : vector<8x128xf32>
    %c0_122 = arith.constant 0 : index
    %c0_123 = arith.constant 0 : index
    %646 = vector.load %arg3[%c0_122, %c0_123] : memref<8x128xf32, #tpu.memory_space<vmem>>, vector<8x128xf32>
    tpu.vector_store %arg3[%c0_122, %c0_123], %645 {strides = array<i32>} : memref<8x128xf32, #tpu.memory_space<vmem>>, vector<8x128xf32>,
    return
  }
}

</mosaic_0001>

<llo_original>
// kernel: capsule_rnn_forward.1
$region0: #{capsule_rnn_forward.1}
  #allocation0 [shape = 'u32[]', space=smem, size = 0x4, offset = 0x4, fixed_abs, tag = 'smem constant byte address 0x4 - core index']
  #allocation1 [shape = 'u32[144,128]{1,0:T(1,128)}', space=vmem, size = 0x12000, scoped, tag = 'internal scratch']
  %s0 = inlined_call_operand.vmem [shape: s32[64,1], index: 0, kind: input, shape index: {}]
  %s1 = inlined_call_operand.vmem [shape: f32[656,256], index: 1, kind: input, shape index: {}]
  %s2 = inlined_call_operand.vmem [shape: f32[960,32], index: 2, kind: input, shape index: {}]
  %s3 = inlined_call_operand.vmem [shape: f32[8,128], index: 3, kind: output, shape index: {}]
  %s4 = sld [smem:[#allocation0]]
  $region22: #{capsule_rnn_forward.1} parent=0
    _
  %s6 = ssub.s32 1, %s4
  %s7 = scalar_select 0, %s6, %s4
  // Predicated region
  $region2: #{capsule_rnn_forward.1} parent=0 // pred_check
    _
  $region3: #{capsule_rnn_forward.1} parent=0 // pred_check_branch
    %9 = sbr.rel (0) target = $region5
  $region4: #{capsule_rnn_forward.1} parent=0 // pred_region
    _
  $region5: #{capsule_rnn_forward.1} parent=0 // pred_fallthru
    _
  // Predicated region
  $region6: #{capsule_rnn_forward.1} parent=0 // pred_check
    _
  $region7: #{capsule_rnn_forward.1} parent=0 // pred_check_branch
    %11 = sbr.rel (0) target = $region9
  $region8: #{capsule_rnn_forward.1} parent=0 // pred_region
    _
  $region9: #{capsule_rnn_forward.1} parent=0 // pred_fallthru
    _
  // Predicated region
  $region10: #{capsule_rnn_forward.1} parent=0 // pred_check
    _
  $region11: #{capsule_rnn_forward.1} parent=0 // pred_check_branch
    %13 = sbr.rel (0) target = $region13
  $region12: #{capsule_rnn_forward.1} parent=0 // pred_region
    _
  $region13: #{capsule_rnn_forward.1} parent=0 // pred_fallthru
    _
  %v14 = vld [vmem:[%s0] sm:$0xff]
  %v15 = vld [vmem:[%s0 + $0x8] sm:$0xff]
  %v16 = vld [vmem:[%s0 + $0x10] sm:$0xff]
  %v17 = vld [vmem:[%s0 + $0x18] sm:$0xff]
  %v18 = vld [vmem:[%s0 + $0x20] sm:$0xff]
  %v19 = vld [vmem:[%s0 + $0x28] sm:$0xff]
  %v20 = vld [vmem:[%s0 + $0x30] sm:$0xff]
  %v21 = vld [vmem:[%s0 + $0x38] sm:$0xff]
  %vm22 = vcmp.ne.s32.totalorder %v14, 0
  %vm23 = vcmp.ne.s32.totalorder %v15, 0
  %vm24 = vcmp.ne.s32.totalorder %v16, 0
  %vm25 = vcmp.ne.s32.totalorder %v17, 0
  %vm26 = vcmp.ne.s32.totalorder %v18, 0
  %vm27 = vcmp.ne.s32.totalorder %v19, 0
  %vm28 = vcmp.ne.s32.totalorder %v20, 0
  %vm29 = vcmp.ne.s32.totalorder %v21, 0
  %v30 = vsel %vm22, 1, 0
  %v31 = vsel %vm23, 1, 0
  %v32 = vsel %vm24, 1, 0
  %v33 = vsel %vm25, 1, 0
  %v34 = vsel %vm26, 1, 0
  %v35 = vsel %vm27, 1, 0
  %v36 = vsel %vm28, 1, 0
  %v37 = vsel %vm29, 1, 0
  %v38 = vcvt.s32.f32 %v30
  %v39 = vcvt.s32.f32 %v31
  %v40 = vcvt.s32.f32 %v32
  %v41 = vcvt.s32.f32 %v33
  %v42 = vcvt.s32.f32 %v34
  %v43 = vcvt.s32.f32 %v35
  %v44 = vcvt.s32.f32 %v36
  %v45 = vcvt.s32.f32 %v37
  %v46 = vld [vmem:[%s1] sm:$0xff]
  %v47 = vld [vmem:[%s1 + $0x10] sm:$0xff]
  %v48 = vld [vmem:[%s1 + $0x20] sm:$0xff]
  %v49 = vld [vmem:[%s1 + $0x30] sm:$0xff]
  %v50 = vld [vmem:[%s1 + $0x40] sm:$0xff]
  %v51 = vld [vmem:[%s1 + $0x50] sm:$0xff]
  %v52 = vld [vmem:[%s1 + $0x60] sm:$0x3]
  %v53 = vld [vmem:[%s1 + $0x70] sm:$0xff]
  %v54 = vld [vmem:[%s1 + $0x78] sm:$0xff]
  %v55 = vld [vmem:[%s1 + $0x80] sm:$0xff]
  %v56 = vld [vmem:[%s1 + $0x88] sm:$0xff]
  %v57 = vld [vmem:[%s1 + $0x90] sm:$0xff]
  %v58 = vld [vmem:[%s1 + $0x98] sm:$0xff]
  %v59 = vld [vmem:[%s1 + $0xa0] sm:$0xff]
  %v60 = vld [vmem:[%s1 + $0xa8] sm:$0xff]
  %v61 = vld [vmem:[%s1 + $0xb0] sm:$0xff]
  %v62 = vld [vmem:[%s1 + $0xb8] sm:$0xff]
  %v63 = vld [vmem:[%s1 + $0xc0] sm:$0xff]
  %v64 = vld [vmem:[%s1 + $0xc8] sm:$0xff]
  %v65 = vld [vmem:[%s1 + $0xd0] sm:$0xff]
  %v66 = vld [vmem:[%s1 + $0xd8] sm:$0xff]
  %v67 = vld [vmem:[%s1 + $0xe0] sm:$0xff]
  %v68 = vld [vmem:[%s1 + $0xe8] sm:$0xff]
  %v69 = vld [vmem:[%s1 + $0xf0] sm:$0xff]
  %v70 = vld [vmem:[%s1 + $0xf8] sm:$0xff]
  %v71 = vld [vmem:[%s1 + $0x100] sm:$0xff]
  %v72 = vld [vmem:[%s1 + $0x108] sm:$0xff]
  %v73 = vld [vmem:[%s1 + $0x110] sm:$0xff]
  %v74 = vld [vmem:[%s1 + $0x118] sm:$0xff]
  %v75 = vld [vmem:[%s1 + $0x120] sm:$0xff]
  %v76 = vld [vmem:[%s1 + $0x128] sm:$0xff]
  %s77 = scalar_lea.vmem %s1, 304
  %v78 = vld [vmem:[%s77] ss:$8 sm:$0x3]
  %v79 = vld [vmem:[%s1 + $0x140] sm:$0xff]
  %v80 = vld [vmem:[%s1 + $0x148] sm:$0xff]
  %v81 = vld [vmem:[%s1 + $0x150] sm:$0xff]
  %v82 = vld [vmem:[%s1 + $0x158] sm:$0xff]
  %v83 = vld [vmem:[%s1 + $0x160] sm:$0xff]
  %v84 = vld [vmem:[%s1 + $0x168] sm:$0xff]
  %v85 = vld [vmem:[%s1 + $0x170] sm:$0xff]
  %v86 = vld [vmem:[%s1 + $0x178] sm:$0xff]
  %v87 = vld [vmem:[%s1 + $0x180] sm:$0xff]
  %v88 = vld [vmem:[%s1 + $0x188] sm:$0xff]
  %v89 = vld [vmem:[%s1 + $0x190] sm:$0xff]
  %v90 = vld [vmem:[%s1 + $0x198] sm:$0xff]
  %v91 = vld [vmem:[%s1 + $0x1a0] sm:$0xff]
  %v92 = vld [vmem:[%s1 + $0x1a8] sm:$0xff]
  %v93 = vld [vmem:[%s1 + $0x1b0] sm:$0xff]
  %v94 = vld [vmem:[%s1 + $0x1b8] sm:$0xff]
  %v95 = vld [vmem:[%s1 + $0x1c0] sm:$0xff]
  %v96 = vld [vmem:[%s1 + $0x1c8] sm:$0xff]
  %v97 = vld [vmem:[%s1 + $0x1d0] sm:$0xff]
  %v98 = vld [vmem:[%s1 + $0x1d8] sm:$0xff]
  %v99 = vld [vmem:[%s1 + $0x1e0] sm:$0xff]
  %v100 = vld [vmem:[%s1 + $0x1e8] sm:$0xff]
  %v101 = vld [vmem:[%s1 + $0x1f0] sm:$0xff]
  %v102 = vld [vmem:[%s1 + $0x1f8] sm:$0xff]
  %v103 = vld [vmem:[%s1 + $0x200] sm:$0xff]
  %v104 = vld [vmem:[%s1 + $0x208] sm:$0xff]
  %v105 = vld [vmem:[%s1 + $0x210] sm:$0xff]
  %v106 = vld [vmem:[%s1 + $0x218] sm:$0xff]
  %v107 = vld [vmem:[%s1 + $0x220] sm:$0xff]
  %v108 = vld [vmem:[%s1 + $0x228] sm:$0xff]
  %v109 = vld [vmem:[%s1 + $0x230] sm:$0xff]
  %v110 = vld [vmem:[%s1 + $0x238] sm:$0xff]
  %s111 = scalar_lea.vmem %s1, 576
  %v112 = vld [vmem:[%s111] ss:$8 sm:$0x3]
  %s113 = scalar_lea.vmem %s1, 592
  %v114 = vld [vmem:[%s113] ss:$8 sm:$0x3]
  %v115 = vld [vmem:[%s1 + $0x260] sm:$0x3]
  %v116 = vld [vmem:[%s1 + $0x270] sm:$0xff]
  %v117 = vld [vmem:[%s1 + $0x280] sm:$0xff]
  %v118 = vld [vmem:[%s1 + $0x290] sm:$0xff]
  %v119 = vld [vmem:[%s1 + $0x2a0] sm:$0xff]
  %v120 = vld [vmem:[%s1 + $0x2b0] sm:$0xff]
  %v121 = vld [vmem:[%s1 + $0x2c0] sm:$0xff]
  %v122 = vld [vmem:[%s1 + $0x2d0] sm:$0xff]
  %v123 = vld [vmem:[%s1 + $0x2e0] sm:$0xff]
  %v124 = vld [vmem:[%s1 + $0x2f0] sm:$0xff]
  %v125 = vld [vmem:[%s1 + $0x300] sm:$0xff]
  %v126 = vld [vmem:[%s1 + $0x310] sm:$0xff]
  %v127 = vld [vmem:[%s1 + $0x320] sm:$0xff]
  %v128 = vld [vmem:[%s1 + $0x330] sm:$0xff]
  %v129 = vld [vmem:[%s1 + $0x340] sm:$0xff]
  %v130 = vld [vmem:[%s1 + $0x350] sm:$0xff]
  %v131 = vld [vmem:[%s1 + $0x360] sm:$0xff]
  %v132 = vld [vmem:[%s1 + $0x370] sm:$0xff]
  %v133 = vld [vmem:[%s1 + $0x380] sm:$0xff]
  %v134 = vld [vmem:[%s1 + $0x390] sm:$0xff]
  %v135 = vld [vmem:[%s1 + $0x3a0] sm:$0xff]
  %v136 = vld [vmem:[%s1 + $0x3b0] sm:$0xff]
  %v137 = vld [vmem:[%s1 + $0x3c0] sm:$0xff]
  %v138 = vld [vmem:[%s1 + $0x3d0] sm:$0xff]
  %v139 = vld [vmem:[%s1 + $0x3e0] sm:$0xff]
  %v140 = vld [vmem:[%s1 + $0x3f0] ss:$0 sm:$0xff]
  %v141 = vld [vmem:[%s1 + $0x400] ss:$0 sm:$0xff]
  %v142 = vld [vmem:[%s1 + $0x410] sm:$0xff]
  %v143 = vld [vmem:[%s1 + $0x420] sm:$0xff]
  %v144 = vld [vmem:[%s1 + $0x430] sm:$0xff]
  %v145 = vld [vmem:[%s1 + $0x440] sm:$0xff]
  %v146 = vld [vmem:[%s1 + $0x450] ss:$0 sm:$0xff]
  %v147 = vld [vmem:[%s1 + $0x460] sm:$0xff]
  %v148 = vld [vmem:[%s1 + $0x470] sm:$0xff]
  %v149 = vld [vmem:[%s1 + $0x480] sm:$0xff]
  %v150 = vld [vmem:[%s1 + $0x490] sm:$0xff]
  %v151 = vld [vmem:[%s1 + $0x4a0] sm:$0xff]
  %v152 = vld [vmem:[%s1 + $0x4b0] sm:$0xff]
  %v153 = vld [vmem:[%s1 + $0x4c0] sm:$0xff]
  %v154 = vld [vmem:[%s1 + $0x4d0] sm:$0xff]
  %v155 = vld [vmem:[%s1 + $0x4e0] sm:$0xff]
  %s156 = scalar_lea.vmem %s1, 1264
  %v157 = vld [vmem:[%s156] ss:$8 sm:$0x3]
  %vm158 = vcmp.gt.f32.partialorder %v157, 0.5
  %s159 = scalar_lea.vmem %s1, 1280
  %v160 = vld [vmem:[%s159] ss:$8 sm:$0x3]
  %vm161 = vcmp.gt.f32.partialorder %v160, 0.5
  %v162 = vld [vmem:[%s1 + $0x510] ss:$0 sm:$0xff]
  %vm163 = vcmp.gt.f32.partialorder %v162, 0.5
  %v164 = vlaneseq
  %v165 = vand.u32 %v164, 127
  %166 = vset.pattern.permute.xlu0 0
  %167 = vperm.xlu0 %166, %v14
  %v168 = vpop.permute.xlu0 %167
  %169 = vset.pattern.permute.xlu0 0
  %170 = vperm.xlu0 %169, %v15
  %v171 = vpop.permute.xlu0 %170
  %172 = vset.pattern.permute.xlu0 0
  %173 = vperm.xlu0 %172, %v16
  %v174 = vpop.permute.xlu0 %173
  %175 = vset.pattern.permute.xlu0 0
  %176 = vperm.xlu0 %175, %v17
  %v177 = vpop.permute.xlu0 %176
  %178 = vset.pattern.permute.xlu0 0
  %179 = vperm.xlu0 %178, %v18
  %v180 = vpop.permute.xlu0 %179
  %181 = vset.pattern.permute.xlu0 0
  %182 = vperm.xlu0 %181, %v19
  %v183 = vpop.permute.xlu0 %182
  %184 = vset.pattern.permute.xlu0 0
  %185 = vperm.xlu0 %184, %v20
  %v186 = vpop.permute.xlu0 %185
  %187 = vset.pattern.permute.xlu0 0
  %188 = vperm.xlu0 %187, %v21
  %v189 = vpop.permute.xlu0 %188
  %vm190 = vcmp.eq.s32.totalorder %v165, %v168
  %vm191 = vcmp.eq.s32.totalorder %v165, %v171
  %vm192 = vcmp.eq.s32.totalorder %v165, %v174
  %vm193 = vcmp.eq.s32.totalorder %v165, %v177
  %vm194 = vcmp.eq.s32.totalorder %v165, %v180
  %vm195 = vcmp.eq.s32.totalorder %v165, %v183
  %vm196 = vcmp.eq.s32.totalorder %v165, %v186
  %vm197 = vcmp.eq.s32.totalorder %v165, %v189
  %v198 = vsel %vm190, 1, 0
  %v199 = vsel %vm191, 1, 0
  %v200 = vsel %vm192, 1, 0
  %v201 = vsel %vm193, 1, 0
  %v202 = vsel %vm194, 1, 0
  %v203 = vsel %vm195, 1, 0
  %v204 = vsel %vm196, 1, 0
  %v205 = vsel %vm197, 1, 0
  %v206 = vcvt.s32.f32 %v198
  %v207 = vcvt.s32.f32 %v199
  %v208 = vcvt.s32.f32 %v200
  %v209 = vcvt.s32.f32 %v201
  %v210 = vcvt.s32.f32 %v202
  %v211 = vcvt.s32.f32 %v203
  %v212 = vcvt.s32.f32 %v204
  %v213 = vcvt.s32.f32 %v205
  %vm214 = vcmask 408576
  %v216 = vsel %vm214, %v206, 0
  %v219 = vsel %vm214, %v207, 0
  %v222 = vsel %vm214, %v208, 0
  %v225 = vsel %vm214, %v209, 0
  %v228 = vsel %vm214, %v210, 0
  %v231 = vsel %vm214, %v211, 0
  %v234 = vsel %vm214, %v212, 0
  %v237 = vsel %vm214, %v213, 0
  %vm239 = vcmask 1041408
  %v241 = vsel %vm239, %v52, 0
  %243 = vmatprep.subr.mxu0 0.0
  %244 = vmatpush1.msra.mxu0 %v46
  %245 = vmatprep.subr.mxu0 0.0
  %246 = vmatpush1.msra.mxu0 %v47
  %247 = vmatprep.subr.mxu0 0.0
  %248 = vmatpush1.msra.mxu0 %v48
  %249 = vmatprep.subr.mxu0 0.0
  %250 = vmatpush1.msra.mxu0 %v49
  %251 = vmatprep.subr.mxu0 0.0
  %252 = vmatpush1.msra.mxu0 %v50
  %253 = vmatprep.subr.mxu0 0.0
  %254 = vmatpush1.msra.mxu0 %v51
  %255 = vmatprep.subr.mxu0 0.0
  %256 = vmatpush1.msra.mxu0 %v241
  %257 = vmatprep.subr.mxu0 0.0
  %258 = vmatpush1.msra.mxu0 0.0
  %259 = vmatprep.subr.mxu0 0.0
  %260 = vmatpush1.msra.mxu0 0.0
  %261 = vmatprep.subr.mxu0 0.0
  %262 = vmatpush1.msra.mxu0 0.0
  %263 = vmatprep.subr.mxu0 0.0
  %264 = vmatpush1.msra.mxu0 0.0
  %265 = vmatprep.subr.mxu0 0.0
  %266 = vmatpush1.msra.mxu0 0.0
  %267 = vmatprep.subr.mxu0 0.0
  %268 = vmatpush1.msra.mxu0 0.0
  %269 = vmatprep.subr.mxu0 0.0
  %270 = vmatpush1.msra.mxu0 0.0
  %271 = vmatprep.subr.mxu0 0.0
  %272 = vmatpush1.msra.mxu0 0.0
  %273 = vmatprep.subr.mxu0 0.0
  %274 = vmatpush1.msra.mxu0 0.0
  %275 = vmatprep.subr.mxu0 0.0
  %276 = vmatpush1.msra.mxu0 0.0
  %277 = vmatprep.subr.mxu0 0.0
  %278 = vmatpush1.msra.mxu0 0.0
  %279 = vmatprep.subr.mxu0 0.0
  %280 = vmatpush1.msra.mxu0 0.0
  %281 = vmatprep.subr.mxu0 0.0
  %282 = vmatpush1.msra.mxu0 0.0
  %283 = vmatprep.subr.mxu0 0.0
  %284 = vmatpush1.msra.mxu0 0.0
  %285 = vmatprep.subr.mxu0 0.0
  %286 = vmatpush1.msra.mxu0 0.0
  %287 = vmatprep.subr.mxu0 0.0
  %288 = vmatpush1.msra.mxu0 0.0
  %289 = vmatprep.subr.mxu0 0.0
  %290 = vmatpush1.msra.mxu0 0.0
  %291 = vmatprep.subr.mxu0 0.0
  %292 = vmatpush1.msra.mxu0 0.0
  %293 = vmatprep.subr.mxu0 0.0
  %294 = vmatpush1.msra.mxu0 0.0
  %295 = vmatprep.subr.mxu0 0.0
  %296 = vmatpush1.msra.mxu0 0.0
  %297 = vmatprep.subr.mxu0 0.0
  %298 = vmatpush1.msra.mxu0 0.0
  %299 = vmatprep.subr.mxu0 0.0
  %300 = vmatpush1.msra.mxu0 0.0
  %301 = vmatprep.subr.mxu0 0.0
  %302 = vmatpush1.msra.mxu0 0.0
  %303 = vmatprep.subr.mxu0 0.0
  %304 = vmatpush1.msra.mxu0 0.0
  %305 = vmatprep.subr.mxu0 0.0
  %306 = vmatpush1.msra.mxu0 0.0
  %307 = vmatprep.mubr.f32.mxu0 0.0
  %308 = vmatmul.mubr.f32.gmra.mrb[0].mxu0 %v216
  %v309 = vpop.f32.mrb[0].mxu0
  %v310 = vadd.f32 0.0, %v309
  %v311 = vpop.f32.mrb[0].mxu0
  %312 = vmatprep.mubr.f32.mxu0 0.0
  %313 = vmatmul.mubr.f32.gmra.mrb[0].mxu0 %v219
  %v314 = vpop.f32.mrb[0].mxu0
  %v315 = vadd.f32 0.0, %v314
  %v316 = vpop.f32.mrb[0].mxu0
  %317 = vmatprep.mubr.f32.mxu0 0.0
  %318 = vmatmul.mubr.f32.gmra.mrb[0].mxu0 %v222
  %v319 = vpop.f32.mrb[0].mxu0
  %v320 = vadd.f32 0.0, %v319
  %v321 = vpop.f32.mrb[0].mxu0
  %322 = vmatprep.mubr.f32.mxu0 0.0
  %323 = vmatmul.mubr.f32.gmra.mrb[0].mxu0 %v225
  %v324 = vpop.f32.mrb[0].mxu0
  %v325 = vadd.f32 0.0, %v324
  %v326 = vpop.f32.mrb[0].mxu0
  %327 = vmatprep.mubr.f32.mxu0 0.0
  %328 = vmatmul.mubr.f32.gmra.mrb[0].mxu0 %v228
  %v329 = vpop.f32.mrb[0].mxu0
  %v330 = vadd.f32 0.0, %v329
  %v331 = vpop.f32.mrb[0].mxu0
  %332 = vmatprep.mubr.f32.mxu0 0.0
  %333 = vmatmul.mubr.f32.gmra.mrb[0].mxu0 %v231
  %v334 = vpop.f32.mrb[0].mxu0
  %v335 = vadd.f32 0.0, %v334
  %v336 = vpop.f32.mrb[0].mxu0
  %337 = vmatprep.mubr.f32.mxu0 0.0
  %338 = vmatmul.mubr.f32.gmra.mrb[0].mxu0 %v234
  %v339 = vpop.f32.mrb[0].mxu0
  %v340 = vadd.f32 0.0, %v339
  %v341 = vpop.f32.mrb[0].mxu0
  %342 = vmatprep.mubr.f32.mxu0 0.0
  %343 = vmatmul.mubr.f32.gmra.mrb[0].mxu0 %v237
  %v344 = vpop.f32.mrb[0].mxu0
  %v345 = vadd.f32 0.0, %v344
  %v346 = vpop.f32.mrb[0].mxu0
  %347 = vdwg.mxu0
  %v349 = vlaneseq
  %v350 = vshrl.u32 %v349, 7
  %v351 = vsub.s32 0, %v350
  %v352 = vrot.slane %v78, %v351
  %v353 = vlaneseq
  %v354 = vshrl.u32 %v353, 7
  %v355 = vsub.s32 1, %v354
  %v356 = vrot.slane %v78, %v355
  %vm359 = vcmask 261120
  %v361 = vsel %vm359, %v310, 0
  %v364 = vsel %vm359, %v315, 0
  %v367 = vsel %vm359, %v320, 0
  %v370 = vsel %vm359, %v325, 0
  %v373 = vsel %vm359, %v330, 0
  %v376 = vsel %vm359, %v335, 0
  %v379 = vsel %vm359, %v340, 0
  %v382 = vsel %vm359, %v345, 0
  %384 = vmatprep.subr.mxu0 %v54
  %385 = vmatpush1.msra.mxu0 %v53
  %386 = vmatprep.subr.mxu0 %v56
  %387 = vmatpush1.msra.mxu0 %v55
  %388 = vmatprep.subr.mxu0 %v58
  %389 = vmatpush1.msra.mxu0 %v57
  %390 = vmatprep.subr.mxu0 %v60
  %391 = vmatpush1.msra.mxu0 %v59
  %392 = vmatprep.subr.mxu0 0.0
  %393 = vmatpush1.msra.mxu0 0.0
  %394 = vmatprep.subr.mxu0 0.0
  %395 = vmatpush1.msra.mxu0 0.0
  %396 = vmatprep.subr.mxu0 0.0
  %397 = vmatpush1.msra.mxu0 0.0
  %398 = vmatprep.subr.mxu0 0.0
  %399 = vmatpush1.msra.mxu0 0.0
  %400 = vmatprep.subr.mxu0 0.0
  %401 = vmatpush1.msra.mxu0 0.0
  %402 = vmatprep.subr.mxu0 0.0
  %403 = vmatpush1.msra.mxu0 0.0
  %404 = vmatprep.subr.mxu0 0.0
  %405 = vmatpush1.msra.mxu0 0.0
  %406 = vmatprep.subr.mxu0 0.0
  %407 = vmatpush1.msra.mxu0 0.0
  %408 = vmatprep.subr.mxu0 0.0
  %409 = vmatpush1.msra.mxu0 0.0
  %410 = vmatprep.subr.mxu0 0.0
  %411 = vmatpush1.msra.mxu0 0.0
  %412 = vmatprep.subr.mxu0 0.0
  %413 = vmatpush1.msra.mxu0 0.0
  %414 = vmatprep.subr.mxu0 0.0
  %415 = vmatpush1.msra.mxu0 0.0
  %416 = vmatprep.subr.mxu0 0.0
  %417 = vmatpush1.msra.mxu0 0.0
  %418 = vmatprep.subr.mxu0 0.0
  %419 = vmatpush1.msra.mxu0 0.0
  %420 = vmatprep.subr.mxu0 0.0
  %421 = vmatpush1.msra.mxu0 0.0
  %422 = vmatprep.subr.mxu0 0.0
  %423 = vmatpush1.msra.mxu0 0.0
  %424 = vmatprep.subr.mxu0 0.0
  %425 = vmatpush1.msra.mxu0 0.0
  %426 = vmatprep.subr.mxu0 0.0
  %427 = vmatpush1.msra.mxu0 0.0
  %428 = vmatprep.subr.mxu0 0.0
  %429 = vmatpush1.msra.mxu0 0.0
  %430 = vmatprep.subr.mxu0 0.0
  %431 = vmatpush1.msra.mxu0 0.0
  %432 = vmatprep.subr.mxu0 0.0
  %433 = vmatpush1.msra.mxu0 0.0
  %434 = vmatprep.subr.mxu0 0.0
  %435 = vmatpush1.msra.mxu0 0.0
  %436 = vmatprep.subr.mxu0 0.0
  %437 = vmatpush1.msra.mxu0 0.0
  %438 = vmatprep.subr.mxu0 0.0
  %439 = vmatpush1.msra.mxu0 0.0
  %440 = vmatprep.subr.mxu0 0.0
  %441 = vmatpush1.msra.mxu0 0.0
  %442 = vmatprep.subr.mxu0 0.0
  %443 = vmatpush1.msra.mxu0 0.0
  %444 = vmatprep.subr.mxu0 0.0
  %445 = vmatpush1.msra.mxu0 0.0
  %446 = vmatprep.subr.mxu0 0.0
  %447 = vmatpush1.msra.mxu0 0.0
  %448 = vmatprep.mubr.f32.mxu0 0.0
  %449 = vmatmul.mubr.f32.gmra.mrb[0].mxu0 %v361
  %v450 = vpop.f32.mrb[0].mxu0
  %v451 = vadd.f32 %v352, %v450
  %v452 = vpop.f32.mrb[0].mxu0
  %v453 = vadd.f32 %v356, %v452
  %454 = vmatprep.mubr.f32.mxu0 0.0
  %455 = vmatmul.mubr.f32.gmra.mrb[0].mxu0 %v364
  %v456 = vpop.f32.mrb[0].mxu0
  %v457 = vadd.f32 %v352, %v456
  %v458 = vpop.f32.mrb[0].mxu0
  %v459 = vadd.f32 %v356, %v458
  %460 = vmatprep.mubr.f32.mxu0 0.0
  %461 = vmatmul.mubr.f32.gmra.mrb[0].mxu0 %v367
  %v462 = vpop.f32.mrb[0].mxu0
  %v463 = vadd.f32 %v352, %v462
  %v464 = vpop.f32.mrb[0].mxu0
  %v465 = vadd.f32 %v356, %v464
  %466 = vmatprep.mubr.f32.mxu0 0.0
  %467 = vmatmul.mubr.f32.gmra.mrb[0].mxu0 %v370
  %v468 = vpop.f32.mrb[0].mxu0
  %v469 = vadd.f32 %v352, %v468
  %v470 = vpop.f32.mrb[0].mxu0
  %v471 = vadd.f32 %v356, %v470
  %472 = vmatprep.mubr.f32.mxu0 0.0
  %473 = vmatmul.mubr.f32.gmra.mrb[0].mxu0 %v373
  %v474 = vpop.f32.mrb[0].mxu0
  %v475 = vadd.f32 %v352, %v474
  %v476 = vpop.f32.mrb[0].mxu0
  %v477 = vadd.f32 %v356, %v476
  %478 = vmatprep.mubr.f32.mxu0 0.0
  %479 = vmatmul.mubr.f32.gmra.mrb[0].mxu0 %v376
  %v480 = vpop.f32.mrb[0].mxu0
  %v481 = vadd.f32 %v352, %v480
  %v482 = vpop.f32.mrb[0].mxu0
  %v483 = vadd.f32 %v356, %v482
  %484 = vmatprep.mubr.f32.mxu0 0.0
  %485 = vmatmul.mubr.f32.gmra.mrb[0].mxu0 %v379
  %v486 = vpop.f32.mrb[0].mxu0
  %v487 = vadd.f32 %v352, %v486
  %v488 = vpop.f32.mrb[0].mxu0
  %v489 = vadd.f32 %v356, %v488
  %490 = vmatprep.mubr.f32.mxu0 0.0
  %491 = vmatmul.mubr.f32.gmra.mrb[0].mxu0 %v382
  %v492 = vpop.f32.mrb[0].mxu0
  %v493 = vadd.f32 %v352, %v492
  %v494 = vpop.f32.mrb[0].mxu0
  %v495 = vadd.f32 %v356, %v494
  %496 = vdwg.mxu0
  %v497 = vsel %vm158, 1, 0
  %v498 = vlaneseq
  %v499 = vshrl.u32 %v498, 7
  %v500 = vsub.s32 0, %v499
  %v501 = vrot.slane %v497, %v500
  %v502 = vlaneseq
  %v503 = vshrl.u32 %v502, 7
  %v504 = vsub.s32 1, %v503
  %v505 = vrot.slane %v497, %v504
  %vm506 = vcmp.eq.s32.totalorder %v501, 1
  %vm507 = vcmp.eq.s32.totalorder %v505, 1
  %v508 = vsel %vm506, %v451, %v493
  %v509 = vsel %vm507, %v453, %v495
  %v510 = vsel %vm506, %v457, %v487
  %v511 = vsel %vm507, %v459, %v489
  %v512 = vsel %vm506, %v463, %v481
  %v513 = vsel %vm507, %v465, %v483
  %v514 = vsel %vm506, %v469, %v475
  %v515 = vsel %vm507, %v471, %v477
  %v516 = vsel %vm506, %v475, %v469
  %v517 = vsel %vm507, %v477, %v471
  %v518 = vsel %vm506, %v481, %v463
  %v519 = vsel %vm507, %v483, %v465
  %v520 = vsel %vm506, %v487, %v457
  %v521 = vsel %vm507, %v489, %v459
  %v522 = vsel %vm506, %v493, %v451
  %v523 = vsel %vm507, %v495, %v453
  %vm524 = vcmask 523264
  %v526 = vsel %vm524, 0.0, 0
  %528 = vmatprep.subr.mxu0 %v62
  %529 = vmatpush1.msra.mxu0 %v61
  %530 = vmatprep.subr.mxu0 %v64
  %531 = vmatpush1.msra.mxu0 %v63
  %532 = vmatprep.subr.mxu0 %v66
  %533 = vmatpush1.msra.mxu0 %v65
  %534 = vmatprep.subr.mxu0 %v68
  %535 = vmatpush1.msra.mxu0 %v67
  %536 = vmatprep.subr.mxu0 %v70
  %537 = vmatpush1.msra.mxu0 %v69
  %538 = vmatprep.subr.mxu0 %v72
  %539 = vmatpush1.msra.mxu0 %v71
  %540 = vmatprep.subr.mxu0 %v74
  %541 = vmatpush1.msra.mxu0 %v73
  %542 = vmatprep.subr.mxu0 %v76
  %543 = vmatpush1.msra.mxu0 %v75
  %544 = vmatprep.subr.mxu0 0.0
  %545 = vmatpush1.msra.mxu0 0.0
  %546 = vmatprep.subr.mxu0 0.0
  %547 = vmatpush1.msra.mxu0 0.0
  %548 = vmatprep.subr.mxu0 0.0
  %549 = vmatpush1.msra.mxu0 0.0
  %550 = vmatprep.subr.mxu0 0.0
  %551 = vmatpush1.msra.mxu0 0.0
  %552 = vmatprep.subr.mxu0 0.0
  %553 = vmatpush1.msra.mxu0 0.0
  %554 = vmatprep.subr.mxu0 0.0
  %555 = vmatpush1.msra.mxu0 0.0
  %556 = vmatprep.subr.mxu0 0.0
  %557 = vmatpush1.msra.mxu0 0.0
  %558 = vmatprep.subr.mxu0 0.0
  %559 = vmatpush1.msra.mxu0 0.0
  %560 = vmatprep.subr.mxu0 0.0
  %561 = vmatpush1.msra.mxu0 0.0
  %562 = vmatprep.subr.mxu0 0.0
  %563 = vmatpush1.msra.mxu0 0.0
  %564 = vmatprep.subr.mxu0 0.0
  %565 = vmatpush1.msra.mxu0 0.0
  %566 = vmatprep.subr.mxu0 0.0
  %567 = vmatpush1.msra.mxu0 0.0
  %568 = vmatprep.subr.mxu0 0.0
  %569 = vmatpush1.msra.mxu0 0.0
  %570 = vmatprep.subr.mxu0 0.0
  %571 = vmatpush1.msra.mxu0 0.0
  %572 = vmatprep.subr.mxu0 0.0
  %573 = vmatpush1.msra.mxu0 0.0
  %574 = vmatprep.subr.mxu0 0.0
  %575 = vmatpush1.msra.mxu0 0.0
  %576 = vmatprep.subr.mxu0 0.0
  %577 = vmatpush1.msra.mxu0 0.0
  %578 = vmatprep.subr.mxu0 0.0
  %579 = vmatpush1.msra.mxu0 0.0
  %580 = vmatprep.subr.mxu0 0.0
  %581 = vmatpush1.msra.mxu0 0.0
  %582 = vmatprep.subr.mxu0 0.0
  %583 = vmatpush1.msra.mxu0 0.0
  %584 = vmatprep.subr.mxu0 0.0
  %585 = vmatpush1.msra.mxu0 0.0
  %586 = vmatprep.subr.mxu0 0.0
  %587 = vmatpush1.msra.mxu0 0.0
  %588 = vmatprep.subr.mxu0 0.0
  %589 = vmatpush1.msra.mxu0 0.0
  %590 = vmatprep.subr.mxu0 0.0
  %591 = vmatpush1.msra.mxu0 0.0
  %592 = vmatprep.mubr.f32.mxu0 0.0
  %593 = vmatmul.mubr.f32.gmra.mrb[0].mxu0 %v526
  %v594 = vpop.f32.mrb[0].mxu0
  %v595 = vadd.f32 0.0, %v594
  %v596 = vpop.f32.mrb[0].mxu0
  %v597 = vadd.f32 0.0, %v596
  %598 = vdwg.mxu0
  %v599 = vadd.f32 %v508, %v595
  %v600 = vadd.f32 %v509, %v597
  %v601 = vxor.u32 %v599, 2147483648
  %v602 = vmul.f32 %v601, 1.442695
  %v603 = vpow.pop %v602
  %v604 = vadd.f32 %v603, 1.0
  %v605 = vrcp.pop %v604
  %v606 = vmul.f32 1.0, %v605
  %v607 = vtanh.pop %v600
  %v608 = vxor.u32 %v600, 2147483648
  %v609 = vmul.f32 %v608, 1.442695
  %v610 = vpow.pop %v609
  %v611 = vadd.f32 %v610, 1.0
  %v612 = vrcp.pop %v611
  %v613 = vmul.f32 1.0, %v612
  %v614 = vmul.f32 %v606, 0.0
  %v615 = vmul.f32 %v606, %v607
  %617 = vrot.lane.b32.xlu0 %v615, 64
  %v618 = vpop.permute.xlu0 %617
  %v620 = vadd.f32 %v614, %v618
  %v621 = vtanh.pop %v620
  %v622 = vmul.f32 %v613, %v621
  %624 = vrot.lane.b32.xlu0 %v622, 64
  %v625 = vpop.permute.xlu0 %624
  %v626 = vsel %vm524, %v625, 0
  %628 = vmatprep.subr.mxu0 %v62
  %629 = vmatpush1.msra.mxu0 %v61
  %630 = vmatprep.subr.mxu0 %v64
  %631 = vmatpush1.msra.mxu0 %v63
  %632 = vmatprep.subr.mxu0 %v66
  %633 = vmatpush1.msra.mxu0 %v65
  %634 = vmatprep.subr.mxu0 %v68
  %635 = vmatpush1.msra.mxu0 %v67
  %636 = vmatprep.subr.mxu0 %v70
  %637 = vmatpush1.msra.mxu0 %v69
  %638 = vmatprep.subr.mxu0 %v72
  %639 = vmatpush1.msra.mxu0 %v71
  %640 = vmatprep.subr.mxu0 %v74
  %641 = vmatpush1.msra.mxu0 %v73
  %642 = vmatprep.subr.mxu0 %v76
  %643 = vmatpush1.msra.mxu0 %v75
  %644 = vmatprep.subr.mxu0 0.0
  %645 = vmatpush1.msra.mxu0 0.0
  %646 = vmatprep.subr.mxu0 0.0
  %647 = vmatpush1.msra.mxu0 0.0
  %648 = vmatprep.subr.mxu0 0.0
  %649 = vmatpush1.msra.mxu0 0.0
  %650 = vmatprep.subr.mxu0 0.0
  %651 = vmatpush1.msra.mxu0 0.0
  %652 = vmatprep.subr.mxu0 0.0
  %653 = vmatpush1.msra.mxu0 0.0
  %654 = vmatprep.subr.mxu0 0.0
  %655 = vmatpush1.msra.mxu0 0.0
  %656 = vmatprep.subr.mxu0 0.0
  %657 = vmatpush1.msra.mxu0 0.0
  %658 = vmatprep.subr.mxu0 0.0
  %659 = vmatpush1.msra.mxu0 0.0
  %660 = vmatprep.subr.mxu0 0.0
  %661 = vmatpush1.msra.mxu0 0.0
  %662 = vmatprep.subr.mxu0 0.0
  %663 = vmatpush1.msra.mxu0 0.0
  %664 = vmatprep.subr.mxu0 0.0
  %665 = vmatpush1.msra.mxu0 0.0
  %666 = vmatprep.subr.mxu0 0.0
  %667 = vmatpush1.msra.mxu0 0.0
  %668 = vmatprep.subr.mxu0 0.0
  %669 = vmatpush1.msra.mxu0 0.0
  %670 = vmatprep.subr.mxu0 0.0
  %671 = vmatpush1.msra.mxu0 0.0
  %672 = vmatprep.subr.mxu0 0.0
  %673 = vmatpush1.msra.mxu0 0.0
  %674 = vmatprep.subr.mxu0 0.0
  %675 = vmatpush1.msra.mxu0 0.0
  %676 = vmatprep.subr.mxu0 0.0
  %677 = vmatpush1.msra.mxu0 0.0
  %678 = vmatprep.subr.mxu0 0.0
  %679 = vmatpush1.msra.mxu0 0.0
  %680 = vmatprep.subr.mxu0 0.0
  %681 = vmatpush1.msra.mxu0 0.0
  %682 = vmatprep.subr.mxu0 0.0
  %683 = vmatpush1.msra.mxu0 0.0
  %684 = vmatprep.subr.mxu0 0.0
  %685 = vmatpush1.msra.mxu0 0.0
  %686 = vmatprep.subr.mxu0 0.0
  %687 = vmatpush1.msra.mxu0 0.0
  %688 = vmatprep.subr.mxu0 0.0
  %689 = vmatpush1.msra.mxu0 0.0
  %690 = vmatprep.subr.mxu0 0.0
  %691 = vmatpush1.msra.mxu0 0.0
  %692 = vmatprep.mubr.f32.mxu0 0.0
  %693 = vmatmul.mubr.f32.gmra.mrb[0].mxu0 %v626
  %v694 = vpop.f32.mrb[0].mxu0
  %v695 = vadd.f32 0.0, %v694
  %v696 = vpop.f32.mrb[0].mxu0
  %v697 = vadd.f32 0.0, %v696
  %698 = vdwg.mxu0
  %v699 = vadd.f32 %v510, %v695
  %v700 = vadd.f32 %v511, %v697
  %v701 = vxor.u32 %v699, 2147483648
  %v702 = vmul.f32 %v701, 1.442695
  %v703 = vpow.pop %v702
  %v704 = vadd.f32 %v703, 1.0
  %v705 = vrcp.pop %v704
  %v706 = vmul.f32 1.0, %v705
  %v707 = vtanh.pop %v700
  %v708 = vxor.u32 %v700, 2147483648
  %v709 = vmul.f32 %v708, 1.442695
  %v710 = vpow.pop %v709
  %v711 = vadd.f32 %v710, 1.0
  %v712 = vrcp.pop %v711
  %v713 = vmul.f32 1.0, %v712
  %v714 = vmul.f32 %v706, %v620
  %v715 = vmul.f32 %v706, %v707
  %717 = vrot.lane.b32.xlu0 %v715, 64
  %v718 = vpop.permute.xlu0 %717
  %v720 = vadd.f32 %v714, %v718
  %v721 = vtanh.pop %v720
  %v722 = vmul.f32 %v713, %v721
  %724 = vrot.lane.b32.xlu0 %v722, 64
  %v725 = vpop.permute.xlu0 %724
  %v726 = vsel %vm524, %v725, 0
  %728 = vmatprep.subr.mxu0 %v62
  %729 = vmatpush1.msra.mxu0 %v61
  %730 = vmatprep.subr.mxu0 %v64
  %731 = vmatpush1.msra.mxu0 %v63
  %732 = vmatprep.subr.mxu0 %v66
  %733 = vmatpush1.msra.mxu0 %v65
  %734 = vmatprep.subr.mxu0 %v68
  %735 = vmatpush1.msra.mxu0 %v67
  %736 = vmatprep.subr.mxu0 %v70
  %737 = vmatpush1.msra.mxu0 %v69
  %738 = vmatprep.subr.mxu0 %v72
  %739 = vmatpush1.msra.mxu0 %v71
  %740 = vmatprep.subr.mxu0 %v74
  %741 = vmatpush1.msra.mxu0 %v73
  %742 = vmatprep.subr.mxu0 %v76
  %743 = vmatpush1.msra.mxu0 %v75
  %744 = vmatprep.subr.mxu0 0.0
  %745 = vmatpush1.msra.mxu0 0.0
  %746 = vmatprep.subr.mxu0 0.0
  %747 = vmatpush1.msra.mxu0 0.0
  %748 = vmatprep.subr.mxu0 0.0
  %749 = vmatpush1.msra.mxu0 0.0
  %750 = vmatprep.subr.mxu0 0.0
  %751 = vmatpush1.msra.mxu0 0.0
  %752 = vmatprep.subr.mxu0 0.0
  %753 = vmatpush1.msra.mxu0 0.0
  %754 = vmatprep.subr.mxu0 0.0
  %755 = vmatpush1.msra.mxu0 0.0
  %756 = vmatprep.subr.mxu0 0.0
  %757 = vmatpush1.msra.mxu0 0.0
  %758 = vmatprep.subr.mxu0 0.0
  %759 = vmatpush1.msra.mxu0 0.0
  %760 = vmatprep.subr.mxu0 0.0
  %761 = vmatpush1.msra.mxu0 0.0
  %762 = vmatprep.subr.mxu0 0.0
  %763 = vmatpush1.msra.mxu0 0.0
  %764 = vmatprep.subr.mxu0 0.0
  %765 = vmatpush1.msra.mxu0 0.0
  %766 = vmatprep.subr.mxu0 0.0
  %767 = vmatpush1.msra.mxu0 0.0
  %768 = vmatprep.subr.mxu0 0.0
  %769 = vmatpush1.msra.mxu0 0.0
  %770 = vmatprep.subr.mxu0 0.0
  %771 = vmatpush1.msra.mxu0 0.0
  %772 = vmatprep.subr.mxu0 0.0
  %773 = vmatpush1.msra.mxu0 0.0
  %774 = vmatprep.subr.mxu0 0.0
  %775 = vmatpush1.msra.mxu0 0.0
  %776 = vmatprep.subr.mxu0 0.0
  %777 = vmatpush1.msra.mxu0 0.0
  %778 = vmatprep.subr.mxu0 0.0
  %779 = vmatpush1.msra.mxu0 0.0
  %780 = vmatprep.subr.mxu0 0.0
  %781 = vmatpush1.msra.mxu0 0.0
  %782 = vmatprep.subr.mxu0 0.0
  %783 = vmatpush1.msra.mxu0 0.0
  %784 = vmatprep.subr.mxu0 0.0
  %785 = vmatpush1.msra.mxu0 0.0
  %786 = vmatprep.subr.mxu0 0.0
  %787 = vmatpush1.msra.mxu0 0.0
  %788 = vmatprep.subr.mxu0 0.0
  %789 = vmatpush1.msra.mxu0 0.0
  %790 = vmatprep.subr.mxu0 0.0
  %791 = vmatpush1.msra.mxu0 0.0
  %792 = vmatprep.mubr.f32.mxu0 0.0
  %793 = vmatmul.mubr.f32.gmra.mrb[0].mxu0 %v726
  %v794 = vpop.f32.mrb[0].mxu0
  %v795 = vadd.f32 0.0, %v794
  %v796 = vpop.f32.mrb[0].mxu0
  %v797 = vadd.f32 0.0, %v796
  %798 = vdwg.mxu0
  %v799 = vadd.f32 %v512, %v795
  %v800 = vadd.f32 %v513, %v797
  %v801 = vxor.u32 %v799, 2147483648
  %v802 = vmul.f32 %v801, 1.442695
  %v803 = vpow.pop %v802
  %v804 = vadd.f32 %v803, 1.0
  %v805 = vrcp.pop %v804
  %v806 = vmul.f32 1.0, %v805
  %v807 = vtanh.pop %v800
  %v808 = vxor.u32 %v800, 2147483648
  %v809 = vmul.f32 %v808, 1.442695
  %v810 = vpow.pop %v809
  %v811 = vadd.f32 %v810, 1.0
  %v812 = vrcp.pop %v811
  %v813 = vmul.f32 1.0, %v812
  %v814 = vmul.f32 %v806, %v720
  %v815 = vmul.f32 %v806, %v807
  %817 = vrot.lane.b32.xlu0 %v815, 64
  %v818 = vpop.permute.xlu0 %817
  %v820 = vadd.f32 %v814, %v818
  %v821 = vtanh.pop %v820
  %v822 = vmul.f32 %v813, %v821
  %824 = vrot.lane.b32.xlu0 %v822, 64
  %v825 = vpop.permute.xlu0 %824
  %v826 = vsel %vm524, %v825, 0
  %828 = vmatprep.subr.mxu0 %v62
  %829 = vmatpush1.msra.mxu0 %v61
  %830 = vmatprep.subr.mxu0 %v64
  %831 = vmatpush1.msra.mxu0 %v63
  %832 = vmatprep.subr.mxu0 %v66
  %833 = vmatpush1.msra.mxu0 %v65
  %834 = vmatprep.subr.mxu0 %v68
  %835 = vmatpush1.msra.mxu0 %v67
  %836 = vmatprep.subr.mxu0 %v70
  %837 = vmatpush1.msra.mxu0 %v69
  %838 = vmatprep.subr.mxu0 %v72
  %839 = vmatpush1.msra.mxu0 %v71
  %840 = vmatprep.subr.mxu0 %v74
  %841 = vmatpush1.msra.mxu0 %v73
  %842 = vmatprep.subr.mxu0 %v76
  %843 = vmatpush1.msra.mxu0 %v75
  %844 = vmatprep.subr.mxu0 0.0
  %845 = vmatpush1.msra.mxu0 0.0
  %846 = vmatprep.subr.mxu0 0.0
  %847 = vmatpush1.msra.mxu0 0.0
  %848 = vmatprep.subr.mxu0 0.0
  %849 = vmatpush1.msra.mxu0 0.0
  %850 = vmatprep.subr.mxu0 0.0
  %851 = vmatpush1.msra.mxu0 0.0
  %852 = vmatprep.subr.mxu0 0.0
  %853 = vmatpush1.msra.mxu0 0.0
  %854 = vmatprep.subr.mxu0 0.0
  %855 = vmatpush1.msra.mxu0 0.0
  %856 = vmatprep.subr.mxu0 0.0
  %857 = vmatpush1.msra.mxu0 0.0
  %858 = vmatprep.subr.mxu0 0.0
  %859 = vmatpush1.msra.mxu0 0.0
  %860 = vmatprep.subr.mxu0 0.0
  %861 = vmatpush1.msra.mxu0 0.0
  %862 = vmatprep.subr.mxu0 0.0
  %863 = vmatpush1.msra.mxu0 0.0
  %864 = vmatprep.subr.mxu0 0.0
  %865 = vmatpush1.msra.mxu0 0.0
  %866 = vmatprep.subr.mxu0 0.0
  %867 = vmatpush1.msra.mxu0 0.0
  %868 = vmatprep.subr.mxu0 0.0
  %869 = vmatpush1.msra.mxu0 0.0
  %870 = vmatprep.subr.mxu0 0.0
  %871 = vmatpush1.msra.mxu0 0.0
  %872 = vmatprep.subr.mxu0 0.0
  %873 = vmatpush1.msra.mxu0 0.0
  %874 = vmatprep.subr.mxu0 0.0
  %875 = vmatpush1.msra.mxu0 0.0
  %876 = vmatprep.subr.mxu0 0.0
  %877 = vmatpush1.msra.mxu0 0.0
  %878 = vmatprep.subr.mxu0 0.0
  %879 = vmatpush1.msra.mxu0 0.0
  %880 = vmatprep.subr.mxu0 0.0
  %881 = vmatpush1.msra.mxu0 0.0
  %882 = vmatprep.subr.mxu0 0.0
  %883 = vmatpush1.msra.mxu0 0.0
  %884 = vmatprep.subr.mxu0 0.0
  %885 = vmatpush1.msra.mxu0 0.0
  %886 = vmatprep.subr.mxu0 0.0
  %887 = vmatpush1.msra.mxu0 0.0
  %888 = vmatprep.subr.mxu0 0.0
  %889 = vmatpush1.msra.mxu0 0.0
  %890 = vmatprep.subr.mxu0 0.0
  %891 = vmatpush1.msra.mxu0 0.0
  %892 = vmatprep.mubr.f32.mxu0 0.0
  %893 = vmatmul.mubr.f32.gmra.mrb[0].mxu0 %v826
  %v894 = vpop.f32.mrb[0].mxu0
  %v895 = vadd.f32 0.0, %v894
  %v896 = vpop.f32.mrb[0].mxu0
  %v897 = vadd.f32 0.0, %v896
  %898 = vdwg.mxu0
  %v899 = vadd.f32 %v514, %v895
  %v900 = vadd.f32 %v515, %v897
  %v901 = vxor.u32 %v899, 2147483648
  %v902 = vmul.f32 %v901, 1.442695
  %v903 = vpow.pop %v902
  %v904 = vadd.f32 %v903, 1.0
  %v905 = vrcp.pop %v904
  %v906 = vmul.f32 1.0, %v905
  %v907 = vtanh.pop %v900
  %v908 = vxor.u32 %v900, 2147483648
  %v909 = vmul.f32 %v908, 1.442695
  %v910 = vpow.pop %v909
  %v911 = vadd.f32 %v910, 1.0
  %v912 = vrcp.pop %v911
  %v913 = vmul.f32 1.0, %v912
  %v914 = vmul.f32 %v906, %v820
  %v915 = vmul.f32 %v906, %v907
  %917 = vrot.lane.b32.xlu0 %v915, 64
  %v918 = vpop.permute.xlu0 %917
  %v920 = vadd.f32 %v914, %v918
  %v921 = vtanh.pop %v920
  %v922 = vmul.f32 %v913, %v921
  %924 = vrot.lane.b32.xlu0 %v922, 64
  %v925 = vpop.permute.xlu0 %924
  %v926 = vsel %vm524, %v925, 0
  %928 = vmatprep.subr.mxu0 %v62
  %929 = vmatpush1.msra.mxu0 %v61
  %930 = vmatprep.subr.mxu0 %v64
  %931 = vmatpush1.msra.mxu0 %v63
  %932 = vmatprep.subr.mxu0 %v66
  %933 = vmatpush1.msra.mxu0 %v65
  %934 = vmatprep.subr.mxu0 %v68
  %935 = vmatpush1.msra.mxu0 %v67
  %936 = vmatprep.subr.mxu0 %v70
  %937 = vmatpush1.msra.mxu0 %v69
  %938 = vmatprep.subr.mxu0 %v72
  %939 = vmatpush1.msra.mxu0 %v71
  %940 = vmatprep.subr.mxu0 %v74
  %941 = vmatpush1.msra.mxu0 %v73
  %942 = vmatprep.subr.mxu0 %v76
  %943 = vmatpush1.msra.mxu0 %v75
  %944 = vmatprep.subr.mxu0 0.0
  %945 = vmatpush1.msra.mxu0 0.0
  %946 = vmatprep.subr.mxu0 0.0
  %947 = vmatpush1.msra.mxu0 0.0
  %948 = vmatprep.subr.mxu0 0.0
  %949 = vmatpush1.msra.mxu0 0.0
  %950 = vmatprep.subr.mxu0 0.0
  %951 = vmatpush1.msra.mxu0 0.0
  %952 = vmatprep.subr.mxu0 0.0
  %953 = vmatpush1.msra.mxu0 0.0
  %954 = vmatprep.subr.mxu0 0.0
  %955 = vmatpush1.msra.mxu0 0.0
  %956 = vmatprep.subr.mxu0 0.0
  %957 = vmatpush1.msra.mxu0 0.0
  %958 = vmatprep.subr.mxu0 0.0
  %959 = vmatpush1.msra.mxu0 0.0
  %960 = vmatprep.subr.mxu0 0.0
  %961 = vmatpush1.msra.mxu0 0.0
  %962 = vmatprep.subr.mxu0 0.0
  %963 = vmatpush1.msra.mxu0 0.0
  %964 = vmatprep.subr.mxu0 0.0
  %965 = vmatpush1.msra.mxu0 0.0
  %966 = vmatprep.subr.mxu0 0.0
  %967 = vmatpush1.msra.mxu0 0.0
  %968 = vmatprep.subr.mxu0 0.0
  %969 = vmatpush1.msra.mxu0 0.0
  %970 = vmatprep.subr.mxu0 0.0
  %971 = vmatpush1.msra.mxu0 0.0
  %972 = vmatprep.subr.mxu0 0.0
  %973 = vmatpush1.msra.mxu0 0.0
  %974 = vmatprep.subr.mxu0 0.0
  %975 = vmatpush1.msra.mxu0 0.0
  %976 = vmatprep.subr.mxu0 0.0
  %977 = vmatpush1.msra.mxu0 0.0
  %978 = vmatprep.subr.mxu0 0.0
  %979 = vmatpush1.msra.mxu0 0.0
  %980 = vmatprep.subr.mxu0 0.0
  %981 = vmatpush1.msra.mxu0 0.0
  %982 = vmatprep.subr.mxu0 0.0
  %983 = vmatpush1.msra.mxu0 0.0
  %984 = vmatprep.subr.mxu0 0.0
  %985 = vmatpush1.msra.mxu0 0.0
  %986 = vmatprep.subr.mxu0 0.0
  %987 = vmatpush1.msra.mxu0 0.0
  %988 = vmatprep.subr.mxu0 0.0
  %989 = vmatpush1.msra.mxu0 0.0
  %990 = vmatprep.subr.mxu0 0.0
  %991 = vmatpush1.msra.mxu0 0.0
  %992 = vmatprep.mubr.f32.mxu0 0.0
  %993 = vmatmul.mubr.f32.gmra.mrb[0].mxu0 %v926
  %v994 = vpop.f32.mrb[0].mxu0
  %v995 = vadd.f32 0.0, %v994
  %v996 = vpop.f32.mrb[0].mxu0
  %v997 = vadd.f32 0.0, %v996
  %998 = vdwg.mxu0
  %v999 = vadd.f32 %v516, %v995
  %v1000 = vadd.f32 %v517, %v997
  %v1001 = vxor.u32 %v999, 2147483648
  %v1002 = vmul.f32 %v1001, 1.442695
  %v1003 = vpow.pop %v1002
  %v1004 = vadd.f32 %v1003, 1.0
  %v1005 = vrcp.pop %v1004
  %v1006 = vmul.f32 1.0, %v1005
  %v1007 = vtanh.pop %v1000
  %v1008 = vxor.u32 %v1000, 2147483648
  %v1009 = vmul.f32 %v1008, 1.442695
  %v1010 = vpow.pop %v1009
  %v1011 = vadd.f32 %v1010, 1.0
  %v1012 = vrcp.pop %v1011
  %v1013 = vmul.f32 1.0, %v1012
  %v1014 = vmul.f32 %v1006, %v920
  %v1015 = vmul.f32 %v1006, %v1007
  %1017 = vrot.lane.b32.xlu0 %v1015, 64
  %v1018 = vpop.permute.xlu0 %1017
  %v1020 = vadd.f32 %v1014, %v1018
  %v1021 = vtanh.pop %v1020
  %v1022 = vmul.f32 %v1013, %v1021
  %1024 = vrot.lane.b32.xlu0 %v1022, 64
  %v1025 = vpop.permute.xlu0 %1024
  %v1026 = vsel %vm524, %v1025, 0
  %1028 = vmatprep.subr.mxu0 %v62
  %1029 = vmatpush1.msra.mxu0 %v61
  %1030 = vmatprep.subr.mxu0 %v64
  %1031 = vmatpush1.msra.mxu0 %v63
  %1032 = vmatprep.subr.mxu0 %v66
  %1033 = vmatpush1.msra.mxu0 %v65
  %1034 = vmatprep.subr.mxu0 %v68
  %1035 = vmatpush1.msra.mxu0 %v67
  %1036 = vmatprep.subr.mxu0 %v70
  %1037 = vmatpush1.msra.mxu0 %v69
  %1038 = vmatprep.subr.mxu0 %v72
  %1039 = vmatpush1.msra.mxu0 %v71
  %1040 = vmatprep.subr.mxu0 %v74
  %1041 = vmatpush1.msra.mxu0 %v73
  %1042 = vmatprep.subr.mxu0 %v76
  %1043 = vmatpush1.msra.mxu0 %v75
  %1044 = vmatprep.subr.mxu0 0.0
  %1045 = vmatpush1.msra.mxu0 0.0
  %1046 = vmatprep.subr.mxu0 0.0
  %1047 = vmatpush1.msra.mxu0 0.0
  %1048 = vmatprep.subr.mxu0 0.0
  %1049 = vmatpush1.msra.mxu0 0.0
  %1050 = vmatprep.subr.mxu0 0.0
  %1051 = vmatpush1.msra.mxu0 0.0
  %1052 = vmatprep.subr.mxu0 0.0
  %1053 = vmatpush1.msra.mxu0 0.0
  %1054 = vmatprep.subr.mxu0 0.0
  %1055 = vmatpush1.msra.mxu0 0.0
  %1056 = vmatprep.subr.mxu0 0.0
  %1057 = vmatpush1.msra.mxu0 0.0
  %1058 = vmatprep.subr.mxu0 0.0
  %1059 = vmatpush1.msra.mxu0 0.0
  %1060 = vmatprep.subr.mxu0 0.0
  %1061 = vmatpush1.msra.mxu0 0.0
  %1062 = vmatprep.subr.mxu0 0.0
  %1063 = vmatpush1.msra.mxu0 0.0
  %1064 = vmatprep.subr.mxu0 0.0
  %1065 = vmatpush1.msra.mxu0 0.0
  %1066 = vmatprep.subr.mxu0 0.0
  %1067 = vmatpush1.msra.mxu0 0.0
  %1068 = vmatprep.subr.mxu0 0.0
  %1069 = vmatpush1.msra.mxu0 0.0
  %1070 = vmatprep.subr.mxu0 0.0
  %1071 = vmatpush1.msra.mxu0 0.0
  %1072 = vmatprep.subr.mxu0 0.0
  %1073 = vmatpush1.msra.mxu0 0.0
  %1074 = vmatprep.subr.mxu0 0.0
  %1075 = vmatpush1.msra.mxu0 0.0
  %1076 = vmatprep.subr.mxu0 0.0
  %1077 = vmatpush1.msra.mxu0 0.0
  %1078 = vmatprep.subr.mxu0 0.0
  %1079 = vmatpush1.msra.mxu0 0.0
  %1080 = vmatprep.subr.mxu0 0.0
  %1081 = vmatpush1.msra.mxu0 0.0
  %1082 = vmatprep.subr.mxu0 0.0
  %1083 = vmatpush1.msra.mxu0 0.0
  %1084 = vmatprep.subr.mxu0 0.0
  %1085 = vmatpush1.msra.mxu0 0.0
  %1086 = vmatprep.subr.mxu0 0.0
  %1087 = vmatpush1.msra.mxu0 0.0
  %1088 = vmatprep.subr.mxu0 0.0
  %1089 = vmatpush1.msra.mxu0 0.0
  %1090 = vmatprep.subr.mxu0 0.0
  %1091 = vmatpush1.msra.mxu0 0.0
  %1092 = vmatprep.mubr.f32.mxu0 0.0
  %1093 = vmatmul.mubr.f32.gmra.mrb[0].mxu0 %v1026
  %v1094 = vpop.f32.mrb[0].mxu0
  %v1095 = vadd.f32 0.0, %v1094
  %v1096 = vpop.f32.mrb[0].mxu0
  %v1097 = vadd.f32 0.0, %v1096
  %1098 = vdwg.mxu0
  %v1099 = vadd.f32 %v518, %v1095
  %v1100 = vadd.f32 %v519, %v1097
  %v1101 = vxor.u32 %v1099, 2147483648
  %v1102 = vmul.f32 %v1101, 1.442695
  %v1103 = vpow.pop %v1102
  %v1104 = vadd.f32 %v1103, 1.0
  %v1105 = vrcp.pop %v1104
  %v1106 = vmul.f32 1.0, %v1105
  %v1107 = vtanh.pop %v1100
  %v1108 = vxor.u32 %v1100, 2147483648
  %v1109 = vmul.f32 %v1108, 1.442695
  %v1110 = vpow.pop %v1109
  %v1111 = vadd.f32 %v1110, 1.0
  %v1112 = vrcp.pop %v1111
  %v1113 = vmul.f32 1.0, %v1112
  %v1114 = vmul.f32 %v1106, %v1020
  %v1115 = vmul.f32 %v1106, %v1107
  %1117 = vrot.lane.b32.xlu0 %v1115, 64
  %v1118 = vpop.permute.xlu0 %1117
  %v1120 = vadd.f32 %v1114, %v1118
  %v1121 = vtanh.pop %v1120
  %v1122 = vmul.f32 %v1113, %v1121
  %1124 = vrot.lane.b32.xlu0 %v1122, 64
  %v1125 = vpop.permute.xlu0 %1124
  %v1126 = vsel %vm524, %v1125, 0
  %1128 = vmatprep.subr.mxu0 %v62
  %1129 = vmatpush1.msra.mxu0 %v61
  %1130 = vmatprep.subr.mxu0 %v64
  %1131 = vmatpush1.msra.mxu0 %v63
  %1132 = vmatprep.subr.mxu0 %v66
  %1133 = vmatpush1.msra.mxu0 %v65
  %1134 = vmatprep.subr.mxu0 %v68
  %1135 = vmatpush1.msra.mxu0 %v67
  %1136 = vmatprep.subr.mxu0 %v70
  %1137 = vmatpush1.msra.mxu0 %v69
  %1138 = vmatprep.subr.mxu0 %v72
  %1139 = vmatpush1.msra.mxu0 %v71
  %1140 = vmatprep.subr.mxu0 %v74
  %1141 = vmatpush1.msra.mxu0 %v73
  %1142 = vmatprep.subr.mxu0 %v76
  %1143 = vmatpush1.msra.mxu0 %v75
  %1144 = vmatprep.subr.mxu0 0.0
  %1145 = vmatpush1.msra.mxu0 0.0
  %1146 = vmatprep.subr.mxu0 0.0
  %1147 = vmatpush1.msra.mxu0 0.0
  %1148 = vmatprep.subr.mxu0 0.0
  %1149 = vmatpush1.msra.mxu0 0.0
  %1150 = vmatprep.subr.mxu0 0.0
  %1151 = vmatpush1.msra.mxu0 0.0
  %1152 = vmatprep.subr.mxu0 0.0
  %1153 = vmatpush1.msra.mxu0 0.0
  %1154 = vmatprep.subr.mxu0 0.0
  %1155 = vmatpush1.msra.mxu0 0.0
  %1156 = vmatprep.subr.mxu0 0.0
  %1157 = vmatpush1.msra.mxu0 0.0
  %1158 = vmatprep.subr.mxu0 0.0
  %1159 = vmatpush1.msra.mxu0 0.0
  %1160 = vmatprep.subr.mxu0 0.0
  %1161 = vmatpush1.msra.mxu0 0.0
  %1162 = vmatprep.subr.mxu0 0.0
  %1163 = vmatpush1.msra.mxu0 0.0
  %1164 = vmatprep.subr.mxu0 0.0
  %1165 = vmatpush1.msra.mxu0 0.0
  %1166 = vmatprep.subr.mxu0 0.0
  %1167 = vmatpush1.msra.mxu0 0.0
  %1168 = vmatprep.subr.mxu0 0.0
  %1169 = vmatpush1.msra.mxu0 0.0
  %1170 = vmatprep.subr.mxu0 0.0
  %1171 = vmatpush1.msra.mxu0 0.0
  %1172 = vmatprep.subr.mxu0 0.0
  %1173 = vmatpush1.msra.mxu0 0.0
  %1174 = vmatprep.subr.mxu0 0.0
  %1175 = vmatpush1.msra.mxu0 0.0
  %1176 = vmatprep.subr.mxu0 0.0
  %1177 = vmatpush1.msra.mxu0 0.0
  %1178 = vmatprep.subr.mxu0 0.0
  %1179 = vmatpush1.msra.mxu0 0.0
  %1180 = vmatprep.subr.mxu0 0.0
  %1181 = vmatpush1.msra.mxu0 0.0
  %1182 = vmatprep.subr.mxu0 0.0
  %1183 = vmatpush1.msra.mxu0 0.0
  %1184 = vmatprep.subr.mxu0 0.0
  %1185 = vmatpush1.msra.mxu0 0.0
  %1186 = vmatprep.subr.mxu0 0.0
  %1187 = vmatpush1.msra.mxu0 0.0
  %1188 = vmatprep.subr.mxu0 0.0
  %1189 = vmatpush1.msra.mxu0 0.0
  %1190 = vmatprep.subr.mxu0 0.0
  %1191 = vmatpush1.msra.mxu0 0.0
  %1192 = vmatprep.mubr.f32.mxu0 0.0
  %1193 = vmatmul.mubr.f32.gmra.mrb[0].mxu0 %v1126
  %v1194 = vpop.f32.mrb[0].mxu0
  %v1195 = vadd.f32 0.0, %v1194
  %v1196 = vpop.f32.mrb[0].mxu0
  %v1197 = vadd.f32 0.0, %v1196
  %1198 = vdwg.mxu0
  %v1199 = vadd.f32 %v520, %v1195
  %v1200 = vadd.f32 %v521, %v1197
  %v1201 = vxor.u32 %v1199, 2147483648
  %v1202 = vmul.f32 %v1201, 1.442695
  %v1203 = vpow.pop %v1202
  %v1204 = vadd.f32 %v1203, 1.0
  %v1205 = vrcp.pop %v1204
  %v1206 = vmul.f32 1.0, %v1205
  %v1207 = vtanh.pop %v1200
  %v1208 = vxor.u32 %v1200, 2147483648
  %v1209 = vmul.f32 %v1208, 1.442695
  %v1210 = vpow.pop %v1209
  %v1211 = vadd.f32 %v1210, 1.0
  %v1212 = vrcp.pop %v1211
  %v1213 = vmul.f32 1.0, %v1212
  %v1214 = vmul.f32 %v1206, %v1120
  %v1215 = vmul.f32 %v1206, %v1207
  %1217 = vrot.lane.b32.xlu0 %v1215, 64
  %v1218 = vpop.permute.xlu0 %1217
  %v1220 = vadd.f32 %v1214, %v1218
  %v1221 = vtanh.pop %v1220
  %v1222 = vmul.f32 %v1213, %v1221
  %1224 = vrot.lane.b32.xlu0 %v1222, 64
  %v1225 = vpop.permute.xlu0 %1224
  %v1226 = vsel %vm524, %v1225, 0
  %1228 = vmatprep.subr.mxu0 %v62
  %1229 = vmatpush1.msra.mxu0 %v61
  %1230 = vmatprep.subr.mxu0 %v64
  %1231 = vmatpush1.msra.mxu0 %v63
  %1232 = vmatprep.subr.mxu0 %v66
  %1233 = vmatpush1.msra.mxu0 %v65
  %1234 = vmatprep.subr.mxu0 %v68
  %1235 = vmatpush1.msra.mxu0 %v67
  %1236 = vmatprep.subr.mxu0 %v70
  %1237 = vmatpush1.msra.mxu0 %v69
  %1238 = vmatprep.subr.mxu0 %v72
  %1239 = vmatpush1.msra.mxu0 %v71
  %1240 = vmatprep.subr.mxu0 %v74
  %1241 = vmatpush1.msra.mxu0 %v73
  %1242 = vmatprep.subr.mxu0 %v76
  %1243 = vmatpush1.msra.mxu0 %v75
  %1244 = vmatprep.subr.mxu0 0.0
  %1245 = vmatpush1.msra.mxu0 0.0
  %1246 = vmatprep.subr.mxu0 0.0
  %1247 = vmatpush1.msra.mxu0 0.0
  %1248 = vmatprep.subr.mxu0 0.0
  %1249 = vmatpush1.msra.mxu0 0.0
  %1250 = vmatprep.subr.mxu0 0.0
  %1251 = vmatpush1.msra.mxu0 0.0
  %1252 = vmatprep.subr.mxu0 0.0
  %1253 = vmatpush1.msra.mxu0 0.0
  %1254 = vmatprep.subr.mxu0 0.0
  %1255 = vmatpush1.msra.mxu0 0.0
  %1256 = vmatprep.subr.mxu0 0.0
  %1257 = vmatpush1.msra.mxu0 0.0
  %1258 = vmatprep.subr.mxu0 0.0
  %1259 = vmatpush1.msra.mxu0 0.0
  %1260 = vmatprep.subr.mxu0 0.0
  %1261 = vmatpush1.msra.mxu0 0.0
  %1262 = vmatprep.subr.mxu0 0.0
  %1263 = vmatpush1.msra.mxu0 0.0
  %1264 = vmatprep.subr.mxu0 0.0
  %1265 = vmatpush1.msra.mxu0 0.0
  %1266 = vmatprep.subr.mxu0 0.0
  %1267 = vmatpush1.msra.mxu0 0.0
  %1268 = vmatprep.subr.mxu0 0.0
  %1269 = vmatpush1.msra.mxu0 0.0
  %1270 = vmatprep.subr.mxu0 0.0
  %1271 = vmatpush1.msra.mxu0 0.0
  %1272 = vmatprep.subr.mxu0 0.0
  %1273 = vmatpush1.msra.mxu0 0.0
  %1274 = vmatprep.subr.mxu0 0.0
  %1275 = vmatpush1.msra.mxu0 0.0
  %1276 = vmatprep.subr.mxu0 0.0
  %1277 = vmatpush1.msra.mxu0 0.0
  %1278 = vmatprep.subr.mxu0 0.0
  %1279 = vmatpush1.msra.mxu0 0.0
  %1280 = vmatprep.subr.mxu0 0.0
  %1281 = vmatpush1.msra.mxu0 0.0
  %1282 = vmatprep.subr.mxu0 0.0
  %1283 = vmatpush1.msra.mxu0 0.0
  %1284 = vmatprep.subr.mxu0 0.0
  %1285 = vmatpush1.msra.mxu0 0.0
  %1286 = vmatprep.subr.mxu0 0.0
  %1287 = vmatpush1.msra.mxu0 0.0
  %1288 = vmatprep.subr.mxu0 0.0
  %1289 = vmatpush1.msra.mxu0 0.0
  %1290 = vmatprep.subr.mxu0 0.0
  %1291 = vmatpush1.msra.mxu0 0.0
  %1292 = vmatprep.mubr.f32.mxu0 0.0
  %1293 = vmatmul.mubr.f32.gmra.mrb[0].mxu0 %v1226
  %v1294 = vpop.f32.mrb[0].mxu0
  %v1295 = vadd.f32 0.0, %v1294
  %v1296 = vpop.f32.mrb[0].mxu0
  %v1297 = vadd.f32 0.0, %v1296
  %1298 = vdwg.mxu0
  %v1299 = vadd.f32 %v522, %v1295
  %v1300 = vadd.f32 %v523, %v1297
  %v1301 = vxor.u32 %v1299, 2147483648
  %v1302 = vmul.f32 %v1301, 1.442695
  %v1303 = vpow.pop %v1302
  %v1304 = vadd.f32 %v1303, 1.0
  %v1305 = vrcp.pop %v1304
  %v1306 = vmul.f32 1.0, %v1305
  %v1307 = vtanh.pop %v1300
  %v1308 = vxor.u32 %v1300, 2147483648
  %v1309 = vmul.f32 %v1308, 1.442695
  %v1310 = vpow.pop %v1309
  %v1311 = vadd.f32 %v1310, 1.0
  %v1312 = vrcp.pop %v1311
  %v1313 = vmul.f32 1.0, %v1312
  %v1314 = vmul.f32 %v1306, %v1220
  %v1315 = vmul.f32 %v1306, %v1307
  %1317 = vrot.lane.b32.xlu0 %v1315, 64
  %v1318 = vpop.permute.xlu0 %1317
  %v1320 = vadd.f32 %v1314, %v1318
  %v1321 = vtanh.pop %v1320
  %v1322 = vmul.f32 %v1313, %v1321
  %v1323 = vsel %vm163, 1, 0
  %vm1324 = vcmp.eq.s32.totalorder %v1323, 1
  %1326 = vrot.lane.b32.xlu0 %v1322, 64
  %v1327 = vpop.permute.xlu0 %1326
  %v1336 = vsel %vm1324, %v625, %v1327
  %v1337 = vsel %vm1324, %v725, %v1225
  %v1338 = vsel %vm1324, %v825, %v1125
  %v1339 = vsel %vm1324, %v925, %v1025
  %v1340 = vsel %vm1324, %v1025, %v925
  %v1341 = vsel %vm1324, %v1125, %v825
  %v1342 = vsel %vm1324, %v1225, %v725
  %v1343 = vsel %vm1324, %v1327, %v625
  %v1345 = vlaneseq
  %v1346 = vshrl.u32 %v1345, 7
  %v1347 = vsub.s32 0, %v1346
  %v1348 = vrot.slane %v112, %v1347
  %v1349 = vlaneseq
  %v1350 = vshrl.u32 %v1349, 7
  %v1351 = vsub.s32 1, %v1350
  %v1352 = vrot.slane %v112, %v1351
  %v1356 = vsel %vm524, %v1336, 0
  %v1359 = vsel %vm524, %v1337, 0
  %v1362 = vsel %vm524, %v1338, 0
  %v1365 = vsel %vm524, %v1339, 0
  %v1368 = vsel %vm524, %v1340, 0
  %v1371 = vsel %vm524, %v1341, 0
  %v1374 = vsel %vm524, %v1342, 0
  %v1377 = vsel %vm524, %v1343, 0
  %1379 = vmatprep.subr.mxu0 %v80
  %1380 = vmatpush1.msra.mxu0 %v79
  %1381 = vmatprep.subr.mxu0 %v82
  %1382 = vmatpush1.msra.mxu0 %v81
  %1383 = vmatprep.subr.mxu0 %v84
  %1384 = vmatpush1.msra.mxu0 %v83
  %1385 = vmatprep.subr.mxu0 %v86
  %1386 = vmatpush1.msra.mxu0 %v85
  %1387 = vmatprep.subr.mxu0 %v88
  %1388 = vmatpush1.msra.mxu0 %v87
  %1389 = vmatprep.subr.mxu0 %v90
  %1390 = vmatpush1.msra.mxu0 %v89
  %1391 = vmatprep.subr.mxu0 %v92
  %1392 = vmatpush1.msra.mxu0 %v91
  %1393 = vmatprep.subr.mxu0 %v94
  %1394 = vmatpush1.msra.mxu0 %v93
  %1395 = vmatprep.subr.mxu0 0.0
  %1396 = vmatpush1.msra.mxu0 0.0
  %1397 = vmatprep.subr.mxu0 0.0
  %1398 = vmatpush1.msra.mxu0 0.0
  %1399 = vmatprep.subr.mxu0 0.0
  %1400 = vmatpush1.msra.mxu0 0.0
  %1401 = vmatprep.subr.mxu0 0.0
  %1402 = vmatpush1.msra.mxu0 0.0
  %1403 = vmatprep.subr.mxu0 0.0
  %1404 = vmatpush1.msra.mxu0 0.0
  %1405 = vmatprep.subr.mxu0 0.0
  %1406 = vmatpush1.msra.mxu0 0.0
  %1407 = vmatprep.subr.mxu0 0.0
  %1408 = vmatpush1.msra.mxu0 0.0
  %1409 = vmatprep.subr.mxu0 0.0
  %1410 = vmatpush1.msra.mxu0 0.0
  %1411 = vmatprep.subr.mxu0 0.0
  %1412 = vmatpush1.msra.mxu0 0.0
  %1413 = vmatprep.subr.mxu0 0.0
  %1414 = vmatpush1.msra.mxu0 0.0
  %1415 = vmatprep.subr.mxu0 0.0
  %1416 = vmatpush1.msra.mxu0 0.0
  %1417 = vmatprep.subr.mxu0 0.0
  %1418 = vmatpush1.msra.mxu0 0.0
  %1419 = vmatprep.subr.mxu0 0.0
  %1420 = vmatpush1.msra.mxu0 0.0
  %1421 = vmatprep.subr.mxu0 0.0
  %1422 = vmatpush1.msra.mxu0 0.0
  %1423 = vmatprep.subr.mxu0 0.0
  %1424 = vmatpush1.msra.mxu0 0.0
  %1425 = vmatprep.subr.mxu0 0.0
  %1426 = vmatpush1.msra.mxu0 0.0
  %1427 = vmatprep.subr.mxu0 0.0
  %1428 = vmatpush1.msra.mxu0 0.0
  %1429 = vmatprep.subr.mxu0 0.0
  %1430 = vmatpush1.msra.mxu0 0.0
  %1431 = vmatprep.subr.mxu0 0.0
  %1432 = vmatpush1.msra.mxu0 0.0
  %1433 = vmatprep.subr.mxu0 0.0
  %1434 = vmatpush1.msra.mxu0 0.0
  %1435 = vmatprep.subr.mxu0 0.0
  %1436 = vmatpush1.msra.mxu0 0.0
  %1437 = vmatprep.subr.mxu0 0.0
  %1438 = vmatpush1.msra.mxu0 0.0
  %1439 = vmatprep.subr.mxu0 0.0
  %1440 = vmatpush1.msra.mxu0 0.0
  %1441 = vmatprep.subr.mxu0 0.0
  %1442 = vmatpush1.msra.mxu0 0.0
  %1443 = vmatprep.mubr.f32.mxu0 0.0
  %1444 = vmatmul.mubr.f32.gmra.mrb[0].mxu0 %v1356
  %v1445 = vpop.f32.mrb[0].mxu0
  %v1446 = vadd.f32 %v1348, %v1445
  %v1447 = vpop.f32.mrb[0].mxu0
  %v1448 = vadd.f32 %v1352, %v1447
  %1449 = vmatprep.mubr.f32.mxu0 0.0
  %1450 = vmatmul.mubr.f32.gmra.mrb[0].mxu0 %v1359
  %v1451 = vpop.f32.mrb[0].mxu0
  %v1452 = vadd.f32 %v1348, %v1451
  %v1453 = vpop.f32.mrb[0].mxu0
  %v1454 = vadd.f32 %v1352, %v1453
  %1455 = vmatprep.mubr.f32.mxu0 0.0
  %1456 = vmatmul.mubr.f32.gmra.mrb[0].mxu0 %v1362
  %v1457 = vpop.f32.mrb[0].mxu0
  %v1458 = vadd.f32 %v1348, %v1457
  %v1459 = vpop.f32.mrb[0].mxu0
  %v1460 = vadd.f32 %v1352, %v1459
  %1461 = vmatprep.mubr.f32.mxu0 0.0
  %1462 = vmatmul.mubr.f32.gmra.mrb[0].mxu0 %v1365
  %v1463 = vpop.f32.mrb[0].mxu0
  %v1464 = vadd.f32 %v1348, %v1463
  %v1465 = vpop.f32.mrb[0].mxu0
  %v1466 = vadd.f32 %v1352, %v1465
  %1467 = vmatprep.mubr.f32.mxu0 0.0
  %1468 = vmatmul.mubr.f32.gmra.mrb[0].mxu0 %v1368
  %v1469 = vpop.f32.mrb[0].mxu0
  %v1470 = vadd.f32 %v1348, %v1469
  %v1471 = vpop.f32.mrb[0].mxu0
  %v1472 = vadd.f32 %v1352, %v1471
  %1473 = vmatprep.mubr.f32.mxu0 0.0
  %1474 = vmatmul.mubr.f32.gmra.mrb[0].mxu0 %v1371
  %v1475 = vpop.f32.mrb[0].mxu0
  %v1476 = vadd.f32 %v1348, %v1475
  %v1477 = vpop.f32.mrb[0].mxu0
  %v1478 = vadd.f32 %v1352, %v1477
  %1479 = vmatprep.mubr.f32.mxu0 0.0
  %1480 = vmatmul.mubr.f32.gmra.mrb[0].mxu0 %v1374
  %v1481 = vpop.f32.mrb[0].mxu0
  %v1482 = vadd.f32 %v1348, %v1481
  %v1483 = vpop.f32.mrb[0].mxu0
  %v1484 = vadd.f32 %v1352, %v1483
  %1485 = vmatprep.mubr.f32.mxu0 0.0
  %1486 = vmatmul.mubr.f32.gmra.mrb[0].mxu0 %v1377
  %v1487 = vpop.f32.mrb[0].mxu0
  %v1488 = vadd.f32 %v1348, %v1487
  %v1489 = vpop.f32.mrb[0].mxu0
  %v1490 = vadd.f32 %v1352, %v1489
  %1491 = vdwg.mxu0
  %v1492 = vsel %vm161, 1, 0
  %v1493 = vlaneseq
  %v1494 = vshrl.u32 %v1493, 7
  %v1495 = vsub.s32 0, %v1494
  %v1496 = vrot.slane %v1492, %v1495
  %v1497 = vlaneseq
  %v1498 = vshrl.u32 %v1497, 7
  %v1499 = vsub.s32 1, %v1498
  %v1500 = vrot.slane %v1492, %v1499
  %vm1501 = vcmp.eq.s32.totalorder %v1496, 1
  %vm1502 = vcmp.eq.s32.totalorder %v1500, 1
  %v1503 = vsel %vm1501, %v1446, %v1488
  %v1504 = vsel %vm1502, %v1448, %v1490
  %v1505 = vsel %vm1501, %v1452, %v1482
  %v1506 = vsel %vm1502, %v1454, %v1484
  %v1507 = vsel %vm1501, %v1458, %v1476
  %v1508 = vsel %vm1502, %v1460, %v1478
  %v1509 = vsel %vm1501, %v1464, %v1470
  %v1510 = vsel %vm1502, %v1466, %v1472
  %v1511 = vsel %vm1501, %v1470, %v1464
  %v1512 = vsel %vm1502, %v1472, %v1466
  %v1513 = vsel %vm1501, %v1476, %v1458
  %v1514 = vsel %vm1502, %v1478, %v1460
  %v1515 = vsel %vm1501, %v1482, %v1452
  %v1516 = vsel %vm1502, %v1484, %v1454
  %v1517 = vsel %vm1501, %v1488, %v1446
  %v1518 = vsel %vm1502, %v1490, %v1448
  %v1520 = vlaneseq
  %v1521 = vshrl.u32 %v1520, 7
  %v1522 = vsub.s32 0, %v1521
  %v1523 = vrot.slane %v114, %v1522
  %v1524 = vlaneseq
  %v1525 = vshrl.u32 %v1524, 7
  %v1526 = vsub.s32 1, %v1525
  %v1527 = vrot.slane %v114, %v1526
  %1530 = vmatprep.subr.mxu0 %v96
  %1531 = vmatpush1.msra.mxu0 %v95
  %1532 = vmatprep.subr.mxu0 %v98
  %1533 = vmatpush1.msra.mxu0 %v97
  %1534 = vmatprep.subr.mxu0 %v100
  %1535 = vmatpush1.msra.mxu0 %v99
  %1536 = vmatprep.subr.mxu0 %v102
  %1537 = vmatpush1.msra.mxu0 %v101
  %1538 = vmatprep.subr.mxu0 %v104
  %1539 = vmatpush1.msra.mxu0 %v103
  %1540 = vmatprep.subr.mxu0 %v106
  %1541 = vmatpush1.msra.mxu0 %v105
  %1542 = vmatprep.subr.mxu0 %v108
  %1543 = vmatpush1.msra.mxu0 %v107
  %1544 = vmatprep.subr.mxu0 %v110
  %1545 = vmatpush1.msra.mxu0 %v109
  %1546 = vmatprep.subr.mxu0 0.0
  %1547 = vmatpush1.msra.mxu0 0.0
  %1548 = vmatprep.subr.mxu0 0.0
  %1549 = vmatpush1.msra.mxu0 0.0
  %1550 = vmatprep.subr.mxu0 0.0
  %1551 = vmatpush1.msra.mxu0 0.0
  %1552 = vmatprep.subr.mxu0 0.0
  %1553 = vmatpush1.msra.mxu0 0.0
  %1554 = vmatprep.subr.mxu0 0.0
  %1555 = vmatpush1.msra.mxu0 0.0
  %1556 = vmatprep.subr.mxu0 0.0
  %1557 = vmatpush1.msra.mxu0 0.0
  %1558 = vmatprep.subr.mxu0 0.0
  %1559 = vmatpush1.msra.mxu0 0.0
  %1560 = vmatprep.subr.mxu0 0.0
  %1561 = vmatpush1.msra.mxu0 0.0
  %1562 = vmatprep.subr.mxu0 0.0
  %1563 = vmatpush1.msra.mxu0 0.0
  %1564 = vmatprep.subr.mxu0 0.0
  %1565 = vmatpush1.msra.mxu0 0.0
  %1566 = vmatprep.subr.mxu0 0.0
  %1567 = vmatpush1.msra.mxu0 0.0
  %1568 = vmatprep.subr.mxu0 0.0
  %1569 = vmatpush1.msra.mxu0 0.0
  %1570 = vmatprep.subr.mxu0 0.0
  %1571 = vmatpush1.msra.mxu0 0.0
  %1572 = vmatprep.subr.mxu0 0.0
  %1573 = vmatpush1.msra.mxu0 0.0
  %1574 = vmatprep.subr.mxu0 0.0
  %1575 = vmatpush1.msra.mxu0 0.0
  %1576 = vmatprep.subr.mxu0 0.0
  %1577 = vmatpush1.msra.mxu0 0.0
  %1578 = vmatprep.subr.mxu0 0.0
  %1579 = vmatpush1.msra.mxu0 0.0
  %1580 = vmatprep.subr.mxu0 0.0
  %1581 = vmatpush1.msra.mxu0 0.0
  %1582 = vmatprep.subr.mxu0 0.0
  %1583 = vmatpush1.msra.mxu0 0.0
  %1584 = vmatprep.subr.mxu0 0.0
  %1585 = vmatpush1.msra.mxu0 0.0
  %1586 = vmatprep.subr.mxu0 0.0
  %1587 = vmatpush1.msra.mxu0 0.0
  %1588 = vmatprep.subr.mxu0 0.0
  %1589 = vmatpush1.msra.mxu0 0.0
  %1590 = vmatprep.subr.mxu0 0.0
  %1591 = vmatpush1.msra.mxu0 0.0
  %1592 = vmatprep.subr.mxu0 0.0
  %1593 = vmatpush1.msra.mxu0 0.0
  %1594 = vmatprep.mubr.f32.mxu0 0.0
  %1595 = vmatmul.mubr.f32.gmra.mrb[0].mxu0 %v526
  %v1596 = vpop.f32.mrb[0].mxu0
  %v1597 = vadd.f32 %v1523, %v1596
  %v1598 = vpop.f32.mrb[0].mxu0
  %v1599 = vadd.f32 %v1527, %v1598
  %1600 = vdwg.mxu0
  %v1601 = vadd.f32 %v1503, %v1597
  %v1602 = vxor.u32 %v1601, 2147483648
  %v1603 = vmul.f32 %v1602, 1.442695
  %v1604 = vpow.pop %v1603
  %v1605 = vadd.f32 %v1604, 1.0
  %v1606 = vrcp.pop %v1605
  %v1607 = vmul.f32 1.0, %v1606
  %v1608 = vmul.f32 %v1607, %v1599
  %v1609 = vadd.f32 %v1504, %v1608
  %v1610 = vtanh.pop %v1609
  %v1611 = vsub.f32 1.0, %v1607
  %1613 = vrot.lane.b32.xlu0 %v1610, 64
  %v1614 = vpop.permute.xlu0 %1613
  %v1616 = vmul.f32 %v1611, %v1614
  %v1617 = vmul.f32 %v1607, 0.0
  %v1618 = vadd.f32 %v1616, %v1617
  %1620 = vrot.lane.b32.xlu0 %v1618, 64
  %v1621 = vpop.permute.xlu0 %1620
  %v1622 = vsel %vm524, %v1621, 0
  %1624 = vmatprep.subr.mxu0 %v96
  %1625 = vmatpush1.msra.mxu0 %v95
  %1626 = vmatprep.subr.mxu0 %v98
  %1627 = vmatpush1.msra.mxu0 %v97
  %1628 = vmatprep.subr.mxu0 %v100
  %1629 = vmatpush1.msra.mxu0 %v99
  %1630 = vmatprep.subr.mxu0 %v102
  %1631 = vmatpush1.msra.mxu0 %v101
  %1632 = vmatprep.subr.mxu0 %v104
  %1633 = vmatpush1.msra.mxu0 %v103
  %1634 = vmatprep.subr.mxu0 %v106
  %1635 = vmatpush1.msra.mxu0 %v105
  %1636 = vmatprep.subr.mxu0 %v108
  %1637 = vmatpush1.msra.mxu0 %v107
  %1638 = vmatprep.subr.mxu0 %v110
  %1639 = vmatpush1.msra.mxu0 %v109
  %1640 = vmatprep.subr.mxu0 0.0
  %1641 = vmatpush1.msra.mxu0 0.0
  %1642 = vmatprep.subr.mxu0 0.0
  %1643 = vmatpush1.msra.mxu0 0.0
  %1644 = vmatprep.subr.mxu0 0.0
  %1645 = vmatpush1.msra.mxu0 0.0
  %1646 = vmatprep.subr.mxu0 0.0
  %1647 = vmatpush1.msra.mxu0 0.0
  %1648 = vmatprep.subr.mxu0 0.0
  %1649 = vmatpush1.msra.mxu0 0.0
  %1650 = vmatprep.subr.mxu0 0.0
  %1651 = vmatpush1.msra.mxu0 0.0
  %1652 = vmatprep.subr.mxu0 0.0
  %1653 = vmatpush1.msra.mxu0 0.0
  %1654 = vmatprep.subr.mxu0 0.0
  %1655 = vmatpush1.msra.mxu0 0.0
  %1656 = vmatprep.subr.mxu0 0.0
  %1657 = vmatpush1.msra.mxu0 0.0
  %1658 = vmatprep.subr.mxu0 0.0
  %1659 = vmatpush1.msra.mxu0 0.0
  %1660 = vmatprep.subr.mxu0 0.0
  %1661 = vmatpush1.msra.mxu0 0.0
  %1662 = vmatprep.subr.mxu0 0.0
  %1663 = vmatpush1.msra.mxu0 0.0
  %1664 = vmatprep.subr.mxu0 0.0
  %1665 = vmatpush1.msra.mxu0 0.0
  %1666 = vmatprep.subr.mxu0 0.0
  %1667 = vmatpush1.msra.mxu0 0.0
  %1668 = vmatprep.subr.mxu0 0.0
  %1669 = vmatpush1.msra.mxu0 0.0
  %1670 = vmatprep.subr.mxu0 0.0
  %1671 = vmatpush1.msra.mxu0 0.0
  %1672 = vmatprep.subr.mxu0 0.0
  %1673 = vmatpush1.msra.mxu0 0.0
  %1674 = vmatprep.subr.mxu0 0.0
  %1675 = vmatpush1.msra.mxu0 0.0
  %1676 = vmatprep.subr.mxu0 0.0
  %1677 = vmatpush1.msra.mxu0 0.0
  %1678 = vmatprep.subr.mxu0 0.0
  %1679 = vmatpush1.msra.mxu0 0.0
  %1680 = vmatprep.subr.mxu0 0.0
  %1681 = vmatpush1.msra.mxu0 0.0
  %1682 = vmatprep.subr.mxu0 0.0
  %1683 = vmatpush1.msra.mxu0 0.0
  %1684 = vmatprep.subr.mxu0 0.0
  %1685 = vmatpush1.msra.mxu0 0.0
  %1686 = vmatprep.subr.mxu0 0.0
  %1687 = vmatpush1.msra.mxu0 0.0
  %1688 = vmatprep.mubr.f32.mxu0 0.0
  %1689 = vmatmul.mubr.f32.gmra.mrb[0].mxu0 %v1622
  %v1690 = vpop.f32.mrb[0].mxu0
  %v1691 = vadd.f32 %v1523, %v1690
  %v1692 = vpop.f32.mrb[0].mxu0
  %v1693 = vadd.f32 %v1527, %v1692
  %1694 = vdwg.mxu0
  %v1695 = vadd.f32 %v1505, %v1691
  %v1696 = vxor.u32 %v1695, 2147483648
  %v1697 = vmul.f32 %v1696, 1.442695
  %v1698 = vpow.pop %v1697
  %v1699 = vadd.f32 %v1698, 1.0
  %v1700 = vrcp.pop %v1699
  %v1701 = vmul.f32 1.0, %v1700
  %v1702 = vmul.f32 %v1701, %v1693
  %v1703 = vadd.f32 %v1506, %v1702
  %v1704 = vtanh.pop %v1703
  %v1705 = vsub.f32 1.0, %v1701
  %1707 = vrot.lane.b32.xlu0 %v1704, 64
  %v1708 = vpop.permute.xlu0 %1707
  %v1710 = vmul.f32 %v1705, %v1708
  %v1711 = vmul.f32 %v1701, %v1618
  %v1712 = vadd.f32 %v1710, %v1711
  %1714 = vrot.lane.b32.xlu0 %v1712, 64
  %v1715 = vpop.permute.xlu0 %1714
  %v1716 = vsel %vm524, %v1715, 0
  %1718 = vmatprep.subr.mxu0 %v96
  %1719 = vmatpush1.msra.mxu0 %v95
  %1720 = vmatprep.subr.mxu0 %v98
  %1721 = vmatpush1.msra.mxu0 %v97
  %1722 = vmatprep.subr.mxu0 %v100
  %1723 = vmatpush1.msra.mxu0 %v99
  %1724 = vmatprep.subr.mxu0 %v102
  %1725 = vmatpush1.msra.mxu0 %v101
  %1726 = vmatprep.subr.mxu0 %v104
  %1727 = vmatpush1.msra.mxu0 %v103
  %1728 = vmatprep.subr.mxu0 %v106
  %1729 = vmatpush1.msra.mxu0 %v105
  %1730 = vmatprep.subr.mxu0 %v108
  %1731 = vmatpush1.msra.mxu0 %v107
  %1732 = vmatprep.subr.mxu0 %v110
  %1733 = vmatpush1.msra.mxu0 %v109
  %1734 = vmatprep.subr.mxu0 0.0
  %1735 = vmatpush1.msra.mxu0 0.0
  %1736 = vmatprep.subr.mxu0 0.0
  %1737 = vmatpush1.msra.mxu0 0.0
  %1738 = vmatprep.subr.mxu0 0.0
  %1739 = vmatpush1.msra.mxu0 0.0
  %1740 = vmatprep.subr.mxu0 0.0
  %1741 = vmatpush1.msra.mxu0 0.0
  %1742 = vmatprep.subr.mxu0 0.0
  %1743 = vmatpush1.msra.mxu0 0.0
  %1744 = vmatprep.subr.mxu0 0.0
  %1745 = vmatpush1.msra.mxu0 0.0
  %1746 = vmatprep.subr.mxu0 0.0
  %1747 = vmatpush1.msra.mxu0 0.0
  %1748 = vmatprep.subr.mxu0 0.0
  %1749 = vmatpush1.msra.mxu0 0.0
  %1750 = vmatprep.subr.mxu0 0.0
  %1751 = vmatpush1.msra.mxu0 0.0
  %1752 = vmatprep.subr.mxu0 0.0
  %1753 = vmatpush1.msra.mxu0 0.0
  %1754 = vmatprep.subr.mxu0 0.0
  %1755 = vmatpush1.msra.mxu0 0.0
  %1756 = vmatprep.subr.mxu0 0.0
  %1757 = vmatpush1.msra.mxu0 0.0
  %1758 = vmatprep.subr.mxu0 0.0
  %1759 = vmatpush1.msra.mxu0 0.0
  %1760 = vmatprep.subr.mxu0 0.0
  %1761 = vmatpush1.msra.mxu0 0.0
  %1762 = vmatprep.subr.mxu0 0.0
  %1763 = vmatpush1.msra.mxu0 0.0
  %1764 = vmatprep.subr.mxu0 0.0
  %1765 = vmatpush1.msra.mxu0 0.0
  %1766 = vmatprep.subr.mxu0 0.0
  %1767 = vmatpush1.msra.mxu0 0.0
  %1768 = vmatprep.subr.mxu0 0.0
  %1769 = vmatpush1.msra.mxu0 0.0
  %1770 = vmatprep.subr.mxu0 0.0
  %1771 = vmatpush1.msra.mxu0 0.0
  %1772 = vmatprep.subr.mxu0 0.0
  %1773 = vmatpush1.msra.mxu0 0.0
  %1774 = vmatprep.subr.mxu0 0.0
  %1775 = vmatpush1.msra.mxu0 0.0
  %1776 = vmatprep.subr.mxu0 0.0
  %1777 = vmatpush1.msra.mxu0 0.0
  %1778 = vmatprep.subr.mxu0 0.0
  %1779 = vmatpush1.msra.mxu0 0.0
  %1780 = vmatprep.subr.mxu0 0.0
  %1781 = vmatpush1.msra.mxu0 0.0
  %1782 = vmatprep.mubr.f32.mxu0 0.0
  %1783 = vmatmul.mubr.f32.gmra.mrb[0].mxu0 %v1716
  %v1784 = vpop.f32.mrb[0].mxu0
  %v1785 = vadd.f32 %v1523, %v1784
  %v1786 = vpop.f32.mrb[0].mxu0
  %v1787 = vadd.f32 %v1527, %v1786
  %1788 = vdwg.mxu0
  %v1789 = vadd.f32 %v1507, %v1785
  %v1790 = vxor.u32 %v1789, 2147483648
  %v1791 = vmul.f32 %v1790, 1.442695
  %v1792 = vpow.pop %v1791
  %v1793 = vadd.f32 %v1792, 1.0
  %v1794 = vrcp.pop %v1793
  %v1795 = vmul.f32 1.0, %v1794
  %v1796 = vmul.f32 %v1795, %v1787
  %v1797 = vadd.f32 %v1508, %v1796
  %v1798 = vtanh.pop %v1797
  %v1799 = vsub.f32 1.0, %v1795
  %1801 = vrot.lane.b32.xlu0 %v1798, 64
  %v1802 = vpop.permute.xlu0 %1801
  %v1804 = vmul.f32 %v1799, %v1802
  %v1805 = vmul.f32 %v1795, %v1712
  %v1806 = vadd.f32 %v1804, %v1805
  %1808 = vrot.lane.b32.xlu0 %v1806, 64
  %v1809 = vpop.permute.xlu0 %1808
  %v1810 = vsel %vm524, %v1809, 0
  %1812 = vmatprep.subr.mxu0 %v96
  %1813 = vmatpush1.msra.mxu0 %v95
  %1814 = vmatprep.subr.mxu0 %v98
  %1815 = vmatpush1.msra.mxu0 %v97
  %1816 = vmatprep.subr.mxu0 %v100
  %1817 = vmatpush1.msra.mxu0 %v99
  %1818 = vmatprep.subr.mxu0 %v102
  %1819 = vmatpush1.msra.mxu0 %v101
  %1820 = vmatprep.subr.mxu0 %v104
  %1821 = vmatpush1.msra.mxu0 %v103
  %1822 = vmatprep.subr.mxu0 %v106
  %1823 = vmatpush1.msra.mxu0 %v105
  %1824 = vmatprep.subr.mxu0 %v108
  %1825 = vmatpush1.msra.mxu0 %v107
  %1826 = vmatprep.subr.mxu0 %v110
  %1827 = vmatpush1.msra.mxu0 %v109
  %1828 = vmatprep.subr.mxu0 0.0
  %1829 = vmatpush1.msra.mxu0 0.0
  %1830 = vmatprep.subr.mxu0 0.0
  %1831 = vmatpush1.msra.mxu0 0.0
  %1832 = vmatprep.subr.mxu0 0.0
  %1833 = vmatpush1.msra.mxu0 0.0
  %1834 = vmatprep.subr.mxu0 0.0
  %1835 = vmatpush1.msra.mxu0 0.0
  %1836 = vmatprep.subr.mxu0 0.0
  %1837 = vmatpush1.msra.mxu0 0.0
  %1838 = vmatprep.subr.mxu0 0.0
  %1839 = vmatpush1.msra.mxu0 0.0
  %1840 = vmatprep.subr.mxu0 0.0
  %1841 = vmatpush1.msra.mxu0 0.0
  %1842 = vmatprep.subr.mxu0 0.0
  %1843 = vmatpush1.msra.mxu0 0.0
  %1844 = vmatprep.subr.mxu0 0.0
  %1845 = vmatpush1.msra.mxu0 0.0
  %1846 = vmatprep.subr.mxu0 0.0
  %1847 = vmatpush1.msra.mxu0 0.0
  %1848 = vmatprep.subr.mxu0 0.0
  %1849 = vmatpush1.msra.mxu0 0.0
  %1850 = vmatprep.subr.mxu0 0.0
  %1851 = vmatpush1.msra.mxu0 0.0
  %1852 = vmatprep.subr.mxu0 0.0
  %1853 = vmatpush1.msra.mxu0 0.0
  %1854 = vmatprep.subr.mxu0 0.0
  %1855 = vmatpush1.msra.mxu0 0.0
  %1856 = vmatprep.subr.mxu0 0.0
  %1857 = vmatpush1.msra.mxu0 0.0
  %1858 = vmatprep.subr.mxu0 0.0
  %1859 = vmatpush1.msra.mxu0 0.0
  %1860 = vmatprep.subr.mxu0 0.0
  %1861 = vmatpush1.msra.mxu0 0.0
  %1862 = vmatprep.subr.mxu0 0.0
  %1863 = vmatpush1.msra.mxu0 0.0
  %1864 = vmatprep.subr.mxu0 0.0
  %1865 = vmatpush1.msra.mxu0 0.0
  %1866 = vmatprep.subr.mxu0 0.0
  %1867 = vmatpush1.msra.mxu0 0.0
  %1868 = vmatprep.subr.mxu0 0.0
  %1869 = vmatpush1.msra.mxu0 0.0
  %1870 = vmatprep.subr.mxu0 0.0
  %1871 = vmatpush1.msra.mxu0 0.0
  %1872 = vmatprep.subr.mxu0 0.0
  %1873 = vmatpush1.msra.mxu0 0.0
  %1874 = vmatprep.subr.mxu0 0.0
  %1875 = vmatpush1.msra.mxu0 0.0
  %1876 = vmatprep.mubr.f32.mxu0 0.0
  %1877 = vmatmul.mubr.f32.gmra.mrb[0].mxu0 %v1810
  %v1878 = vpop.f32.mrb[0].mxu0
  %v1879 = vadd.f32 %v1523, %v1878
  %v1880 = vpop.f32.mrb[0].mxu0
  %v1881 = vadd.f32 %v1527, %v1880
  %1882 = vdwg.mxu0
  %v1883 = vadd.f32 %v1509, %v1879
  %v1884 = vxor.u32 %v1883, 2147483648
  %v1885 = vmul.f32 %v1884, 1.442695
  %v1886 = vpow.pop %v1885
  %v1887 = vadd.f32 %v1886, 1.0
  %v1888 = vrcp.pop %v1887
  %v1889 = vmul.f32 1.0, %v1888
  %v1890 = vmul.f32 %v1889, %v1881
  %v1891 = vadd.f32 %v1510, %v1890
  %v1892 = vtanh.pop %v1891
  %v1893 = vsub.f32 1.0, %v1889
  %1895 = vrot.lane.b32.xlu0 %v1892, 64
  %v1896 = vpop.permute.xlu0 %1895
  %v1898 = vmul.f32 %v1893, %v1896
  %v1899 = vmul.f32 %v1889, %v1806
  %v1900 = vadd.f32 %v1898, %v1899
  %1902 = vrot.lane.b32.xlu0 %v1900, 64
  %v1903 = vpop.permute.xlu0 %1902
  %v1904 = vsel %vm524, %v1903, 0
  %1906 = vmatprep.subr.mxu0 %v96
  %1907 = vmatpush1.msra.mxu0 %v95
  %1908 = vmatprep.subr.mxu0 %v98
  %1909 = vmatpush1.msra.mxu0 %v97
  %1910 = vmatprep.subr.mxu0 %v100
  %1911 = vmatpush1.msra.mxu0 %v99
  %1912 = vmatprep.subr.mxu0 %v102
  %1913 = vmatpush1.msra.mxu0 %v101
  %1914 = vmatprep.subr.mxu0 %v104
  %1915 = vmatpush1.msra.mxu0 %v103
  %1916 = vmatprep.subr.mxu0 %v106
  %1917 = vmatpush1.msra.mxu0 %v105
  %1918 = vmatprep.subr.mxu0 %v108
  %1919 = vmatpush1.msra.mxu0 %v107
  %1920 = vmatprep.subr.mxu0 %v110
  %1921 = vmatpush1.msra.mxu0 %v109
  %1922 = vmatprep.subr.mxu0 0.0
  %1923 = vmatpush1.msra.mxu0 0.0
  %1924 = vmatprep.subr.mxu0 0.0
  %1925 = vmatpush1.msra.mxu0 0.0
  %1926 = vmatprep.subr.mxu0 0.0
  %1927 = vmatpush1.msra.mxu0 0.0
  %1928 = vmatprep.subr.mxu0 0.0
  %1929 = vmatpush1.msra.mxu0 0.0
  %1930 = vmatprep.subr.mxu0 0.0
  %1931 = vmatpush1.msra.mxu0 0.0
  %1932 = vmatprep.subr.mxu0 0.0
  %1933 = vmatpush1.msra.mxu0 0.0
  %1934 = vmatprep.subr.mxu0 0.0
  %1935 = vmatpush1.msra.mxu0 0.0
  %1936 = vmatprep.subr.mxu0 0.0
  %1937 = vmatpush1.msra.mxu0 0.0
  %1938 = vmatprep.subr.mxu0 0.0
  %1939 = vmatpush1.msra.mxu0 0.0
  %1940 = vmatprep.subr.mxu0 0.0
  %1941 = vmatpush1.msra.mxu0 0.0
  %1942 = vmatprep.subr.mxu0 0.0
  %1943 = vmatpush1.msra.mxu0 0.0
  %1944 = vmatprep.subr.mxu0 0.0
  %1945 = vmatpush1.msra.mxu0 0.0
  %1946 = vmatprep.subr.mxu0 0.0
  %1947 = vmatpush1.msra.mxu0 0.0
  %1948 = vmatprep.subr.mxu0 0.0
  %1949 = vmatpush1.msra.mxu0 0.0
  %1950 = vmatprep.subr.mxu0 0.0
  %1951 = vmatpush1.msra.mxu0 0.0
  %1952 = vmatprep.subr.mxu0 0.0
  %1953 = vmatpush1.msra.mxu0 0.0
  %1954 = vmatprep.subr.mxu0 0.0
  %1955 = vmatpush1.msra.mxu0 0.0
  %1956 = vmatprep.subr.mxu0 0.0
  %1957 = vmatpush1.msra.mxu0 0.0
  %1958 = vmatprep.subr.mxu0 0.0
  %1959 = vmatpush1.msra.mxu0 0.0
  %1960 = vmatprep.subr.mxu0 0.0
  %1961 = vmatpush1.msra.mxu0 0.0
  %1962 = vmatprep.subr.mxu0 0.0
  %1963 = vmatpush1.msra.mxu0 0.0
  %1964 = vmatprep.subr.mxu0 0.0
  %1965 = vmatpush1.msra.mxu0 0.0
  %1966 = vmatprep.subr.mxu0 0.0
  %1967 = vmatpush1.msra.mxu0 0.0
  %1968 = vmatprep.subr.mxu0 0.0
  %1969 = vmatpush1.msra.mxu0 0.0
  %1970 = vmatprep.mubr.f32.mxu0 0.0
  %1971 = vmatmul.mubr.f32.gmra.mrb[0].mxu0 %v1904
  %v1972 = vpop.f32.mrb[0].mxu0
  %v1973 = vadd.f32 %v1523, %v1972
  %v1974 = vpop.f32.mrb[0].mxu0
  %v1975 = vadd.f32 %v1527, %v1974
  %1976 = vdwg.mxu0
  %v1977 = vadd.f32 %v1511, %v1973
  %v1978 = vxor.u32 %v1977, 2147483648
  %v1979 = vmul.f32 %v1978, 1.442695
  %v1980 = vpow.pop %v1979
  %v1981 = vadd.f32 %v1980, 1.0
  %v1982 = vrcp.pop %v1981
  %v1983 = vmul.f32 1.0, %v1982
  %v1984 = vmul.f32 %v1983, %v1975
  %v1985 = vadd.f32 %v1512, %v1984
  %v1986 = vtanh.pop %v1985
  %v1987 = vsub.f32 1.0, %v1983
  %1989 = vrot.lane.b32.xlu0 %v1986, 64
  %v1990 = vpop.permute.xlu0 %1989
  %v1992 = vmul.f32 %v1987, %v1990
  %v1993 = vmul.f32 %v1983, %v1900
  %v1994 = vadd.f32 %v1992, %v1993
  %1996 = vrot.lane.b32.xlu0 %v1994, 64
  %v1997 = vpop.permute.xlu0 %1996
  %v1998 = vsel %vm524, %v1997, 0
  %2000 = vmatprep.subr.mxu0 %v96
  %2001 = vmatpush1.msra.mxu0 %v95
  %2002 = vmatprep.subr.mxu0 %v98
  %2003 = vmatpush1.msra.mxu0 %v97
  %2004 = vmatprep.subr.mxu0 %v100
  %2005 = vmatpush1.msra.mxu0 %v99
  %2006 = vmatprep.subr.mxu0 %v102
  %2007 = vmatpush1.msra.mxu0 %v101
  %2008 = vmatprep.subr.mxu0 %v104
  %2009 = vmatpush1.msra.mxu0 %v103
  %2010 = vmatprep.subr.mxu0 %v106
  %2011 = vmatpush1.msra.mxu0 %v105
  %2012 = vmatprep.subr.mxu0 %v108
  %2013 = vmatpush1.msra.mxu0 %v107
  %2014 = vmatprep.subr.mxu0 %v110
  %2015 = vmatpush1.msra.mxu0 %v109
  %2016 = vmatprep.subr.mxu0 0.0
  %2017 = vmatpush1.msra.mxu0 0.0
  %2018 = vmatprep.subr.mxu0 0.0
  %2019 = vmatpush1.msra.mxu0 0.0
  %2020 = vmatprep.subr.mxu0 0.0
  %2021 = vmatpush1.msra.mxu0 0.0
  %2022 = vmatprep.subr.mxu0 0.0
  %2023 = vmatpush1.msra.mxu0 0.0
  %2024 = vmatprep.subr.mxu0 0.0
  %2025 = vmatpush1.msra.mxu0 0.0
  %2026 = vmatprep.subr.mxu0 0.0
  %2027 = vmatpush1.msra.mxu0 0.0
  %2028 = vmatprep.subr.mxu0 0.0
  %2029 = vmatpush1.msra.mxu0 0.0
  %2030 = vmatprep.subr.mxu0 0.0
  %2031 = vmatpush1.msra.mxu0 0.0
  %2032 = vmatprep.subr.mxu0 0.0
  %2033 = vmatpush1.msra.mxu0 0.0
  %2034 = vmatprep.subr.mxu0 0.0
  %2035 = vmatpush1.msra.mxu0 0.0
  %2036 = vmatprep.subr.mxu0 0.0
  %2037 = vmatpush1.msra.mxu0 0.0
  %2038 = vmatprep.subr.mxu0 0.0
  %2039 = vmatpush1.msra.mxu0 0.0
  %2040 = vmatprep.subr.mxu0 0.0
  %2041 = vmatpush1.msra.mxu0 0.0
  %2042 = vmatprep.subr.mxu0 0.0
  %2043 = vmatpush1.msra.mxu0 0.0
  %2044 = vmatprep.subr.mxu0 0.0
  %2045 = vmatpush1.msra.mxu0 0.0
  %2046 = vmatprep.subr.mxu0 0.0
  %2047 = vmatpush1.msra.mxu0 0.0
  %2048 = vmatprep.subr.mxu0 0.0
  %2049 = vmatpush1.msra.mxu0 0.0
  %2050 = vmatprep.subr.mxu0 0.0
  %2051 = vmatpush1.msra.mxu0 0.0
  %2052 = vmatprep.subr.mxu0 0.0
  %2053 = vmatpush1.msra.mxu0 0.0
  %2054 = vmatprep.subr.mxu0 0.0
  %2055 = vmatpush1.msra.mxu0 0.0
  %2056 = vmatprep.subr.mxu0 0.0
  %2057 = vmatpush1.msra.mxu0 0.0
  %2058 = vmatprep.subr.mxu0 0.0
  %2059 = vmatpush1.msra.mxu0 0.0
  %2060 = vmatprep.subr.mxu0 0.0
  %2061 = vmatpush1.msra.mxu0 0.0
  %2062 = vmatprep.subr.mxu0 0.0
  %2063 = vmatpush1.msra.mxu0 0.0
  %2064 = vmatprep.mubr.f32.mxu0 0.0
  %2065 = vmatmul.mubr.f32.gmra.mrb[0].mxu0 %v1998
  %v2066 = vpop.f32.mrb[0].mxu0
  %v2067 = vadd.f32 %v1523, %v2066
  %v2068 = vpop.f32.mrb[0].mxu0
  %v2069 = vadd.f32 %v1527, %v2068
  %2070 = vdwg.mxu0
  %v2071 = vadd.f32 %v1513, %v2067
  %v2072 = vxor.u32 %v2071, 2147483648
  %v2073 = vmul.f32 %v2072, 1.442695
  %v2074 = vpow.pop %v2073
  %v2075 = vadd.f32 %v2074, 1.0
  %v2076 = vrcp.pop %v2075
  %v2077 = vmul.f32 1.0, %v2076
  %v2078 = vmul.f32 %v2077, %v2069
  %v2079 = vadd.f32 %v1514, %v2078
  %v2080 = vtanh.pop %v2079
  %v2081 = vsub.f32 1.0, %v2077
  %2083 = vrot.lane.b32.xlu0 %v2080, 64
  %v2084 = vpop.permute.xlu0 %2083
  %v2086 = vmul.f32 %v2081, %v2084
  %v2087 = vmul.f32 %v2077, %v1994
  %v2088 = vadd.f32 %v2086, %v2087
  %2090 = vrot.lane.b32.xlu0 %v2088, 64
  %v2091 = vpop.permute.xlu0 %2090
  %v2092 = vsel %vm524, %v2091, 0
  %2094 = vmatprep.subr.mxu0 %v96
  %2095 = vmatpush1.msra.mxu0 %v95
  %2096 = vmatprep.subr.mxu0 %v98
  %2097 = vmatpush1.msra.mxu0 %v97
  %2098 = vmatprep.subr.mxu0 %v100
  %2099 = vmatpush1.msra.mxu0 %v99
  %2100 = vmatprep.subr.mxu0 %v102
  %2101 = vmatpush1.msra.mxu0 %v101
  %2102 = vmatprep.subr.mxu0 %v104
  %2103 = vmatpush1.msra.mxu0 %v103
  %2104 = vmatprep.subr.mxu0 %v106
  %2105 = vmatpush1.msra.mxu0 %v105
  %2106 = vmatprep.subr.mxu0 %v108
  %2107 = vmatpush1.msra.mxu0 %v107
  %2108 = vmatprep.subr.mxu0 %v110
  %2109 = vmatpush1.msra.mxu0 %v109
  %2110 = vmatprep.subr.mxu0 0.0
  %2111 = vmatpush1.msra.mxu0 0.0
  %2112 = vmatprep.subr.mxu0 0.0
  %2113 = vmatpush1.msra.mxu0 0.0
  %2114 = vmatprep.subr.mxu0 0.0
  %2115 = vmatpush1.msra.mxu0 0.0
  %2116 = vmatprep.subr.mxu0 0.0
  %2117 = vmatpush1.msra.mxu0 0.0
  %2118 = vmatprep.subr.mxu0 0.0
  %2119 = vmatpush1.msra.mxu0 0.0
  %2120 = vmatprep.subr.mxu0 0.0
  %2121 = vmatpush1.msra.mxu0 0.0
  %2122 = vmatprep.subr.mxu0 0.0
  %2123 = vmatpush1.msra.mxu0 0.0
  %2124 = vmatprep.subr.mxu0 0.0
  %2125 = vmatpush1.msra.mxu0 0.0
  %2126 = vmatprep.subr.mxu0 0.0
  %2127 = vmatpush1.msra.mxu0 0.0
  %2128 = vmatprep.subr.mxu0 0.0
  %2129 = vmatpush1.msra.mxu0 0.0
  %2130 = vmatprep.subr.mxu0 0.0
  %2131 = vmatpush1.msra.mxu0 0.0
  %2132 = vmatprep.subr.mxu0 0.0
  %2133 = vmatpush1.msra.mxu0 0.0
  %2134 = vmatprep.subr.mxu0 0.0
  %2135 = vmatpush1.msra.mxu0 0.0
  %2136 = vmatprep.subr.mxu0 0.0
  %2137 = vmatpush1.msra.mxu0 0.0
  %2138 = vmatprep.subr.mxu0 0.0
  %2139 = vmatpush1.msra.mxu0 0.0
  %2140 = vmatprep.subr.mxu0 0.0
  %2141 = vmatpush1.msra.mxu0 0.0
  %2142 = vmatprep.subr.mxu0 0.0
  %2143 = vmatpush1.msra.mxu0 0.0
  %2144 = vmatprep.subr.mxu0 0.0
  %2145 = vmatpush1.msra.mxu0 0.0
  %2146 = vmatprep.subr.mxu0 0.0
  %2147 = vmatpush1.msra.mxu0 0.0
  %2148 = vmatprep.subr.mxu0 0.0
  %2149 = vmatpush1.msra.mxu0 0.0
  %2150 = vmatprep.subr.mxu0 0.0
  %2151 = vmatpush1.msra.mxu0 0.0
  %2152 = vmatprep.subr.mxu0 0.0
  %2153 = vmatpush1.msra.mxu0 0.0
  %2154 = vmatprep.subr.mxu0 0.0
  %2155 = vmatpush1.msra.mxu0 0.0
  %2156 = vmatprep.subr.mxu0 0.0
  %2157 = vmatpush1.msra.mxu0 0.0
  %2158 = vmatprep.mubr.f32.mxu0 0.0
  %2159 = vmatmul.mubr.f32.gmra.mrb[0].mxu0 %v2092
  %v2160 = vpop.f32.mrb[0].mxu0
  %v2161 = vadd.f32 %v1523, %v2160
  %v2162 = vpop.f32.mrb[0].mxu0
  %v2163 = vadd.f32 %v1527, %v2162
  %2164 = vdwg.mxu0
  %v2165 = vadd.f32 %v1515, %v2161
  %v2166 = vxor.u32 %v2165, 2147483648
  %v2167 = vmul.f32 %v2166, 1.442695
  %v2168 = vpow.pop %v2167
  %v2169 = vadd.f32 %v2168, 1.0
  %v2170 = vrcp.pop %v2169
  %v2171 = vmul.f32 1.0, %v2170
  %v2172 = vmul.f32 %v2171, %v2163
  %v2173 = vadd.f32 %v1516, %v2172
  %v2174 = vtanh.pop %v2173
  %v2175 = vsub.f32 1.0, %v2171
  %2177 = vrot.lane.b32.xlu0 %v2174, 64
  %v2178 = vpop.permute.xlu0 %2177
  %v2180 = vmul.f32 %v2175, %v2178
  %v2181 = vmul.f32 %v2171, %v2088
  %v2182 = vadd.f32 %v2180, %v2181
  %2184 = vrot.lane.b32.xlu0 %v2182, 64
  %v2185 = vpop.permute.xlu0 %2184
  %v2186 = vsel %vm524, %v2185, 0
  %2188 = vmatprep.subr.mxu0 %v96
  %2189 = vmatpush1.msra.mxu0 %v95
  %2190 = vmatprep.subr.mxu0 %v98
  %2191 = vmatpush1.msra.mxu0 %v97
  %2192 = vmatprep.subr.mxu0 %v100
  %2193 = vmatpush1.msra.mxu0 %v99
  %2194 = vmatprep.subr.mxu0 %v102
  %2195 = vmatpush1.msra.mxu0 %v101
  %2196 = vmatprep.subr.mxu0 %v104
  %2197 = vmatpush1.msra.mxu0 %v103
  %2198 = vmatprep.subr.mxu0 %v106
  %2199 = vmatpush1.msra.mxu0 %v105
  %2200 = vmatprep.subr.mxu0 %v108
  %2201 = vmatpush1.msra.mxu0 %v107
  %2202 = vmatprep.subr.mxu0 %v110
  %2203 = vmatpush1.msra.mxu0 %v109
  %2204 = vmatprep.subr.mxu0 0.0
  %2205 = vmatpush1.msra.mxu0 0.0
  %2206 = vmatprep.subr.mxu0 0.0
  %2207 = vmatpush1.msra.mxu0 0.0
  %2208 = vmatprep.subr.mxu0 0.0
  %2209 = vmatpush1.msra.mxu0 0.0
  %2210 = vmatprep.subr.mxu0 0.0
  %2211 = vmatpush1.msra.mxu0 0.0
  %2212 = vmatprep.subr.mxu0 0.0
  %2213 = vmatpush1.msra.mxu0 0.0
  %2214 = vmatprep.subr.mxu0 0.0
  %2215 = vmatpush1.msra.mxu0 0.0
  %2216 = vmatprep.subr.mxu0 0.0
  %2217 = vmatpush1.msra.mxu0 0.0
  %2218 = vmatprep.subr.mxu0 0.0
  %2219 = vmatpush1.msra.mxu0 0.0
  %2220 = vmatprep.subr.mxu0 0.0
  %2221 = vmatpush1.msra.mxu0 0.0
  %2222 = vmatprep.subr.mxu0 0.0
  %2223 = vmatpush1.msra.mxu0 0.0
  %2224 = vmatprep.subr.mxu0 0.0
  %2225 = vmatpush1.msra.mxu0 0.0
  %2226 = vmatprep.subr.mxu0 0.0
  %2227 = vmatpush1.msra.mxu0 0.0
  %2228 = vmatprep.subr.mxu0 0.0
  %2229 = vmatpush1.msra.mxu0 0.0
  %2230 = vmatprep.subr.mxu0 0.0
  %2231 = vmatpush1.msra.mxu0 0.0
  %2232 = vmatprep.subr.mxu0 0.0
  %2233 = vmatpush1.msra.mxu0 0.0
  %2234 = vmatprep.subr.mxu0 0.0
  %2235 = vmatpush1.msra.mxu0 0.0
  %2236 = vmatprep.subr.mxu0 0.0
  %2237 = vmatpush1.msra.mxu0 0.0
  %2238 = vmatprep.subr.mxu0 0.0
  %2239 = vmatpush1.msra.mxu0 0.0
  %2240 = vmatprep.subr.mxu0 0.0
  %2241 = vmatpush1.msra.mxu0 0.0
  %2242 = vmatprep.subr.mxu0 0.0
  %2243 = vmatpush1.msra.mxu0 0.0
  %2244 = vmatprep.subr.mxu0 0.0
  %2245 = vmatpush1.msra.mxu0 0.0
  %2246 = vmatprep.subr.mxu0 0.0
  %2247 = vmatpush1.msra.mxu0 0.0
  %2248 = vmatprep.subr.mxu0 0.0
  %2249 = vmatpush1.msra.mxu0 0.0
  %2250 = vmatprep.subr.mxu0 0.0
  %2251 = vmatpush1.msra.mxu0 0.0
  %2252 = vmatprep.mubr.f32.mxu0 0.0
  %2253 = vmatmul.mubr.f32.gmra.mrb[0].mxu0 %v2186
  %v2254 = vpop.f32.mrb[0].mxu0
  %v2255 = vadd.f32 %v1523, %v2254
  %v2256 = vpop.f32.mrb[0].mxu0
  %v2257 = vadd.f32 %v1527, %v2256
  %2258 = vdwg.mxu0
  %v2259 = vadd.f32 %v1517, %v2255
  %v2260 = vxor.u32 %v2259, 2147483648
  %v2261 = vmul.f32 %v2260, 1.442695
  %v2262 = vpow.pop %v2261
  %v2263 = vadd.f32 %v2262, 1.0
  %v2264 = vrcp.pop %v2263
  %v2265 = vmul.f32 1.0, %v2264
  %v2266 = vmul.f32 %v2265, %v2257
  %v2267 = vadd.f32 %v1518, %v2266
  %v2268 = vtanh.pop %v2267
  %v2269 = vsub.f32 1.0, %v2265
  %2271 = vrot.lane.b32.xlu0 %v2268, 64
  %v2272 = vpop.permute.xlu0 %2271
  %v2274 = vmul.f32 %v2269, %v2272
  %v2275 = vmul.f32 %v2265, %v2182
  %v2276 = vadd.f32 %v2274, %v2275
  %2278 = vrot.lane.b32.xlu0 %v2276, 64
  %v2279 = vpop.permute.xlu0 %2278
  %v2288 = vsel %vm1324, %v1621, %v2279
  %v2289 = vsel %vm1324, %v1715, %v2185
  %v2290 = vsel %vm1324, %v1809, %v2091
  %v2291 = vsel %vm1324, %v1903, %v1997
  %v2292 = vsel %vm1324, %v1997, %v1903
  %v2293 = vsel %vm1324, %v2091, %v1809
  %v2294 = vsel %vm1324, %v2185, %v1715
  %v2295 = vsel %vm1324, %v2279, %v1621
  %2297 = vset.pattern.permute.xlu0 0
  %2298 = vperm.xlu0 %2297, %v38
  %v2299 = vpop.permute.xlu0 %2298
  %2302 = vset.pattern.permute.xlu0 0
  %2303 = vperm.xlu0 %2302, %v39
  %v2304 = vpop.permute.xlu0 %2303
  %2307 = vset.pattern.permute.xlu0 0
  %2308 = vperm.xlu0 %2307, %v40
  %v2309 = vpop.permute.xlu0 %2308
  %2312 = vset.pattern.permute.xlu0 0
  %2313 = vperm.xlu0 %2312, %v41
  %v2314 = vpop.permute.xlu0 %2313
  %2317 = vset.pattern.permute.xlu0 0
  %2318 = vperm.xlu0 %2317, %v42
  %v2319 = vpop.permute.xlu0 %2318
  %2322 = vset.pattern.permute.xlu0 0
  %2323 = vperm.xlu0 %2322, %v43
  %v2324 = vpop.permute.xlu0 %2323
  %2327 = vset.pattern.permute.xlu0 0
  %2328 = vperm.xlu0 %2327, %v44
  %v2329 = vpop.permute.xlu0 %2328
  %2332 = vset.pattern.permute.xlu0 0
  %2333 = vperm.xlu0 %2332, %v45
  %v2334 = vpop.permute.xlu0 %2333
  %v2336 = vmul.f32 %v1336, %v2299
  %v2337 = vmul.f32 %v1337, %v2304
  %v2338 = vmul.f32 %v1338, %v2309
  %v2339 = vmul.f32 %v1339, %v2314
  %v2340 = vmul.f32 %v1340, %v2319
  %v2341 = vmul.f32 %v1341, %v2324
  %v2342 = vmul.f32 %v1342, %v2329
  %v2343 = vmul.f32 %v1343, %v2334
  %v2344 = vmul.f32 %v2288, %v2299
  %v2345 = vmul.f32 %v2289, %v2304
  %v2346 = vmul.f32 %v2290, %v2309
  %v2347 = vmul.f32 %v2291, %v2314
  %v2348 = vmul.f32 %v2292, %v2319
  %v2349 = vmul.f32 %v2293, %v2324
  %v2350 = vmul.f32 %v2294, %v2329
  %v2351 = vmul.f32 %v2295, %v2334
  %v2352 = vlaneseq
  %v2353 = vshrl.u32 %v2352, 7
  %v2354 = vsub.s32 0, %v2353
  %v2355 = vrot.slane %v115, %v2354
  %v2356 = vmul.f32 %v2336, %v2355
  %v2357 = vmul.f32 %v2337, %v2355
  %v2358 = vmul.f32 %v2338, %v2355
  %v2359 = vmul.f32 %v2339, %v2355
  %v2360 = vmul.f32 %v2340, %v2355
  %v2361 = vmul.f32 %v2341, %v2355
  %v2362 = vmul.f32 %v2342, %v2355
  %v2363 = vmul.f32 %v2343, %v2355
  %v2364 = vsel %vm524, %v2356, 0.0
  %2365 = vadd.xlane.f32.xlu0 %v2364
  %v2366 = vpop.xlane.xlu0 %2365
  %v2367 = vsel %vm524, %v2357, 0.0
  %2368 = vadd.xlane.f32.xlu0 %v2367
  %v2369 = vpop.xlane.xlu0 %2368
  %v2370 = vsel %vm524, %v2358, 0.0
  %2371 = vadd.xlane.f32.xlu0 %v2370
  %v2372 = vpop.xlane.xlu0 %2371
  %v2373 = vsel %vm524, %v2359, 0.0
  %2374 = vadd.xlane.f32.xlu0 %v2373
  %v2375 = vpop.xlane.xlu0 %2374
  %v2376 = vsel %vm524, %v2360, 0.0
  %2377 = vadd.xlane.f32.xlu0 %v2376
  %v2378 = vpop.xlane.xlu0 %2377
  %v2379 = vsel %vm524, %v2361, 0.0
  %2380 = vadd.xlane.f32.xlu0 %v2379
  %v2381 = vpop.xlane.xlu0 %2380
  %v2382 = vsel %vm524, %v2362, 0.0
  %2383 = vadd.xlane.f32.xlu0 %v2382
  %v2384 = vpop.xlane.xlu0 %2383
  %v2385 = vsel %vm524, %v2363, 0.0
  %2386 = vadd.xlane.f32.xlu0 %v2385
  %v2387 = vpop.xlane.xlu0 %2386
  %v2388 = vadd.f32 %v2366, %v116
  %v2389 = vadd.f32 %v2369, %v117
  %v2390 = vadd.f32 %v2372, %v118
  %v2391 = vadd.f32 %v2375, %v119
  %v2392 = vadd.f32 %v2378, %v120
  %v2393 = vadd.f32 %v2381, %v121
  %v2394 = vadd.f32 %v2384, %v122
  %v2395 = vadd.f32 %v2387, %v123
  %v2396 = vtanh.pop %v2388
  %v2397 = vtanh.pop %v2389
  %v2398 = vtanh.pop %v2390
  %v2399 = vtanh.pop %v2391
  %v2400 = vtanh.pop %v2392
  %v2401 = vtanh.pop %v2393
  %v2402 = vtanh.pop %v2394
  %v2403 = vtanh.pop %v2395
  %v2404 = vmul.f32 %v2396, 1.442695
  %v2405 = vpow.pop %v2404
  %v2406 = vmul.f32 %v2397, 1.442695
  %v2407 = vpow.pop %v2406
  %v2408 = vmul.f32 %v2398, 1.442695
  %v2409 = vpow.pop %v2408
  %v2410 = vmul.f32 %v2399, 1.442695
  %v2411 = vpow.pop %v2410
  %v2412 = vmul.f32 %v2400, 1.442695
  %v2413 = vpow.pop %v2412
  %v2414 = vmul.f32 %v2401, 1.442695
  %v2415 = vpow.pop %v2414
  %v2416 = vmul.f32 %v2402, 1.442695
  %v2417 = vpow.pop %v2416
  %v2418 = vmul.f32 %v2403, 1.442695
  %v2419 = vpow.pop %v2418
  %2421 = vset.pattern.permute.xlu0 0
  %2422 = vperm.xlu0 %2421, %v2405
  %v2423 = vpop.permute.xlu0 %2422
  %2426 = vset.pattern.permute.xlu0 0
  %2427 = vperm.xlu0 %2426, %v2407
  %v2428 = vpop.permute.xlu0 %2427
  %2431 = vset.pattern.permute.xlu0 0
  %2432 = vperm.xlu0 %2431, %v2409
  %v2433 = vpop.permute.xlu0 %2432
  %2436 = vset.pattern.permute.xlu0 0
  %2437 = vperm.xlu0 %2436, %v2411
  %v2438 = vpop.permute.xlu0 %2437
  %2441 = vset.pattern.permute.xlu0 0
  %2442 = vperm.xlu0 %2441, %v2413
  %v2443 = vpop.permute.xlu0 %2442
  %2446 = vset.pattern.permute.xlu0 0
  %2447 = vperm.xlu0 %2446, %v2415
  %v2448 = vpop.permute.xlu0 %2447
  %2451 = vset.pattern.permute.xlu0 0
  %2452 = vperm.xlu0 %2451, %v2417
  %v2453 = vpop.permute.xlu0 %2452
  %2456 = vset.pattern.permute.xlu0 0
  %2457 = vperm.xlu0 %2456, %v2419
  %v2458 = vpop.permute.xlu0 %2457
  %v2460 = vmul.f32 %v2336, %v2423
  %v2461 = vmul.f32 %v2337, %v2428
  %v2462 = vmul.f32 %v2338, %v2433
  %v2463 = vmul.f32 %v2339, %v2438
  %v2464 = vmul.f32 %v2340, %v2443
  %v2465 = vmul.f32 %v2341, %v2448
  %v2466 = vmul.f32 %v2342, %v2453
  %v2467 = vmul.f32 %v2343, %v2458
  %v2469 = vsel %vm524, %v147, 0
  %2471 = vmatprep.subr.mxu0 0.0
  %2472 = vmatpush1.msra.mxu0 %v2460
  %2473 = vmatprep.subr.mxu0 0.0
  %2474 = vmatpush1.msra.mxu0 %v2461
  %2475 = vmatprep.subr.mxu0 0.0
  %2476 = vmatpush1.msra.mxu0 %v2462
  %2477 = vmatprep.subr.mxu0 0.0
  %2478 = vmatpush1.msra.mxu0 %v2463
  %2479 = vmatprep.subr.mxu0 0.0
  %2480 = vmatpush1.msra.mxu0 %v2464
  %2481 = vmatprep.subr.mxu0 0.0
  %2482 = vmatpush1.msra.mxu0 %v2465
  %2483 = vmatprep.subr.mxu0 0.0
  %2484 = vmatpush1.msra.mxu0 %v2466
  %2485 = vmatprep.subr.mxu0 0.0
  %2486 = vmatpush1.msra.mxu0 %v2467
  %2487 = vmatprep.subr.mxu0 0.0
  %2488 = vmatpush1.msra.mxu0 0.0
  %2489 = vmatprep.subr.mxu0 0.0
  %2490 = vmatpush1.msra.mxu0 0.0
  %2491 = vmatprep.subr.mxu0 0.0
  %2492 = vmatpush1.msra.mxu0 0.0
  %2493 = vmatprep.subr.mxu0 0.0
  %2494 = vmatpush1.msra.mxu0 0.0
  %2495 = vmatprep.subr.mxu0 0.0
  %2496 = vmatpush1.msra.mxu0 0.0
  %2497 = vmatprep.subr.mxu0 0.0
  %2498 = vmatpush1.msra.mxu0 0.0
  %2499 = vmatprep.subr.mxu0 0.0
  %2500 = vmatpush1.msra.mxu0 0.0
  %2501 = vmatprep.subr.mxu0 0.0
  %2502 = vmatpush1.msra.mxu0 0.0
  %2503 = vmatprep.subr.mxu0 0.0
  %2504 = vmatpush1.msra.mxu0 0.0
  %2505 = vmatprep.subr.mxu0 0.0
  %2506 = vmatpush1.msra.mxu0 0.0
  %2507 = vmatprep.subr.mxu0 0.0
  %2508 = vmatpush1.msra.mxu0 0.0
  %2509 = vmatprep.subr.mxu0 0.0
  %2510 = vmatpush1.msra.mxu0 0.0
  %2511 = vmatprep.subr.mxu0 0.0
  %2512 = vmatpush1.msra.mxu0 0.0
  %2513 = vmatprep.subr.mxu0 0.0
  %2514 = vmatpush1.msra.mxu0 0.0
  %2515 = vmatprep.subr.mxu0 0.0
  %2516 = vmatpush1.msra.mxu0 0.0
  %2517 = vmatprep.subr.mxu0 0.0
  %2518 = vmatpush1.msra.mxu0 0.0
  %2519 = vmatprep.subr.mxu0 0.0
  %2520 = vmatpush1.msra.mxu0 0.0
  %2521 = vmatprep.subr.mxu0 0.0
  %2522 = vmatpush1.msra.mxu0 0.0
  %2523 = vmatprep.subr.mxu0 0.0
  %2524 = vmatpush1.msra.mxu0 0.0
  %2525 = vmatprep.subr.mxu0 0.0
  %2526 = vmatpush1.msra.mxu0 0.0
  %2527 = vmatprep.subr.mxu0 0.0
  %2528 = vmatpush1.msra.mxu0 0.0
  %2529 = vmatprep.subr.mxu0 0.0
  %2530 = vmatpush1.msra.mxu0 0.0
  %2531 = vmatprep.subr.mxu0 0.0
  %2532 = vmatpush1.msra.mxu0 0.0
  %2533 = vmatprep.subr.mxu0 0.0
  %2534 = vmatpush1.msra.mxu0 0.0
  %2535 = vmatprep.mubr.f32.mxu0 0.0
  %2536 = vmatmul.mubr.f32.gmra.mrb[0].mxu0 %v2469
  %v2537 = vpop.f32.mrb[0].mxu0
  %v2538 = vadd.f32 0.0, %v2537
  %v2539 = vpop.f32.mrb[0].mxu0
  %2540 = vdwg.mxu0
  %2541 = vmatprep.subr.mxu0 0.0
  %2542 = vmatpush1.msra.mxu0 %v2405
  %2543 = vmatprep.subr.mxu0 0.0
  %2544 = vmatpush1.msra.mxu0 %v2407
  %2545 = vmatprep.subr.mxu0 0.0
  %2546 = vmatpush1.msra.mxu0 %v2409
  %2547 = vmatprep.subr.mxu0 0.0
  %2548 = vmatpush1.msra.mxu0 %v2411
  %2549 = vmatprep.subr.mxu0 0.0
  %2550 = vmatpush1.msra.mxu0 %v2413
  %2551 = vmatprep.subr.mxu0 0.0
  %2552 = vmatpush1.msra.mxu0 %v2415
  %2553 = vmatprep.subr.mxu0 0.0
  %2554 = vmatpush1.msra.mxu0 %v2417
  %2555 = vmatprep.subr.mxu0 0.0
  %2556 = vmatpush1.msra.mxu0 %v2419
  %2557 = vmatprep.subr.mxu0 0.0
  %2558 = vmatpush1.msra.mxu0 0.0
  %2559 = vmatprep.subr.mxu0 0.0
  %2560 = vmatpush1.msra.mxu0 0.0
  %2561 = vmatprep.subr.mxu0 0.0
  %2562 = vmatpush1.msra.mxu0 0.0
  %2563 = vmatprep.subr.mxu0 0.0
  %2564 = vmatpush1.msra.mxu0 0.0
  %2565 = vmatprep.subr.mxu0 0.0
  %2566 = vmatpush1.msra.mxu0 0.0
  %2567 = vmatprep.subr.mxu0 0.0
  %2568 = vmatpush1.msra.mxu0 0.0
  %2569 = vmatprep.subr.mxu0 0.0
  %2570 = vmatpush1.msra.mxu0 0.0
  %2571 = vmatprep.subr.mxu0 0.0
  %2572 = vmatpush1.msra.mxu0 0.0
  %2573 = vmatprep.subr.mxu0 0.0
  %2574 = vmatpush1.msra.mxu0 0.0
  %2575 = vmatprep.subr.mxu0 0.0
  %2576 = vmatpush1.msra.mxu0 0.0
  %2577 = vmatprep.subr.mxu0 0.0
  %2578 = vmatpush1.msra.mxu0 0.0
  %2579 = vmatprep.subr.mxu0 0.0
  %2580 = vmatpush1.msra.mxu0 0.0
  %2581 = vmatprep.subr.mxu0 0.0
  %2582 = vmatpush1.msra.mxu0 0.0
  %2583 = vmatprep.subr.mxu0 0.0
  %2584 = vmatpush1.msra.mxu0 0.0
  %2585 = vmatprep.subr.mxu0 0.0
  %2586 = vmatpush1.msra.mxu0 0.0
  %2587 = vmatprep.subr.mxu0 0.0
  %2588 = vmatpush1.msra.mxu0 0.0
  %2589 = vmatprep.subr.mxu0 0.0
  %2590 = vmatpush1.msra.mxu0 0.0
  %2591 = vmatprep.subr.mxu0 0.0
  %2592 = vmatpush1.msra.mxu0 0.0
  %2593 = vmatprep.subr.mxu0 0.0
  %2594 = vmatpush1.msra.mxu0 0.0
  %2595 = vmatprep.subr.mxu0 0.0
  %2596 = vmatpush1.msra.mxu0 0.0
  %2597 = vmatprep.subr.mxu0 0.0
  %2598 = vmatpush1.msra.mxu0 0.0
  %2599 = vmatprep.subr.mxu0 0.0
  %2600 = vmatpush1.msra.mxu0 0.0
  %2601 = vmatprep.subr.mxu0 0.0
  %2602 = vmatpush1.msra.mxu0 0.0
  %2603 = vmatprep.subr.mxu0 0.0
  %2604 = vmatpush1.msra.mxu0 0.0
  %2605 = vmatprep.mubr.f32.mxu0 0.0
  %2606 = vmatmul.mubr.f32.gmra.mrb[0].mxu0 %v2469
  %v2607 = vpop.f32.mrb[0].mxu0
  %v2608 = vadd.f32 1e-10, %v2607
  %v2609 = vpop.f32.mrb[0].mxu0
  %2610 = vdwg.mxu0
  %2612 = vset.pattern.permute.xlu0 0
  %2613 = vperm.xlu0 %2612, %v2608
  %v2614 = vpop.permute.xlu0 %2613
  %v2616 = vrcp.pop %v2614
  %v2617 = vmul.f32 %v2538, %v2616
  %v2618 = vlaneseq
  %v2619 = vshrl.u32 %v2618, 7
  %v2620 = vsub.s32 1, %v2619
  %v2621 = vrot.slane %v115, %v2620
  %v2622 = vmul.f32 %v2344, %v2621
  %v2623 = vmul.f32 %v2345, %v2621
  %v2624 = vmul.f32 %v2346, %v2621
  %v2625 = vmul.f32 %v2347, %v2621
  %v2626 = vmul.f32 %v2348, %v2621
  %v2627 = vmul.f32 %v2349, %v2621
  %v2628 = vmul.f32 %v2350, %v2621
  %v2629 = vmul.f32 %v2351, %v2621
  %v2630 = vsel %vm524, %v2622, 0.0
  %2631 = vadd.xlane.f32.xlu0 %v2630
  %v2632 = vpop.xlane.xlu0 %2631
  %v2633 = vsel %vm524, %v2623, 0.0
  %2634 = vadd.xlane.f32.xlu0 %v2633
  %v2635 = vpop.xlane.xlu0 %2634
  %v2636 = vsel %vm524, %v2624, 0.0
  %2637 = vadd.xlane.f32.xlu0 %v2636
  %v2638 = vpop.xlane.xlu0 %2637
  %v2639 = vsel %vm524, %v2625, 0.0
  %2640 = vadd.xlane.f32.xlu0 %v2639
  %v2641 = vpop.xlane.xlu0 %2640
  %v2642 = vsel %vm524, %v2626, 0.0
  %2643 = vadd.xlane.f32.xlu0 %v2642
  %v2644 = vpop.xlane.xlu0 %2643
  %v2645 = vsel %vm524, %v2627, 0.0
  %2646 = vadd.xlane.f32.xlu0 %v2645
  %v2647 = vpop.xlane.xlu0 %2646
  %v2648 = vsel %vm524, %v2628, 0.0
  %2649 = vadd.xlane.f32.xlu0 %v2648
  %v2650 = vpop.xlane.xlu0 %2649
  %v2651 = vsel %vm524, %v2629, 0.0
  %2652 = vadd.xlane.f32.xlu0 %v2651
  %v2653 = vpop.xlane.xlu0 %2652
  %v2654 = vadd.f32 %v2632, %v116
  %v2655 = vadd.f32 %v2635, %v117
  %v2656 = vadd.f32 %v2638, %v118
  %v2657 = vadd.f32 %v2641, %v119
  %v2658 = vadd.f32 %v2644, %v120
  %v2659 = vadd.f32 %v2647, %v121
  %v2660 = vadd.f32 %v2650, %v122
  %v2661 = vadd.f32 %v2653, %v123
  %v2662 = vtanh.pop %v2654
  %v2663 = vtanh.pop %v2655
  %v2664 = vtanh.pop %v2656
  %v2665 = vtanh.pop %v2657
  %v2666 = vtanh.pop %v2658
  %v2667 = vtanh.pop %v2659
  %v2668 = vtanh.pop %v2660
  %v2669 = vtanh.pop %v2661
  %v2670 = vmul.f32 %v2662, 1.442695
  %v2671 = vpow.pop %v2670
  %v2672 = vmul.f32 %v2663, 1.442695
  %v2673 = vpow.pop %v2672
  %v2674 = vmul.f32 %v2664, 1.442695
  %v2675 = vpow.pop %v2674
  %v2676 = vmul.f32 %v2665, 1.442695
  %v2677 = vpow.pop %v2676
  %v2678 = vmul.f32 %v2666, 1.442695
  %v2679 = vpow.pop %v2678
  %v2680 = vmul.f32 %v2667, 1.442695
  %v2681 = vpow.pop %v2680
  %v2682 = vmul.f32 %v2668, 1.442695
  %v2683 = vpow.pop %v2682
  %v2684 = vmul.f32 %v2669, 1.442695
  %v2685 = vpow.pop %v2684
  %2687 = vset.pattern.permute.xlu0 1
  %2688 = vperm.xlu0 %2687, %v2671
  %v2689 = vpop.permute.xlu0 %2688
  %2692 = vset.pattern.permute.xlu0 1
  %2693 = vperm.xlu0 %2692, %v2673
  %v2694 = vpop.permute.xlu0 %2693
  %2697 = vset.pattern.permute.xlu0 1
  %2698 = vperm.xlu0 %2697, %v2675
  %v2699 = vpop.permute.xlu0 %2698
  %2702 = vset.pattern.permute.xlu0 1
  %2703 = vperm.xlu0 %2702, %v2677
  %v2704 = vpop.permute.xlu0 %2703
  %2707 = vset.pattern.permute.xlu0 1
  %2708 = vperm.xlu0 %2707, %v2679
  %v2709 = vpop.permute.xlu0 %2708
  %2712 = vset.pattern.permute.xlu0 1
  %2713 = vperm.xlu0 %2712, %v2681
  %v2714 = vpop.permute.xlu0 %2713
  %2717 = vset.pattern.permute.xlu0 1
  %2718 = vperm.xlu0 %2717, %v2683
  %v2719 = vpop.permute.xlu0 %2718
  %2722 = vset.pattern.permute.xlu0 1
  %2723 = vperm.xlu0 %2722, %v2685
  %v2724 = vpop.permute.xlu0 %2723
  %v2726 = vmul.f32 %v2344, %v2689
  %v2727 = vmul.f32 %v2345, %v2694
  %v2728 = vmul.f32 %v2346, %v2699
  %v2729 = vmul.f32 %v2347, %v2704
  %v2730 = vmul.f32 %v2348, %v2709
  %v2731 = vmul.f32 %v2349, %v2714
  %v2732 = vmul.f32 %v2350, %v2719
  %v2733 = vmul.f32 %v2351, %v2724
  %2734 = vmatprep.subr.mxu0 0.0
  %2735 = vmatpush1.msra.mxu0 %v2726
  %2736 = vmatprep.subr.mxu0 0.0
  %2737 = vmatpush1.msra.mxu0 %v2727
  %2738 = vmatprep.subr.mxu0 0.0
  %2739 = vmatpush1.msra.mxu0 %v2728
  %2740 = vmatprep.subr.mxu0 0.0
  %2741 = vmatpush1.msra.mxu0 %v2729
  %2742 = vmatprep.subr.mxu0 0.0
  %2743 = vmatpush1.msra.mxu0 %v2730
  %2744 = vmatprep.subr.mxu0 0.0
  %2745 = vmatpush1.msra.mxu0 %v2731
  %2746 = vmatprep.subr.mxu0 0.0
  %2747 = vmatpush1.msra.mxu0 %v2732
  %2748 = vmatprep.subr.mxu0 0.0
  %2749 = vmatpush1.msra.mxu0 %v2733
  %2750 = vmatprep.subr.mxu0 0.0
  %2751 = vmatpush1.msra.mxu0 0.0
  %2752 = vmatprep.subr.mxu0 0.0
  %2753 = vmatpush1.msra.mxu0 0.0
  %2754 = vmatprep.subr.mxu0 0.0
  %2755 = vmatpush1.msra.mxu0 0.0
  %2756 = vmatprep.subr.mxu0 0.0
  %2757 = vmatpush1.msra.mxu0 0.0
  %2758 = vmatprep.subr.mxu0 0.0
  %2759 = vmatpush1.msra.mxu0 0.0
  %2760 = vmatprep.subr.mxu0 0.0
  %2761 = vmatpush1.msra.mxu0 0.0
  %2762 = vmatprep.subr.mxu0 0.0
  %2763 = vmatpush1.msra.mxu0 0.0
  %2764 = vmatprep.subr.mxu0 0.0
  %2765 = vmatpush1.msra.mxu0 0.0
  %2766 = vmatprep.subr.mxu0 0.0
  %2767 = vmatpush1.msra.mxu0 0.0
  %2768 = vmatprep.subr.mxu0 0.0
  %2769 = vmatpush1.msra.mxu0 0.0
  %2770 = vmatprep.subr.mxu0 0.0
  %2771 = vmatpush1.msra.mxu0 0.0
  %2772 = vmatprep.subr.mxu0 0.0
  %2773 = vmatpush1.msra.mxu0 0.0
  %2774 = vmatprep.subr.mxu0 0.0
  %2775 = vmatpush1.msra.mxu0 0.0
  %2776 = vmatprep.subr.mxu0 0.0
  %2777 = vmatpush1.msra.mxu0 0.0
  %2778 = vmatprep.subr.mxu0 0.0
  %2779 = vmatpush1.msra.mxu0 0.0
  %2780 = vmatprep.subr.mxu0 0.0
  %2781 = vmatpush1.msra.mxu0 0.0
  %2782 = vmatprep.subr.mxu0 0.0
  %2783 = vmatpush1.msra.mxu0 0.0
  %2784 = vmatprep.subr.mxu0 0.0
  %2785 = vmatpush1.msra.mxu0 0.0
  %2786 = vmatprep.subr.mxu0 0.0
  %2787 = vmatpush1.msra.mxu0 0.0
  %2788 = vmatprep.subr.mxu0 0.0
  %2789 = vmatpush1.msra.mxu0 0.0
  %2790 = vmatprep.subr.mxu0 0.0
  %2791 = vmatpush1.msra.mxu0 0.0
  %2792 = vmatprep.subr.mxu0 0.0
  %2793 = vmatpush1.msra.mxu0 0.0
  %2794 = vmatprep.subr.mxu0 0.0
  %2795 = vmatpush1.msra.mxu0 0.0
  %2796 = vmatprep.subr.mxu0 0.0
  %2797 = vmatpush1.msra.mxu0 0.0
  %2798 = vmatprep.mubr.f32.mxu0 0.0
  %2799 = vmatmul.mubr.f32.gmra.mrb[0].mxu0 %v2469
  %v2800 = vpop.f32.mrb[0].mxu0
  %v2801 = vadd.f32 0.0, %v2800
  %v2802 = vpop.f32.mrb[0].mxu0
  %2803 = vdwg.mxu0
  %2804 = vrot.lane.b32.xlu0 %v2671, 127
  %v2805 = vpop.permute.xlu0 %2804
  %2806 = vrot.lane.b32.xlu0 %v2673, 127
  %v2807 = vpop.permute.xlu0 %2806
  %2808 = vrot.lane.b32.xlu0 %v2675, 127
  %v2809 = vpop.permute.xlu0 %2808
  %2810 = vrot.lane.b32.xlu0 %v2677, 127
  %v2811 = vpop.permute.xlu0 %2810
  %2812 = vrot.lane.b32.xlu0 %v2679, 127
  %v2813 = vpop.permute.xlu0 %2812
  %2814 = vrot.lane.b32.xlu0 %v2681, 127
  %v2815 = vpop.permute.xlu0 %2814
  %2816 = vrot.lane.b32.xlu0 %v2683, 127
  %v2817 = vpop.permute.xlu0 %2816
  %2818 = vrot.lane.b32.xlu0 %v2685, 127
  %v2819 = vpop.permute.xlu0 %2818
  %2828 = vmatprep.subr.mxu0 0.0
  %2829 = vmatpush1.msra.mxu0 %v2805
  %2830 = vmatprep.subr.mxu0 0.0
  %2831 = vmatpush1.msra.mxu0 %v2807
  %2832 = vmatprep.subr.mxu0 0.0
  %2833 = vmatpush1.msra.mxu0 %v2809
  %2834 = vmatprep.subr.mxu0 0.0
  %2835 = vmatpush1.msra.mxu0 %v2811
  %2836 = vmatprep.subr.mxu0 0.0
  %2837 = vmatpush1.msra.mxu0 %v2813
  %2838 = vmatprep.subr.mxu0 0.0
  %2839 = vmatpush1.msra.mxu0 %v2815
  %2840 = vmatprep.subr.mxu0 0.0
  %2841 = vmatpush1.msra.mxu0 %v2817
  %2842 = vmatprep.subr.mxu0 0.0
  %2843 = vmatpush1.msra.mxu0 %v2819
  %2844 = vmatprep.subr.mxu0 0.0
  %2845 = vmatpush1.msra.mxu0 0.0
  %2846 = vmatprep.subr.mxu0 0.0
  %2847 = vmatpush1.msra.mxu0 0.0
  %2848 = vmatprep.subr.mxu0 0.0
  %2849 = vmatpush1.msra.mxu0 0.0
  %2850 = vmatprep.subr.mxu0 0.0
  %2851 = vmatpush1.msra.mxu0 0.0
  %2852 = vmatprep.subr.mxu0 0.0
  %2853 = vmatpush1.msra.mxu0 0.0
  %2854 = vmatprep.subr.mxu0 0.0
  %2855 = vmatpush1.msra.mxu0 0.0
  %2856 = vmatprep.subr.mxu0 0.0
  %2857 = vmatpush1.msra.mxu0 0.0
  %2858 = vmatprep.subr.mxu0 0.0
  %2859 = vmatpush1.msra.mxu0 0.0
  %2860 = vmatprep.subr.mxu0 0.0
  %2861 = vmatpush1.msra.mxu0 0.0
  %2862 = vmatprep.subr.mxu0 0.0
  %2863 = vmatpush1.msra.mxu0 0.0
  %2864 = vmatprep.subr.mxu0 0.0
  %2865 = vmatpush1.msra.mxu0 0.0
  %2866 = vmatprep.subr.mxu0 0.0
  %2867 = vmatpush1.msra.mxu0 0.0
  %2868 = vmatprep.subr.mxu0 0.0
  %2869 = vmatpush1.msra.mxu0 0.0
  %2870 = vmatprep.subr.mxu0 0.0
  %2871 = vmatpush1.msra.mxu0 0.0
  %2872 = vmatprep.subr.mxu0 0.0
  %2873 = vmatpush1.msra.mxu0 0.0
  %2874 = vmatprep.subr.mxu0 0.0
  %2875 = vmatpush1.msra.mxu0 0.0
  %2876 = vmatprep.subr.mxu0 0.0
  %2877 = vmatpush1.msra.mxu0 0.0
  %2878 = vmatprep.subr.mxu0 0.0
  %2879 = vmatpush1.msra.mxu0 0.0
  %2880 = vmatprep.subr.mxu0 0.0
  %2881 = vmatpush1.msra.mxu0 0.0
  %2882 = vmatprep.subr.mxu0 0.0
  %2883 = vmatpush1.msra.mxu0 0.0
  %2884 = vmatprep.subr.mxu0 0.0
  %2885 = vmatpush1.msra.mxu0 0.0
  %2886 = vmatprep.subr.mxu0 0.0
  %2887 = vmatpush1.msra.mxu0 0.0
  %2888 = vmatprep.subr.mxu0 0.0
  %2889 = vmatpush1.msra.mxu0 0.0
  %2890 = vmatprep.subr.mxu0 0.0
  %2891 = vmatpush1.msra.mxu0 0.0
  %2892 = vmatprep.mubr.f32.mxu0 0.0
  %2893 = vmatmul.mubr.f32.gmra.mrb[0].mxu0 %v2469
  %v2894 = vpop.f32.mrb[0].mxu0
  %v2895 = vadd.f32 1e-10, %v2894
  %v2896 = vpop.f32.mrb[0].mxu0
  %2897 = vdwg.mxu0
  %2899 = vset.pattern.permute.xlu0 0
  %2900 = vperm.xlu0 %2899, %v2895
  %v2901 = vpop.permute.xlu0 %2900
  %v2903 = vrcp.pop %v2901
  %v2904 = vmul.f32 %v2801, %v2903
  %2905 = vmatprep.subr.mxu0 0.0
  %2906 = vmatpush1.msra.mxu0 %v2344
  %2907 = vmatprep.subr.mxu0 0.0
  %2908 = vmatpush1.msra.mxu0 %v2345
  %2909 = vmatprep.subr.mxu0 0.0
  %2910 = vmatpush1.msra.mxu0 %v2346
  %2911 = vmatprep.subr.mxu0 0.0
  %2912 = vmatpush1.msra.mxu0 %v2347
  %2913 = vmatprep.subr.mxu0 0.0
  %2914 = vmatpush1.msra.mxu0 %v2348
  %2915 = vmatprep.subr.mxu0 0.0
  %2916 = vmatpush1.msra.mxu0 %v2349
  %2917 = vmatprep.subr.mxu0 0.0
  %2918 = vmatpush1.msra.mxu0 %v2350
  %2919 = vmatprep.subr.mxu0 0.0
  %2920 = vmatpush1.msra.mxu0 %v2351
  %2921 = vmatprep.subr.mxu0 0.0
  %2922 = vmatpush1.msra.mxu0 0.0
  %2923 = vmatprep.subr.mxu0 0.0
  %2924 = vmatpush1.msra.mxu0 0.0
  %2925 = vmatprep.subr.mxu0 0.0
  %2926 = vmatpush1.msra.mxu0 0.0
  %2927 = vmatprep.subr.mxu0 0.0
  %2928 = vmatpush1.msra.mxu0 0.0
  %2929 = vmatprep.subr.mxu0 0.0
  %2930 = vmatpush1.msra.mxu0 0.0
  %2931 = vmatprep.subr.mxu0 0.0
  %2932 = vmatpush1.msra.mxu0 0.0
  %2933 = vmatprep.subr.mxu0 0.0
  %2934 = vmatpush1.msra.mxu0 0.0
  %2935 = vmatprep.subr.mxu0 0.0
  %2936 = vmatpush1.msra.mxu0 0.0
  %2937 = vmatprep.subr.mxu0 0.0
  %2938 = vmatpush1.msra.mxu0 0.0
  %2939 = vmatprep.subr.mxu0 0.0
  %2940 = vmatpush1.msra.mxu0 0.0
  %2941 = vmatprep.subr.mxu0 0.0
  %2942 = vmatpush1.msra.mxu0 0.0
  %2943 = vmatprep.subr.mxu0 0.0
  %2944 = vmatpush1.msra.mxu0 0.0
  %2945 = vmatprep.subr.mxu0 0.0
  %2946 = vmatpush1.msra.mxu0 0.0
  %2947 = vmatprep.subr.mxu0 0.0
  %2948 = vmatpush1.msra.mxu0 0.0
  %2949 = vmatprep.subr.mxu0 0.0
  %2950 = vmatpush1.msra.mxu0 0.0
  %2951 = vmatprep.subr.mxu0 0.0
  %2952 = vmatpush1.msra.mxu0 0.0
  %2953 = vmatprep.subr.mxu0 0.0
  %2954 = vmatpush1.msra.mxu0 0.0
  %2955 = vmatprep.subr.mxu0 0.0
  %2956 = vmatpush1.msra.mxu0 0.0
  %2957 = vmatprep.subr.mxu0 0.0
  %2958 = vmatpush1.msra.mxu0 0.0
  %2959 = vmatprep.subr.mxu0 0.0
  %2960 = vmatpush1.msra.mxu0 0.0
  %2961 = vmatprep.subr.mxu0 0.0
  %2962 = vmatpush1.msra.mxu0 0.0
  %2963 = vmatprep.subr.mxu0 0.0
  %2964 = vmatpush1.msra.mxu0 0.0
  %2965 = vmatprep.subr.mxu0 0.0
  %2966 = vmatpush1.msra.mxu0 0.0
  %2967 = vmatprep.subr.mxu0 0.0
  %2968 = vmatpush1.msra.mxu0 0.0
  %2969 = vmatprep.mubr.f32.mxu0 0.0
  %2970 = vmatmul.mubr.f32.gmra.mrb[0].mxu0 %v2469
  %v2971 = vpop.f32.mrb[0].mxu0
  %v2972 = vadd.f32 0.0, %v2971
  %v2973 = vpop.f32.mrb[0].mxu0
  %2974 = vdwg.mxu0
  %v2975 = vmul.f32 %v2972, 0.125
  %v2976 = vmax.f32 %v2344, %v2345
  %v2977 = vmax.f32 %v2976, %v2346
  %v2978 = vmax.f32 %v2977, %v2347
  %v2979 = vmax.f32 %v2978, %v2348
  %v2980 = vmax.f32 %v2979, %v2349
  %v2981 = vmax.f32 %v2980, %v2350
  %v2982 = vmax.f32 %v2981, %v2351
  %v2984 = vsel %vm524, %v2344, 0
  %v2987 = vsel %vm524, %v2345, 0
  %v2990 = vsel %vm524, %v2346, 0
  %v2993 = vsel %vm524, %v2347, 0
  %v2996 = vsel %vm524, %v2348, 0
  %v2999 = vsel %vm524, %v2349, 0
  %v3002 = vsel %vm524, %v2350, 0
  %v3005 = vsel %vm524, %v2351, 0
  %3007 = vmatprep.subr.mxu0 0.0
  %3008 = vmatpush1.msra.mxu0 %v124
  %3009 = vmatprep.subr.mxu0 0.0
  %3010 = vmatpush1.msra.mxu0 %v125
  %3011 = vmatprep.subr.mxu0 0.0
  %3012 = vmatpush1.msra.mxu0 %v126
  %3013 = vmatprep.subr.mxu0 0.0
  %3014 = vmatpush1.msra.mxu0 %v127
  %3015 = vmatprep.subr.mxu0 0.0
  %3016 = vmatpush1.msra.mxu0 %v128
  %3017 = vmatprep.subr.mxu0 0.0
  %3018 = vmatpush1.msra.mxu0 %v129
  %3019 = vmatprep.subr.mxu0 0.0
  %3020 = vmatpush1.msra.mxu0 %v130
  %3021 = vmatprep.subr.mxu0 0.0
  %3022 = vmatpush1.msra.mxu0 %v131
  %3023 = vmatprep.subr.mxu0 0.0
  %3024 = vmatpush1.msra.mxu0 0.0
  %3025 = vmatprep.subr.mxu0 0.0
  %3026 = vmatpush1.msra.mxu0 0.0
  %3027 = vmatprep.subr.mxu0 0.0
  %3028 = vmatpush1.msra.mxu0 0.0
  %3029 = vmatprep.subr.mxu0 0.0
  %3030 = vmatpush1.msra.mxu0 0.0
  %3031 = vmatprep.subr.mxu0 0.0
  %3032 = vmatpush1.msra.mxu0 0.0
  %3033 = vmatprep.subr.mxu0 0.0
  %3034 = vmatpush1.msra.mxu0 0.0
  %3035 = vmatprep.subr.mxu0 0.0
  %3036 = vmatpush1.msra.mxu0 0.0
  %3037 = vmatprep.subr.mxu0 0.0
  %3038 = vmatpush1.msra.mxu0 0.0
  %3039 = vmatprep.subr.mxu0 0.0
  %3040 = vmatpush1.msra.mxu0 0.0
  %3041 = vmatprep.subr.mxu0 0.0
  %3042 = vmatpush1.msra.mxu0 0.0
  %3043 = vmatprep.subr.mxu0 0.0
  %3044 = vmatpush1.msra.mxu0 0.0
  %3045 = vmatprep.subr.mxu0 0.0
  %3046 = vmatpush1.msra.mxu0 0.0
  %3047 = vmatprep.subr.mxu0 0.0
  %3048 = vmatpush1.msra.mxu0 0.0
  %3049 = vmatprep.subr.mxu0 0.0
  %3050 = vmatpush1.msra.mxu0 0.0
  %3051 = vmatprep.subr.mxu0 0.0
  %3052 = vmatpush1.msra.mxu0 0.0
  %3053 = vmatprep.subr.mxu0 0.0
  %3054 = vmatpush1.msra.mxu0 0.0
  %3055 = vmatprep.subr.mxu0 0.0
  %3056 = vmatpush1.msra.mxu0 0.0
  %3057 = vmatprep.subr.mxu0 0.0
  %3058 = vmatpush1.msra.mxu0 0.0
  %3059 = vmatprep.subr.mxu0 0.0
  %3060 = vmatpush1.msra.mxu0 0.0
  %3061 = vmatprep.subr.mxu0 0.0
  %3062 = vmatpush1.msra.mxu0 0.0
  %3063 = vmatprep.subr.mxu0 0.0
  %3064 = vmatpush1.msra.mxu0 0.0
  %3065 = vmatprep.subr.mxu0 0.0
  %3066 = vmatpush1.msra.mxu0 0.0
  %3067 = vmatprep.subr.mxu0 0.0
  %3068 = vmatpush1.msra.mxu0 0.0
  %3069 = vmatprep.subr.mxu0 0.0
  %3070 = vmatpush1.msra.mxu0 0.0
  %3071 = vmatprep.mubr.f32.mxu0 0.0
  %3072 = vmatmul.mubr.f32.gmra.mrb[0].mxu0 %v2984
  %v3073 = vpop.f32.mrb[0].mxu0
  %v3074 = vadd.f32 0.0, %v3073
  %v3075 = vpop.f32.mrb[0].mxu0
  %3076 = vmatprep.mubr.f32.mxu0 0.0
  %3077 = vmatmul.mubr.f32.gmra.mrb[0].mxu0 %v2987
  %v3078 = vpop.f32.mrb[0].mxu0
  %v3079 = vadd.f32 0.0, %v3078
  %v3080 = vpop.f32.mrb[0].mxu0
  %3081 = vmatprep.mubr.f32.mxu0 0.0
  %3082 = vmatmul.mubr.f32.gmra.mrb[0].mxu0 %v2990
  %v3083 = vpop.f32.mrb[0].mxu0
  %v3084 = vadd.f32 0.0, %v3083
  %v3085 = vpop.f32.mrb[0].mxu0
  %3086 = vmatprep.mubr.f32.mxu0 0.0
  %3087 = vmatmul.mubr.f32.gmra.mrb[0].mxu0 %v2993
  %v3088 = vpop.f32.mrb[0].mxu0
  %v3089 = vadd.f32 0.0, %v3088
  %v3090 = vpop.f32.mrb[0].mxu0
  %3091 = vmatprep.mubr.f32.mxu0 0.0
  %3092 = vmatmul.mubr.f32.gmra.mrb[0].mxu0 %v2996
  %v3093 = vpop.f32.mrb[0].mxu0
  %v3094 = vadd.f32 0.0, %v3093
  %v3095 = vpop.f32.mrb[0].mxu0
  %3096 = vmatprep.mubr.f32.mxu0 0.0
  %3097 = vmatmul.mubr.f32.gmra.mrb[0].mxu0 %v2999
  %v3098 = vpop.f32.mrb[0].mxu0
  %v3099 = vadd.f32 0.0, %v3098
  %v3100 = vpop.f32.mrb[0].mxu0
  %3101 = vmatprep.mubr.f32.mxu0 0.0
  %3102 = vmatmul.mubr.f32.gmra.mrb[0].mxu0 %v3002
  %v3103 = vpop.f32.mrb[0].mxu0
  %v3104 = vadd.f32 0.0, %v3103
  %v3105 = vpop.f32.mrb[0].mxu0
  %3106 = vmatprep.mubr.f32.mxu0 0.0
  %3107 = vmatmul.mubr.f32.gmra.mrb[0].mxu0 %v3005
  %v3108 = vpop.f32.mrb[0].mxu0
  %v3109 = vadd.f32 0.0, %v3108
  %v3110 = vpop.f32.mrb[0].mxu0
  %3111 = vdwg.mxu0
  %3112 = vmatprep.subr.mxu0 0.0
  %3113 = vmatpush1.msra.mxu0 %v3074
  %3114 = vmatprep.subr.mxu0 0.0
  %3115 = vmatpush1.msra.mxu0 %v3079
  %3116 = vmatprep.subr.mxu0 0.0
  %3117 = vmatpush1.msra.mxu0 %v3084
  %3118 = vmatprep.subr.mxu0 0.0
  %3119 = vmatpush1.msra.mxu0 %v3089
  %3120 = vmatprep.subr.mxu0 0.0
  %3121 = vmatpush1.msra.mxu0 %v3094
  %3122 = vmatprep.subr.mxu0 0.0
  %3123 = vmatpush1.msra.mxu0 %v3099
  %3124 = vmatprep.subr.mxu0 0.0
  %3125 = vmatpush1.msra.mxu0 %v3104
  %3126 = vmatprep.subr.mxu0 0.0
  %3127 = vmatpush1.msra.mxu0 %v3109
  %3128 = vmatprep.subr.mxu0 0.0
  %3129 = vmatpush1.msra.mxu0 0.0
  %3130 = vmatprep.subr.mxu0 0.0
  %3131 = vmatpush1.msra.mxu0 0.0
  %3132 = vmatprep.subr.mxu0 0.0
  %3133 = vmatpush1.msra.mxu0 0.0
  %3134 = vmatprep.subr.mxu0 0.0
  %3135 = vmatpush1.msra.mxu0 0.0
  %3136 = vmatprep.subr.mxu0 0.0
  %3137 = vmatpush1.msra.mxu0 0.0
  %3138 = vmatprep.subr.mxu0 0.0
  %3139 = vmatpush1.msra.mxu0 0.0
  %3140 = vmatprep.subr.mxu0 0.0
  %3141 = vmatpush1.msra.mxu0 0.0
  %3142 = vmatprep.subr.mxu0 0.0
  %3143 = vmatpush1.msra.mxu0 0.0
  %3144 = vmatprep.subr.mxu0 0.0
  %3145 = vmatpush1.msra.mxu0 0.0
  %3146 = vmatprep.subr.mxu0 0.0
  %3147 = vmatpush1.msra.mxu0 0.0
  %3148 = vmatprep.subr.mxu0 0.0
  %3149 = vmatpush1.msra.mxu0 0.0
  %3150 = vmatprep.subr.mxu0 0.0
  %3151 = vmatpush1.msra.mxu0 0.0
  %3152 = vmatprep.subr.mxu0 0.0
  %3153 = vmatpush1.msra.mxu0 0.0
  %3154 = vmatprep.subr.mxu0 0.0
  %3155 = vmatpush1.msra.mxu0 0.0
  %3156 = vmatprep.subr.mxu0 0.0
  %3157 = vmatpush1.msra.mxu0 0.0
  %3158 = vmatprep.subr.mxu0 0.0
  %3159 = vmatpush1.msra.mxu0 0.0
  %3160 = vmatprep.subr.mxu0 0.0
  %3161 = vmatpush1.msra.mxu0 0.0
  %3162 = vmatprep.subr.mxu0 0.0
  %3163 = vmatpush1.msra.mxu0 0.0
  %3164 = vmatprep.subr.mxu0 0.0
  %3165 = vmatpush1.msra.mxu0 0.0
  %3166 = vmatprep.subr.mxu0 0.0
  %3167 = vmatpush1.msra.mxu0 0.0
  %3168 = vmatprep.subr.mxu0 0.0
  %3169 = vmatpush1.msra.mxu0 0.0
  %3170 = vmatprep.subr.mxu0 0.0
  %3171 = vmatpush1.msra.mxu0 0.0
  %3172 = vmatprep.subr.mxu0 0.0
  %3173 = vmatpush1.msra.mxu0 0.0
  %3174 = vmatprep.subr.mxu0 0.0
  %3175 = vmatpush1.msra.mxu0 0.0
  %3176 = vmatprep.mubr.f32.mxu0 0.0
  %3177 = vmatmul.mubr.f32.gmra.mrb[0].mxu0 %v2469
  %v3178 = vpop.f32.mrb[0].mxu0
  %v3179 = vadd.f32 0.0, %v3178
  %v3180 = vpop.f32.mrb[0].mxu0
  %3181 = vdwg.mxu0
  %v3182 = vmul.f32 %v3179, 0.125
  %v3183 = vmul.f32 %v3182, %v3182
  %v3185 = vsel %vm524, %v3183, 0
  %3187 = vmatprep.subr.mxu0 0.0
  %3188 = vmatpush1.msra.mxu0 %v148
  %3189 = vmatprep.subr.mxu0 0.0
  %3190 = vmatpush1.msra.mxu0 %v149
  %3191 = vmatprep.subr.mxu0 0.0
  %3192 = vmatpush1.msra.mxu0 %v150
  %3193 = vmatprep.subr.mxu0 0.0
  %3194 = vmatpush1.msra.mxu0 %v151
  %3195 = vmatprep.subr.mxu0 0.0
  %3196 = vmatpush1.msra.mxu0 %v152
  %3197 = vmatprep.subr.mxu0 0.0
  %3198 = vmatpush1.msra.mxu0 %v153
  %3199 = vmatprep.subr.mxu0 0.0
  %3200 = vmatpush1.msra.mxu0 %v154
  %3201 = vmatprep.subr.mxu0 0.0
  %3202 = vmatpush1.msra.mxu0 %v155
  %3203 = vmatprep.subr.mxu0 0.0
  %3204 = vmatpush1.msra.mxu0 0.0
  %3205 = vmatprep.subr.mxu0 0.0
  %3206 = vmatpush1.msra.mxu0 0.0
  %3207 = vmatprep.subr.mxu0 0.0
  %3208 = vmatpush1.msra.mxu0 0.0
  %3209 = vmatprep.subr.mxu0 0.0
  %3210 = vmatpush1.msra.mxu0 0.0
  %3211 = vmatprep.subr.mxu0 0.0
  %3212 = vmatpush1.msra.mxu0 0.0
  %3213 = vmatprep.subr.mxu0 0.0
  %3214 = vmatpush1.msra.mxu0 0.0
  %3215 = vmatprep.subr.mxu0 0.0
  %3216 = vmatpush1.msra.mxu0 0.0
  %3217 = vmatprep.subr.mxu0 0.0
  %3218 = vmatpush1.msra.mxu0 0.0
  %3219 = vmatprep.subr.mxu0 0.0
  %3220 = vmatpush1.msra.mxu0 0.0
  %3221 = vmatprep.subr.mxu0 0.0
  %3222 = vmatpush1.msra.mxu0 0.0
  %3223 = vmatprep.subr.mxu0 0.0
  %3224 = vmatpush1.msra.mxu0 0.0
  %3225 = vmatprep.subr.mxu0 0.0
  %3226 = vmatpush1.msra.mxu0 0.0
  %3227 = vmatprep.subr.mxu0 0.0
  %3228 = vmatpush1.msra.mxu0 0.0
  %3229 = vmatprep.subr.mxu0 0.0
  %3230 = vmatpush1.msra.mxu0 0.0
  %3231 = vmatprep.subr.mxu0 0.0
  %3232 = vmatpush1.msra.mxu0 0.0
  %3233 = vmatprep.subr.mxu0 0.0
  %3234 = vmatpush1.msra.mxu0 0.0
  %3235 = vmatprep.subr.mxu0 0.0
  %3236 = vmatpush1.msra.mxu0 0.0
  %3237 = vmatprep.subr.mxu0 0.0
  %3238 = vmatpush1.msra.mxu0 0.0
  %3239 = vmatprep.subr.mxu0 0.0
  %3240 = vmatpush1.msra.mxu0 0.0
  %3241 = vmatprep.subr.mxu0 0.0
  %3242 = vmatpush1.msra.mxu0 0.0
  %3243 = vmatprep.subr.mxu0 0.0
  %3244 = vmatpush1.msra.mxu0 0.0
  %3245 = vmatprep.subr.mxu0 0.0
  %3246 = vmatpush1.msra.mxu0 0.0
  %3247 = vmatprep.subr.mxu0 0.0
  %3248 = vmatpush1.msra.mxu0 0.0
  %3249 = vmatprep.subr.mxu0 0.0
  %3250 = vmatpush1.msra.mxu0 0.0
  %3251 = vmatprep.mubr.f32.mxu0 0.0
  %3252 = vmatmul.mubr.f32.gmra.mrb[0].mxu0 %v3185
  %v3253 = vpop.f32.mrb[0].mxu0
  %v3254 = vadd.f32 1e-07, %v3253
  %v3255 = vpop.f32.mrb[0].mxu0
  %3256 = vdwg.mxu0
  %v3257 = vrsqrt.pop %v3254
  %v3258 = vmul.f32 %v3182, %v3257
  %v3259 = vmul.f32 %v3074, %v3258
  %v3260 = vmul.f32 %v3079, %v3258
  %v3261 = vmul.f32 %v3084, %v3258
  %v3262 = vmul.f32 %v3089, %v3258
  %v3263 = vmul.f32 %v3094, %v3258
  %v3264 = vmul.f32 %v3099, %v3258
  %v3265 = vmul.f32 %v3104, %v3258
  %v3266 = vmul.f32 %v3109, %v3258
  %v3268 = vsel %vm524, %v3259, 0
  %v3271 = vsel %vm524, %v3260, 0
  %v3274 = vsel %vm524, %v3261, 0
  %v3277 = vsel %vm524, %v3262, 0
  %v3280 = vsel %vm524, %v3263, 0
  %v3283 = vsel %vm524, %v3264, 0
  %v3286 = vsel %vm524, %v3265, 0
  %v3289 = vsel %vm524, %v3266, 0
  %3291 = vmatprep.subr.mxu0 0.0
  %3292 = vmatpush1.msra.mxu0 %v148
  %3293 = vmatprep.subr.mxu0 0.0
  %3294 = vmatpush1.msra.mxu0 %v149
  %3295 = vmatprep.subr.mxu0 0.0
  %3296 = vmatpush1.msra.mxu0 %v150
  %3297 = vmatprep.subr.mxu0 0.0
  %3298 = vmatpush1.msra.mxu0 %v151
  %3299 = vmatprep.subr.mxu0 0.0
  %3300 = vmatpush1.msra.mxu0 %v152
  %3301 = vmatprep.subr.mxu0 0.0
  %3302 = vmatpush1.msra.mxu0 %v153
  %3303 = vmatprep.subr.mxu0 0.0
  %3304 = vmatpush1.msra.mxu0 %v154
  %3305 = vmatprep.subr.mxu0 0.0
  %3306 = vmatpush1.msra.mxu0 %v155
  %3307 = vmatprep.subr.mxu0 0.0
  %3308 = vmatpush1.msra.mxu0 0.0
  %3309 = vmatprep.subr.mxu0 0.0
  %3310 = vmatpush1.msra.mxu0 0.0
  %3311 = vmatprep.subr.mxu0 0.0
  %3312 = vmatpush1.msra.mxu0 0.0
  %3313 = vmatprep.subr.mxu0 0.0
  %3314 = vmatpush1.msra.mxu0 0.0
  %3315 = vmatprep.subr.mxu0 0.0
  %3316 = vmatpush1.msra.mxu0 0.0
  %3317 = vmatprep.subr.mxu0 0.0
  %3318 = vmatpush1.msra.mxu0 0.0
  %3319 = vmatprep.subr.mxu0 0.0
  %3320 = vmatpush1.msra.mxu0 0.0
  %3321 = vmatprep.subr.mxu0 0.0
  %3322 = vmatpush1.msra.mxu0 0.0
  %3323 = vmatprep.subr.mxu0 0.0
  %3324 = vmatpush1.msra.mxu0 0.0
  %3325 = vmatprep.subr.mxu0 0.0
  %3326 = vmatpush1.msra.mxu0 0.0
  %3327 = vmatprep.subr.mxu0 0.0
  %3328 = vmatpush1.msra.mxu0 0.0
  %3329 = vmatprep.subr.mxu0 0.0
  %3330 = vmatpush1.msra.mxu0 0.0
  %3331 = vmatprep.subr.mxu0 0.0
  %3332 = vmatpush1.msra.mxu0 0.0
  %3333 = vmatprep.subr.mxu0 0.0
  %3334 = vmatpush1.msra.mxu0 0.0
  %3335 = vmatprep.subr.mxu0 0.0
  %3336 = vmatpush1.msra.mxu0 0.0
  %3337 = vmatprep.subr.mxu0 0.0
  %3338 = vmatpush1.msra.mxu0 0.0
  %3339 = vmatprep.subr.mxu0 0.0
  %3340 = vmatpush1.msra.mxu0 0.0
  %3341 = vmatprep.subr.mxu0 0.0
  %3342 = vmatpush1.msra.mxu0 0.0
  %3343 = vmatprep.subr.mxu0 0.0
  %3344 = vmatpush1.msra.mxu0 0.0
  %3345 = vmatprep.subr.mxu0 0.0
  %3346 = vmatpush1.msra.mxu0 0.0
  %3347 = vmatprep.subr.mxu0 0.0
  %3348 = vmatpush1.msra.mxu0 0.0
  %3349 = vmatprep.subr.mxu0 0.0
  %3350 = vmatpush1.msra.mxu0 0.0
  %3351 = vmatprep.subr.mxu0 0.0
  %3352 = vmatpush1.msra.mxu0 0.0
  %3353 = vmatprep.subr.mxu0 0.0
  %3354 = vmatpush1.msra.mxu0 0.0
  %3355 = vmatprep.mubr.f32.mxu0 0.0
  %3356 = vmatmul.mubr.f32.gmra.mrb[0].mxu0 %v3268
  %v3357 = vpop.f32.mrb[0].mxu0
  %v3358 = vadd.f32 0.0, %v3357
  %v3359 = vpop.f32.mrb[0].mxu0
  %3360 = vmatprep.mubr.f32.mxu0 0.0
  %3361 = vmatmul.mubr.f32.gmra.mrb[0].mxu0 %v3271
  %v3362 = vpop.f32.mrb[0].mxu0
  %v3363 = vadd.f32 0.0, %v3362
  %v3364 = vpop.f32.mrb[0].mxu0
  %3365 = vmatprep.mubr.f32.mxu0 0.0
  %3366 = vmatmul.mubr.f32.gmra.mrb[0].mxu0 %v3274
  %v3367 = vpop.f32.mrb[0].mxu0
  %v3368 = vadd.f32 0.0, %v3367
  %v3369 = vpop.f32.mrb[0].mxu0
  %3370 = vmatprep.mubr.f32.mxu0 0.0
  %3371 = vmatmul.mubr.f32.gmra.mrb[0].mxu0 %v3277
  %v3372 = vpop.f32.mrb[0].mxu0
  %v3373 = vadd.f32 0.0, %v3372
  %v3374 = vpop.f32.mrb[0].mxu0
  %3375 = vmatprep.mubr.f32.mxu0 0.0
  %3376 = vmatmul.mubr.f32.gmra.mrb[0].mxu0 %v3280
  %v3377 = vpop.f32.mrb[0].mxu0
  %v3378 = vadd.f32 0.0, %v3377
  %v3379 = vpop.f32.mrb[0].mxu0
  %3380 = vmatprep.mubr.f32.mxu0 0.0
  %3381 = vmatmul.mubr.f32.gmra.mrb[0].mxu0 %v3283
  %v3382 = vpop.f32.mrb[0].mxu0
  %v3383 = vadd.f32 0.0, %v3382
  %v3384 = vpop.f32.mrb[0].mxu0
  %3385 = vmatprep.mubr.f32.mxu0 0.0
  %3386 = vmatmul.mubr.f32.gmra.mrb[0].mxu0 %v3286
  %v3387 = vpop.f32.mrb[0].mxu0
  %v3388 = vadd.f32 0.0, %v3387
  %v3389 = vpop.f32.mrb[0].mxu0
  %3390 = vmatprep.mubr.f32.mxu0 0.0
  %3391 = vmatmul.mubr.f32.gmra.mrb[0].mxu0 %v3289
  %v3392 = vpop.f32.mrb[0].mxu0
  %v3393 = vadd.f32 0.0, %v3392
  %v3394 = vpop.f32.mrb[0].mxu0
  %3395 = vdwg.mxu0
  %v3396 = vsel %vm524, %v3358, -inf
  %3397 = vmax.xlane.f32.xlu0 %v3396
  %v3398 = vpop.xlane.xlu0 %3397
  %v3399 = vsel %vm524, %v3363, -inf
  %3400 = vmax.xlane.f32.xlu0 %v3399
  %v3401 = vpop.xlane.xlu0 %3400
  %v3402 = vsel %vm524, %v3368, -inf
  %3403 = vmax.xlane.f32.xlu0 %v3402
  %v3404 = vpop.xlane.xlu0 %3403
  %v3405 = vsel %vm524, %v3373, -inf
  %3406 = vmax.xlane.f32.xlu0 %v3405
  %v3407 = vpop.xlane.xlu0 %3406
  %v3408 = vsel %vm524, %v3378, -inf
  %3409 = vmax.xlane.f32.xlu0 %v3408
  %v3410 = vpop.xlane.xlu0 %3409
  %v3411 = vsel %vm524, %v3383, -inf
  %3412 = vmax.xlane.f32.xlu0 %v3411
  %v3413 = vpop.xlane.xlu0 %3412
  %v3414 = vsel %vm524, %v3388, -inf
  %3415 = vmax.xlane.f32.xlu0 %v3414
  %v3416 = vpop.xlane.xlu0 %3415
  %v3417 = vsel %vm524, %v3393, -inf
  %3418 = vmax.xlane.f32.xlu0 %v3417
  %v3419 = vpop.xlane.xlu0 %3418
  %v3420 = vsub.f32 %v3358, %v3398
  %v3421 = vsub.f32 %v3363, %v3401
  %v3422 = vsub.f32 %v3368, %v3404
  %v3423 = vsub.f32 %v3373, %v3407
  %v3424 = vsub.f32 %v3378, %v3410
  %v3425 = vsub.f32 %v3383, %v3413
  %v3426 = vsub.f32 %v3388, %v3416
  %v3427 = vsub.f32 %v3393, %v3419
  %v3428 = vmul.f32 %v3420, 1.442695
  %v3429 = vpow.pop %v3428
  %v3430 = vmul.f32 %v3421, 1.442695
  %v3431 = vpow.pop %v3430
  %v3432 = vmul.f32 %v3422, 1.442695
  %v3433 = vpow.pop %v3432
  %v3434 = vmul.f32 %v3423, 1.442695
  %v3435 = vpow.pop %v3434
  %v3436 = vmul.f32 %v3424, 1.442695
  %v3437 = vpow.pop %v3436
  %v3438 = vmul.f32 %v3425, 1.442695
  %v3439 = vpow.pop %v3438
  %v3440 = vmul.f32 %v3426, 1.442695
  %v3441 = vpow.pop %v3440
  %v3442 = vmul.f32 %v3427, 1.442695
  %v3443 = vpow.pop %v3442
  %v3444 = vmul.f32 %v3429, 8.0
  %v3445 = vmul.f32 %v3431, 8.0
  %v3446 = vmul.f32 %v3433, 8.0
  %v3447 = vmul.f32 %v3435, 8.0
  %v3448 = vmul.f32 %v3437, 8.0
  %v3449 = vmul.f32 %v3439, 8.0
  %v3450 = vmul.f32 %v3441, 8.0
  %v3451 = vmul.f32 %v3443, 8.0
  %v3452 = vsel %vm524, %v3429, 0.0
  %3453 = vadd.xlane.f32.xlu0 %v3452
  %v3454 = vpop.xlane.xlu0 %3453
  %v3455 = vsel %vm524, %v3431, 0.0
  %3456 = vadd.xlane.f32.xlu0 %v3455
  %v3457 = vpop.xlane.xlu0 %3456
  %v3458 = vsel %vm524, %v3433, 0.0
  %3459 = vadd.xlane.f32.xlu0 %v3458
  %v3460 = vpop.xlane.xlu0 %3459
  %v3461 = vsel %vm524, %v3435, 0.0
  %3462 = vadd.xlane.f32.xlu0 %v3461
  %v3463 = vpop.xlane.xlu0 %3462
  %v3464 = vsel %vm524, %v3437, 0.0
  %3465 = vadd.xlane.f32.xlu0 %v3464
  %v3466 = vpop.xlane.xlu0 %3465
  %v3467 = vsel %vm524, %v3439, 0.0
  %3468 = vadd.xlane.f32.xlu0 %v3467
  %v3469 = vpop.xlane.xlu0 %3468
  %v3470 = vsel %vm524, %v3441, 0.0
  %3471 = vadd.xlane.f32.xlu0 %v3470
  %v3472 = vpop.xlane.xlu0 %3471
  %v3473 = vsel %vm524, %v3443, 0.0
  %3474 = vadd.xlane.f32.xlu0 %v3473
  %v3475 = vpop.xlane.xlu0 %3474
  %v3476 = vrcp.pop %v3454
  %v3477 = vmul.f32 %v3444, %v3476
  %v3478 = vrcp.pop %v3457
  %v3479 = vmul.f32 %v3445, %v3478
  %v3480 = vrcp.pop %v3460
  %v3481 = vmul.f32 %v3446, %v3480
  %v3482 = vrcp.pop %v3463
  %v3483 = vmul.f32 %v3447, %v3482
  %v3484 = vrcp.pop %v3466
  %v3485 = vmul.f32 %v3448, %v3484
  %v3486 = vrcp.pop %v3469
  %v3487 = vmul.f32 %v3449, %v3486
  %v3488 = vrcp.pop %v3472
  %v3489 = vmul.f32 %v3450, %v3488
  %v3490 = vrcp.pop %v3475
  %v3491 = vmul.f32 %v3451, %v3490
  %v3492 = vmul.f32 %v3477, %v3074
  %v3493 = vmul.f32 %v3479, %v3079
  %v3494 = vmul.f32 %v3481, %v3084
  %v3495 = vmul.f32 %v3483, %v3089
  %v3496 = vmul.f32 %v3485, %v3094
  %v3497 = vmul.f32 %v3487, %v3099
  %v3498 = vmul.f32 %v3489, %v3104
  %v3499 = vmul.f32 %v3491, %v3109
  %3500 = vmatprep.subr.mxu0 0.0
  %3501 = vmatpush1.msra.mxu0 %v3492
  %3502 = vmatprep.subr.mxu0 0.0
  %3503 = vmatpush1.msra.mxu0 %v3493
  %3504 = vmatprep.subr.mxu0 0.0
  %3505 = vmatpush1.msra.mxu0 %v3494
  %3506 = vmatprep.subr.mxu0 0.0
  %3507 = vmatpush1.msra.mxu0 %v3495
  %3508 = vmatprep.subr.mxu0 0.0
  %3509 = vmatpush1.msra.mxu0 %v3496
  %3510 = vmatprep.subr.mxu0 0.0
  %3511 = vmatpush1.msra.mxu0 %v3497
  %3512 = vmatprep.subr.mxu0 0.0
  %3513 = vmatpush1.msra.mxu0 %v3498
  %3514 = vmatprep.subr.mxu0 0.0
  %3515 = vmatpush1.msra.mxu0 %v3499
  %3516 = vmatprep.subr.mxu0 0.0
  %3517 = vmatpush1.msra.mxu0 0.0
  %3518 = vmatprep.subr.mxu0 0.0
  %3519 = vmatpush1.msra.mxu0 0.0
  %3520 = vmatprep.subr.mxu0 0.0
  %3521 = vmatpush1.msra.mxu0 0.0
  %3522 = vmatprep.subr.mxu0 0.0
  %3523 = vmatpush1.msra.mxu0 0.0
  %3524 = vmatprep.subr.mxu0 0.0
  %3525 = vmatpush1.msra.mxu0 0.0
  %3526 = vmatprep.subr.mxu0 0.0
  %3527 = vmatpush1.msra.mxu0 0.0
  %3528 = vmatprep.subr.mxu0 0.0
  %3529 = vmatpush1.msra.mxu0 0.0
  %3530 = vmatprep.subr.mxu0 0.0
  %3531 = vmatpush1.msra.mxu0 0.0
  %3532 = vmatprep.subr.mxu0 0.0
  %3533 = vmatpush1.msra.mxu0 0.0
  %3534 = vmatprep.subr.mxu0 0.0
  %3535 = vmatpush1.msra.mxu0 0.0
  %3536 = vmatprep.subr.mxu0 0.0
  %3537 = vmatpush1.msra.mxu0 0.0
  %3538 = vmatprep.subr.mxu0 0.0
  %3539 = vmatpush1.msra.mxu0 0.0
  %3540 = vmatprep.subr.mxu0 0.0
  %3541 = vmatpush1.msra.mxu0 0.0
  %3542 = vmatprep.subr.mxu0 0.0
  %3543 = vmatpush1.msra.mxu0 0.0
  %3544 = vmatprep.subr.mxu0 0.0
  %3545 = vmatpush1.msra.mxu0 0.0
  %3546 = vmatprep.subr.mxu0 0.0
  %3547 = vmatpush1.msra.mxu0 0.0
  %3548 = vmatprep.subr.mxu0 0.0
  %3549 = vmatpush1.msra.mxu0 0.0
  %3550 = vmatprep.subr.mxu0 0.0
  %3551 = vmatpush1.msra.mxu0 0.0
  %3552 = vmatprep.subr.mxu0 0.0
  %3553 = vmatpush1.msra.mxu0 0.0
  %3554 = vmatprep.subr.mxu0 0.0
  %3555 = vmatpush1.msra.mxu0 0.0
  %3556 = vmatprep.subr.mxu0 0.0
  %3557 = vmatpush1.msra.mxu0 0.0
  %3558 = vmatprep.subr.mxu0 0.0
  %3559 = vmatpush1.msra.mxu0 0.0
  %3560 = vmatprep.subr.mxu0 0.0
  %3561 = vmatpush1.msra.mxu0 0.0
  %3562 = vmatprep.subr.mxu0 0.0
  %3563 = vmatpush1.msra.mxu0 0.0
  %3564 = vmatprep.mubr.f32.mxu0 0.0
  %3565 = vmatmul.mubr.f32.gmra.mrb[0].mxu0 %v2469
  %v3566 = vpop.f32.mrb[0].mxu0
  %v3567 = vadd.f32 0.0, %v3566
  %v3568 = vpop.f32.mrb[0].mxu0
  %3569 = vdwg.mxu0
  %v3570 = vmul.f32 %v3567, %v3567
  %v3572 = vsel %vm524, %v3570, 0
  %3574 = vmatprep.subr.mxu0 0.0
  %3575 = vmatpush1.msra.mxu0 %v148
  %3576 = vmatprep.subr.mxu0 0.0
  %3577 = vmatpush1.msra.mxu0 %v149
  %3578 = vmatprep.subr.mxu0 0.0
  %3579 = vmatpush1.msra.mxu0 %v150
  %3580 = vmatprep.subr.mxu0 0.0
  %3581 = vmatpush1.msra.mxu0 %v151
  %3582 = vmatprep.subr.mxu0 0.0
  %3583 = vmatpush1.msra.mxu0 %v152
  %3584 = vmatprep.subr.mxu0 0.0
  %3585 = vmatpush1.msra.mxu0 %v153
  %3586 = vmatprep.subr.mxu0 0.0
  %3587 = vmatpush1.msra.mxu0 %v154
  %3588 = vmatprep.subr.mxu0 0.0
  %3589 = vmatpush1.msra.mxu0 %v155
  %3590 = vmatprep.subr.mxu0 0.0
  %3591 = vmatpush1.msra.mxu0 0.0
  %3592 = vmatprep.subr.mxu0 0.0
  %3593 = vmatpush1.msra.mxu0 0.0
  %3594 = vmatprep.subr.mxu0 0.0
  %3595 = vmatpush1.msra.mxu0 0.0
  %3596 = vmatprep.subr.mxu0 0.0
  %3597 = vmatpush1.msra.mxu0 0.0
  %3598 = vmatprep.subr.mxu0 0.0
  %3599 = vmatpush1.msra.mxu0 0.0
  %3600 = vmatprep.subr.mxu0 0.0
  %3601 = vmatpush1.msra.mxu0 0.0
  %3602 = vmatprep.subr.mxu0 0.0
  %3603 = vmatpush1.msra.mxu0 0.0
  %3604 = vmatprep.subr.mxu0 0.0
  %3605 = vmatpush1.msra.mxu0 0.0
  %3606 = vmatprep.subr.mxu0 0.0
  %3607 = vmatpush1.msra.mxu0 0.0
  %3608 = vmatprep.subr.mxu0 0.0
  %3609 = vmatpush1.msra.mxu0 0.0
  %3610 = vmatprep.subr.mxu0 0.0
  %3611 = vmatpush1.msra.mxu0 0.0
  %3612 = vmatprep.subr.mxu0 0.0
  %3613 = vmatpush1.msra.mxu0 0.0
  %3614 = vmatprep.subr.mxu0 0.0
  %3615 = vmatpush1.msra.mxu0 0.0
  %3616 = vmatprep.subr.mxu0 0.0
  %3617 = vmatpush1.msra.mxu0 0.0
  %3618 = vmatprep.subr.mxu0 0.0
  %3619 = vmatpush1.msra.mxu0 0.0
  %3620 = vmatprep.subr.mxu0 0.0
  %3621 = vmatpush1.msra.mxu0 0.0
  %3622 = vmatprep.subr.mxu0 0.0
  %3623 = vmatpush1.msra.mxu0 0.0
  %3624 = vmatprep.subr.mxu0 0.0
  %3625 = vmatpush1.msra.mxu0 0.0
  %3626 = vmatprep.subr.mxu0 0.0
  %3627 = vmatpush1.msra.mxu0 0.0
  %3628 = vmatprep.subr.mxu0 0.0
  %3629 = vmatpush1.msra.mxu0 0.0
  %3630 = vmatprep.subr.mxu0 0.0
  %3631 = vmatpush1.msra.mxu0 0.0
  %3632 = vmatprep.subr.mxu0 0.0
  %3633 = vmatpush1.msra.mxu0 0.0
  %3634 = vmatprep.subr.mxu0 0.0
  %3635 = vmatpush1.msra.mxu0 0.0
  %3636 = vmatprep.subr.mxu0 0.0
  %3637 = vmatpush1.msra.mxu0 0.0
  %3638 = vmatprep.mubr.f32.mxu0 0.0
  %3639 = vmatmul.mubr.f32.gmra.mrb[0].mxu0 %v3572
  %v3640 = vpop.f32.mrb[0].mxu0
  %v3641 = vadd.f32 1e-07, %v3640
  %v3642 = vpop.f32.mrb[0].mxu0
  %3643 = vdwg.mxu0
  %v3644 = vrsqrt.pop %v3641
  %v3645 = vmul.f32 %v3567, %v3644
  %v3646 = vmul.f32 %v3074, %v3645
  %v3647 = vmul.f32 %v3079, %v3645
  %v3648 = vmul.f32 %v3084, %v3645
  %v3649 = vmul.f32 %v3089, %v3645
  %v3650 = vmul.f32 %v3094, %v3645
  %v3651 = vmul.f32 %v3099, %v3645
  %v3652 = vmul.f32 %v3104, %v3645
  %v3653 = vmul.f32 %v3109, %v3645
  %v3655 = vsel %vm524, %v3646, 0
  %v3658 = vsel %vm524, %v3647, 0
  %v3661 = vsel %vm524, %v3648, 0
  %v3664 = vsel %vm524, %v3649, 0
  %v3667 = vsel %vm524, %v3650, 0
  %v3670 = vsel %vm524, %v3651, 0
  %v3673 = vsel %vm524, %v3652, 0
  %v3676 = vsel %vm524, %v3653, 0
  %3678 = vmatprep.subr.mxu0 0.0
  %3679 = vmatpush1.msra.mxu0 %v148
  %3680 = vmatprep.subr.mxu0 0.0
  %3681 = vmatpush1.msra.mxu0 %v149
  %3682 = vmatprep.subr.mxu0 0.0
  %3683 = vmatpush1.msra.mxu0 %v150
  %3684 = vmatprep.subr.mxu0 0.0
  %3685 = vmatpush1.msra.mxu0 %v151
  %3686 = vmatprep.subr.mxu0 0.0
  %3687 = vmatpush1.msra.mxu0 %v152
  %3688 = vmatprep.subr.mxu0 0.0
  %3689 = vmatpush1.msra.mxu0 %v153
  %3690 = vmatprep.subr.mxu0 0.0
  %3691 = vmatpush1.msra.mxu0 %v154
  %3692 = vmatprep.subr.mxu0 0.0
  %3693 = vmatpush1.msra.mxu0 %v155
  %3694 = vmatprep.subr.mxu0 0.0
  %3695 = vmatpush1.msra.mxu0 0.0
  %3696 = vmatprep.subr.mxu0 0.0
  %3697 = vmatpush1.msra.mxu0 0.0
  %3698 = vmatprep.subr.mxu0 0.0
  %3699 = vmatpush1.msra.mxu0 0.0
  %3700 = vmatprep.subr.mxu0 0.0
  %3701 = vmatpush1.msra.mxu0 0.0
  %3702 = vmatprep.subr.mxu0 0.0
  %3703 = vmatpush1.msra.mxu0 0.0
  %3704 = vmatprep.subr.mxu0 0.0
  %3705 = vmatpush1.msra.mxu0 0.0
  %3706 = vmatprep.subr.mxu0 0.0
  %3707 = vmatpush1.msra.mxu0 0.0
  %3708 = vmatprep.subr.mxu0 0.0
  %3709 = vmatpush1.msra.mxu0 0.0
  %3710 = vmatprep.subr.mxu0 0.0
  %3711 = vmatpush1.msra.mxu0 0.0
  %3712 = vmatprep.subr.mxu0 0.0
  %3713 = vmatpush1.msra.mxu0 0.0
  %3714 = vmatprep.subr.mxu0 0.0
  %3715 = vmatpush1.msra.mxu0 0.0
  %3716 = vmatprep.subr.mxu0 0.0
  %3717 = vmatpush1.msra.mxu0 0.0
  %3718 = vmatprep.subr.mxu0 0.0
  %3719 = vmatpush1.msra.mxu0 0.0
  %3720 = vmatprep.subr.mxu0 0.0
  %3721 = vmatpush1.msra.mxu0 0.0
  %3722 = vmatprep.subr.mxu0 0.0
  %3723 = vmatpush1.msra.mxu0 0.0
  %3724 = vmatprep.subr.mxu0 0.0
  %3725 = vmatpush1.msra.mxu0 0.0
  %3726 = vmatprep.subr.mxu0 0.0
  %3727 = vmatpush1.msra.mxu0 0.0
  %3728 = vmatprep.subr.mxu0 0.0
  %3729 = vmatpush1.msra.mxu0 0.0
  %3730 = vmatprep.subr.mxu0 0.0
  %3731 = vmatpush1.msra.mxu0 0.0
  %3732 = vmatprep.subr.mxu0 0.0
  %3733 = vmatpush1.msra.mxu0 0.0
  %3734 = vmatprep.subr.mxu0 0.0
  %3735 = vmatpush1.msra.mxu0 0.0
  %3736 = vmatprep.subr.mxu0 0.0
  %3737 = vmatpush1.msra.mxu0 0.0
  %3738 = vmatprep.subr.mxu0 0.0
  %3739 = vmatpush1.msra.mxu0 0.0
  %3740 = vmatprep.subr.mxu0 0.0
  %3741 = vmatpush1.msra.mxu0 0.0
  %3742 = vmatprep.mubr.f32.mxu0 0.0
  %3743 = vmatmul.mubr.f32.gmra.mrb[0].mxu0 %v3655
  %v3744 = vpop.f32.mrb[0].mxu0
  %v3745 = vadd.f32 0.0, %v3744
  %v3746 = vpop.f32.mrb[0].mxu0
  %3747 = vmatprep.mubr.f32.mxu0 0.0
  %3748 = vmatmul.mubr.f32.gmra.mrb[0].mxu0 %v3658
  %v3749 = vpop.f32.mrb[0].mxu0
  %v3750 = vadd.f32 0.0, %v3749
  %v3751 = vpop.f32.mrb[0].mxu0
  %3752 = vmatprep.mubr.f32.mxu0 0.0
  %3753 = vmatmul.mubr.f32.gmra.mrb[0].mxu0 %v3661
  %v3754 = vpop.f32.mrb[0].mxu0
  %v3755 = vadd.f32 0.0, %v3754
  %v3756 = vpop.f32.mrb[0].mxu0
  %3757 = vmatprep.mubr.f32.mxu0 0.0
  %3758 = vmatmul.mubr.f32.gmra.mrb[0].mxu0 %v3664
  %v3759 = vpop.f32.mrb[0].mxu0
  %v3760 = vadd.f32 0.0, %v3759
  %v3761 = vpop.f32.mrb[0].mxu0
  %3762 = vmatprep.mubr.f32.mxu0 0.0
  %3763 = vmatmul.mubr.f32.gmra.mrb[0].mxu0 %v3667
  %v3764 = vpop.f32.mrb[0].mxu0
  %v3765 = vadd.f32 0.0, %v3764
  %v3766 = vpop.f32.mrb[0].mxu0
  %3767 = vmatprep.mubr.f32.mxu0 0.0
  %3768 = vmatmul.mubr.f32.gmra.mrb[0].mxu0 %v3670
  %v3769 = vpop.f32.mrb[0].mxu0
  %v3770 = vadd.f32 0.0, %v3769
  %v3771 = vpop.f32.mrb[0].mxu0
  %3772 = vmatprep.mubr.f32.mxu0 0.0
  %3773 = vmatmul.mubr.f32.gmra.mrb[0].mxu0 %v3673
  %v3774 = vpop.f32.mrb[0].mxu0
  %v3775 = vadd.f32 0.0, %v3774
  %v3776 = vpop.f32.mrb[0].mxu0
  %3777 = vmatprep.mubr.f32.mxu0 0.0
  %3778 = vmatmul.mubr.f32.gmra.mrb[0].mxu0 %v3676
  %v3779 = vpop.f32.mrb[0].mxu0
  %v3780 = vadd.f32 0.0, %v3779
  %v3781 = vpop.f32.mrb[0].mxu0
  %3782 = vdwg.mxu0
  %v3783 = vsel %vm524, %v3745, -inf
  %3784 = vmax.xlane.f32.xlu0 %v3783
  %v3785 = vpop.xlane.xlu0 %3784
  %v3786 = vsel %vm524, %v3750, -inf
  %3787 = vmax.xlane.f32.xlu0 %v3786
  %v3788 = vpop.xlane.xlu0 %3787
  %v3789 = vsel %vm524, %v3755, -inf
  %3790 = vmax.xlane.f32.xlu0 %v3789
  %v3791 = vpop.xlane.xlu0 %3790
  %v3792 = vsel %vm524, %v3760, -inf
  %3793 = vmax.xlane.f32.xlu0 %v3792
  %v3794 = vpop.xlane.xlu0 %3793
  %v3795 = vsel %vm524, %v3765, -inf
  %3796 = vmax.xlane.f32.xlu0 %v3795
  %v3797 = vpop.xlane.xlu0 %3796
  %v3798 = vsel %vm524, %v3770, -inf
  %3799 = vmax.xlane.f32.xlu0 %v3798
  %v3800 = vpop.xlane.xlu0 %3799
  %v3801 = vsel %vm524, %v3775, -inf
  %3802 = vmax.xlane.f32.xlu0 %v3801
  %v3803 = vpop.xlane.xlu0 %3802
  %v3804 = vsel %vm524, %v3780, -inf
  %3805 = vmax.xlane.f32.xlu0 %v3804
  %v3806 = vpop.xlane.xlu0 %3805
  %v3807 = vsub.f32 %v3745, %v3785
  %v3808 = vsub.f32 %v3750, %v3788
  %v3809 = vsub.f32 %v3755, %v3791
  %v3810 = vsub.f32 %v3760, %v3794
  %v3811 = vsub.f32 %v3765, %v3797
  %v3812 = vsub.f32 %v3770, %v3800
  %v3813 = vsub.f32 %v3775, %v3803
  %v3814 = vsub.f32 %v3780, %v3806
  %v3815 = vmul.f32 %v3807, 1.442695
  %v3816 = vpow.pop %v3815
  %v3817 = vmul.f32 %v3808, 1.442695
  %v3818 = vpow.pop %v3817
  %v3819 = vmul.f32 %v3809, 1.442695
  %v3820 = vpow.pop %v3819
  %v3821 = vmul.f32 %v3810, 1.442695
  %v3822 = vpow.pop %v3821
  %v3823 = vmul.f32 %v3811, 1.442695
  %v3824 = vpow.pop %v3823
  %v3825 = vmul.f32 %v3812, 1.442695
  %v3826 = vpow.pop %v3825
  %v3827 = vmul.f32 %v3813, 1.442695
  %v3828 = vpow.pop %v3827
  %v3829 = vmul.f32 %v3814, 1.442695
  %v3830 = vpow.pop %v3829
  %v3831 = vmul.f32 %v3816, 8.0
  %v3832 = vmul.f32 %v3818, 8.0
  %v3833 = vmul.f32 %v3820, 8.0
  %v3834 = vmul.f32 %v3822, 8.0
  %v3835 = vmul.f32 %v3824, 8.0
  %v3836 = vmul.f32 %v3826, 8.0
  %v3837 = vmul.f32 %v3828, 8.0
  %v3838 = vmul.f32 %v3830, 8.0
  %v3839 = vsel %vm524, %v3816, 0.0
  %3840 = vadd.xlane.f32.xlu0 %v3839
  %v3841 = vpop.xlane.xlu0 %3840
  %v3842 = vsel %vm524, %v3818, 0.0
  %3843 = vadd.xlane.f32.xlu0 %v3842
  %v3844 = vpop.xlane.xlu0 %3843
  %v3845 = vsel %vm524, %v3820, 0.0
  %3846 = vadd.xlane.f32.xlu0 %v3845
  %v3847 = vpop.xlane.xlu0 %3846
  %v3848 = vsel %vm524, %v3822, 0.0
  %3849 = vadd.xlane.f32.xlu0 %v3848
  %v3850 = vpop.xlane.xlu0 %3849
  %v3851 = vsel %vm524, %v3824, 0.0
  %3852 = vadd.xlane.f32.xlu0 %v3851
  %v3853 = vpop.xlane.xlu0 %3852
  %v3854 = vsel %vm524, %v3826, 0.0
  %3855 = vadd.xlane.f32.xlu0 %v3854
  %v3856 = vpop.xlane.xlu0 %3855
  %v3857 = vsel %vm524, %v3828, 0.0
  %3858 = vadd.xlane.f32.xlu0 %v3857
  %v3859 = vpop.xlane.xlu0 %3858
  %v3860 = vsel %vm524, %v3830, 0.0
  %3861 = vadd.xlane.f32.xlu0 %v3860
  %v3862 = vpop.xlane.xlu0 %3861
  %v3863 = vrcp.pop %v3841
  %v3864 = vmul.f32 %v3831, %v3863
  %v3865 = vrcp.pop %v3844
  %v3866 = vmul.f32 %v3832, %v3865
  %v3867 = vrcp.pop %v3847
  %v3868 = vmul.f32 %v3833, %v3867
  %v3869 = vrcp.pop %v3850
  %v3870 = vmul.f32 %v3834, %v3869
  %v3871 = vrcp.pop %v3853
  %v3872 = vmul.f32 %v3835, %v3871
  %v3873 = vrcp.pop %v3856
  %v3874 = vmul.f32 %v3836, %v3873
  %v3875 = vrcp.pop %v3859
  %v3876 = vmul.f32 %v3837, %v3875
  %v3877 = vrcp.pop %v3862
  %v3878 = vmul.f32 %v3838, %v3877
  %v3879 = vmul.f32 %v3864, %v3074
  %v3880 = vmul.f32 %v3866, %v3079
  %v3881 = vmul.f32 %v3868, %v3084
  %v3882 = vmul.f32 %v3870, %v3089
  %v3883 = vmul.f32 %v3872, %v3094
  %v3884 = vmul.f32 %v3874, %v3099
  %v3885 = vmul.f32 %v3876, %v3104
  %v3886 = vmul.f32 %v3878, %v3109
  %3887 = vmatprep.subr.mxu0 0.0
  %3888 = vmatpush1.msra.mxu0 %v3879
  %3889 = vmatprep.subr.mxu0 0.0
  %3890 = vmatpush1.msra.mxu0 %v3880
  %3891 = vmatprep.subr.mxu0 0.0
  %3892 = vmatpush1.msra.mxu0 %v3881
  %3893 = vmatprep.subr.mxu0 0.0
  %3894 = vmatpush1.msra.mxu0 %v3882
  %3895 = vmatprep.subr.mxu0 0.0
  %3896 = vmatpush1.msra.mxu0 %v3883
  %3897 = vmatprep.subr.mxu0 0.0
  %3898 = vmatpush1.msra.mxu0 %v3884
  %3899 = vmatprep.subr.mxu0 0.0
  %3900 = vmatpush1.msra.mxu0 %v3885
  %3901 = vmatprep.subr.mxu0 0.0
  %3902 = vmatpush1.msra.mxu0 %v3886
  %3903 = vmatprep.subr.mxu0 0.0
  %3904 = vmatpush1.msra.mxu0 0.0
  %3905 = vmatprep.subr.mxu0 0.0
  %3906 = vmatpush1.msra.mxu0 0.0
  %3907 = vmatprep.subr.mxu0 0.0
  %3908 = vmatpush1.msra.mxu0 0.0
  %3909 = vmatprep.subr.mxu0 0.0
  %3910 = vmatpush1.msra.mxu0 0.0
  %3911 = vmatprep.subr.mxu0 0.0
  %3912 = vmatpush1.msra.mxu0 0.0
  %3913 = vmatprep.subr.mxu0 0.0
  %3914 = vmatpush1.msra.mxu0 0.0
  %3915 = vmatprep.subr.mxu0 0.0
  %3916 = vmatpush1.msra.mxu0 0.0
  %3917 = vmatprep.subr.mxu0 0.0
  %3918 = vmatpush1.msra.mxu0 0.0
  %3919 = vmatprep.subr.mxu0 0.0
  %3920 = vmatpush1.msra.mxu0 0.0
  %3921 = vmatprep.subr.mxu0 0.0
  %3922 = vmatpush1.msra.mxu0 0.0
  %3923 = vmatprep.subr.mxu0 0.0
  %3924 = vmatpush1.msra.mxu0 0.0
  %3925 = vmatprep.subr.mxu0 0.0
  %3926 = vmatpush1.msra.mxu0 0.0
  %3927 = vmatprep.subr.mxu0 0.0
  %3928 = vmatpush1.msra.mxu0 0.0
  %3929 = vmatprep.subr.mxu0 0.0
  %3930 = vmatpush1.msra.mxu0 0.0
  %3931 = vmatprep.subr.mxu0 0.0
  %3932 = vmatpush1.msra.mxu0 0.0
  %3933 = vmatprep.subr.mxu0 0.0
  %3934 = vmatpush1.msra.mxu0 0.0
  %3935 = vmatprep.subr.mxu0 0.0
  %3936 = vmatpush1.msra.mxu0 0.0
  %3937 = vmatprep.subr.mxu0 0.0
  %3938 = vmatpush1.msra.mxu0 0.0
  %3939 = vmatprep.subr.mxu0 0.0
  %3940 = vmatpush1.msra.mxu0 0.0
  %3941 = vmatprep.subr.mxu0 0.0
  %3942 = vmatpush1.msra.mxu0 0.0
  %3943 = vmatprep.subr.mxu0 0.0
  %3944 = vmatpush1.msra.mxu0 0.0
  %3945 = vmatprep.subr.mxu0 0.0
  %3946 = vmatpush1.msra.mxu0 0.0
  %3947 = vmatprep.subr.mxu0 0.0
  %3948 = vmatpush1.msra.mxu0 0.0
  %3949 = vmatprep.subr.mxu0 0.0
  %3950 = vmatpush1.msra.mxu0 0.0
  %3951 = vmatprep.mubr.f32.mxu0 0.0
  %3952 = vmatmul.mubr.f32.gmra.mrb[0].mxu0 %v2469
  %v3953 = vpop.f32.mrb[0].mxu0
  %v3954 = vadd.f32 0.0, %v3953
  %v3955 = vpop.f32.mrb[0].mxu0
  %3956 = vdwg.mxu0
  %v3957 = vmul.f32 %v3954, %v3954
  %v3959 = vsel %vm524, %v3957, 0
  %3961 = vmatprep.subr.mxu0 0.0
  %3962 = vmatpush1.msra.mxu0 %v148
  %3963 = vmatprep.subr.mxu0 0.0
  %3964 = vmatpush1.msra.mxu0 %v149
  %3965 = vmatprep.subr.mxu0 0.0
  %3966 = vmatpush1.msra.mxu0 %v150
  %3967 = vmatprep.subr.mxu0 0.0
  %3968 = vmatpush1.msra.mxu0 %v151
  %3969 = vmatprep.subr.mxu0 0.0
  %3970 = vmatpush1.msra.mxu0 %v152
  %3971 = vmatprep.subr.mxu0 0.0
  %3972 = vmatpush1.msra.mxu0 %v153
  %3973 = vmatprep.subr.mxu0 0.0
  %3974 = vmatpush1.msra.mxu0 %v154
  %3975 = vmatprep.subr.mxu0 0.0
  %3976 = vmatpush1.msra.mxu0 %v155
  %3977 = vmatprep.subr.mxu0 0.0
  %3978 = vmatpush1.msra.mxu0 0.0
  %3979 = vmatprep.subr.mxu0 0.0
  %3980 = vmatpush1.msra.mxu0 0.0
  %3981 = vmatprep.subr.mxu0 0.0
  %3982 = vmatpush1.msra.mxu0 0.0
  %3983 = vmatprep.subr.mxu0 0.0
  %3984 = vmatpush1.msra.mxu0 0.0
  %3985 = vmatprep.subr.mxu0 0.0
  %3986 = vmatpush1.msra.mxu0 0.0
  %3987 = vmatprep.subr.mxu0 0.0
  %3988 = vmatpush1.msra.mxu0 0.0
  %3989 = vmatprep.subr.mxu0 0.0
  %3990 = vmatpush1.msra.mxu0 0.0
  %3991 = vmatprep.subr.mxu0 0.0
  %3992 = vmatpush1.msra.mxu0 0.0
  %3993 = vmatprep.subr.mxu0 0.0
  %3994 = vmatpush1.msra.mxu0 0.0
  %3995 = vmatprep.subr.mxu0 0.0
  %3996 = vmatpush1.msra.mxu0 0.0
  %3997 = vmatprep.subr.mxu0 0.0
  %3998 = vmatpush1.msra.mxu0 0.0
  %3999 = vmatprep.subr.mxu0 0.0
  %4000 = vmatpush1.msra.mxu0 0.0
  %4001 = vmatprep.subr.mxu0 0.0
  %4002 = vmatpush1.msra.mxu0 0.0
  %4003 = vmatprep.subr.mxu0 0.0
  %4004 = vmatpush1.msra.mxu0 0.0
  %4005 = vmatprep.subr.mxu0 0.0
  %4006 = vmatpush1.msra.mxu0 0.0
  %4007 = vmatprep.subr.mxu0 0.0
  %4008 = vmatpush1.msra.mxu0 0.0
  %4009 = vmatprep.subr.mxu0 0.0
  %4010 = vmatpush1.msra.mxu0 0.0
  %4011 = vmatprep.subr.mxu0 0.0
  %4012 = vmatpush1.msra.mxu0 0.0
  %4013 = vmatprep.subr.mxu0 0.0
  %4014 = vmatpush1.msra.mxu0 0.0
  %4015 = vmatprep.subr.mxu0 0.0
  %4016 = vmatpush1.msra.mxu0 0.0
  %4017 = vmatprep.subr.mxu0 0.0
  %4018 = vmatpush1.msra.mxu0 0.0
  %4019 = vmatprep.subr.mxu0 0.0
  %4020 = vmatpush1.msra.mxu0 0.0
  %4021 = vmatprep.subr.mxu0 0.0
  %4022 = vmatpush1.msra.mxu0 0.0
  %4023 = vmatprep.subr.mxu0 0.0
  %4024 = vmatpush1.msra.mxu0 0.0
  %4025 = vmatprep.mubr.f32.mxu0 0.0
  %4026 = vmatmul.mubr.f32.gmra.mrb[0].mxu0 %v3959
  %v4027 = vpop.f32.mrb[0].mxu0
  %v4028 = vadd.f32 1e-07, %v4027
  %v4029 = vpop.f32.mrb[0].mxu0
  %4030 = vdwg.mxu0
  %v4031 = vrsqrt.pop %v4028
  %v4032 = vmul.f32 %v3954, %v4031
  %v4033 = vmul.f32 %v3074, %v4032
  %v4034 = vmul.f32 %v3079, %v4032
  %v4035 = vmul.f32 %v3084, %v4032
  %v4036 = vmul.f32 %v3089, %v4032
  %v4037 = vmul.f32 %v3094, %v4032
  %v4038 = vmul.f32 %v3099, %v4032
  %v4039 = vmul.f32 %v3104, %v4032
  %v4040 = vmul.f32 %v3109, %v4032
  %v4042 = vsel %vm524, %v4033, 0
  %v4045 = vsel %vm524, %v4034, 0
  %v4048 = vsel %vm524, %v4035, 0
  %v4051 = vsel %vm524, %v4036, 0
  %v4054 = vsel %vm524, %v4037, 0
  %v4057 = vsel %vm524, %v4038, 0
  %v4060 = vsel %vm524, %v4039, 0
  %v4063 = vsel %vm524, %v4040, 0
  %4065 = vmatprep.subr.mxu0 0.0
  %4066 = vmatpush1.msra.mxu0 %v148
  %4067 = vmatprep.subr.mxu0 0.0
  %4068 = vmatpush1.msra.mxu0 %v149
  %4069 = vmatprep.subr.mxu0 0.0
  %4070 = vmatpush1.msra.mxu0 %v150
  %4071 = vmatprep.subr.mxu0 0.0
  %4072 = vmatpush1.msra.mxu0 %v151
  %4073 = vmatprep.subr.mxu0 0.0
  %4074 = vmatpush1.msra.mxu0 %v152
  %4075 = vmatprep.subr.mxu0 0.0
  %4076 = vmatpush1.msra.mxu0 %v153
  %4077 = vmatprep.subr.mxu0 0.0
  %4078 = vmatpush1.msra.mxu0 %v154
  %4079 = vmatprep.subr.mxu0 0.0
  %4080 = vmatpush1.msra.mxu0 %v155
  %4081 = vmatprep.subr.mxu0 0.0
  %4082 = vmatpush1.msra.mxu0 0.0
  %4083 = vmatprep.subr.mxu0 0.0
  %4084 = vmatpush1.msra.mxu0 0.0
  %4085 = vmatprep.subr.mxu0 0.0
  %4086 = vmatpush1.msra.mxu0 0.0
  %4087 = vmatprep.subr.mxu0 0.0
  %4088 = vmatpush1.msra.mxu0 0.0
  %4089 = vmatprep.subr.mxu0 0.0
  %4090 = vmatpush1.msra.mxu0 0.0
  %4091 = vmatprep.subr.mxu0 0.0
  %4092 = vmatpush1.msra.mxu0 0.0
  %4093 = vmatprep.subr.mxu0 0.0
  %4094 = vmatpush1.msra.mxu0 0.0
  %4095 = vmatprep.subr.mxu0 0.0
  %4096 = vmatpush1.msra.mxu0 0.0
  %4097 = vmatprep.subr.mxu0 0.0
  %4098 = vmatpush1.msra.mxu0 0.0
  %4099 = vmatprep.subr.mxu0 0.0
  %4100 = vmatpush1.msra.mxu0 0.0
  %4101 = vmatprep.subr.mxu0 0.0
  %4102 = vmatpush1.msra.mxu0 0.0
  %4103 = vmatprep.subr.mxu0 0.0
  %4104 = vmatpush1.msra.mxu0 0.0
  %4105 = vmatprep.subr.mxu0 0.0
  %4106 = vmatpush1.msra.mxu0 0.0
  %4107 = vmatprep.subr.mxu0 0.0
  %4108 = vmatpush1.msra.mxu0 0.0
  %4109 = vmatprep.subr.mxu0 0.0
  %4110 = vmatpush1.msra.mxu0 0.0
  %4111 = vmatprep.subr.mxu0 0.0
  %4112 = vmatpush1.msra.mxu0 0.0
  %4113 = vmatprep.subr.mxu0 0.0
  %4114 = vmatpush1.msra.mxu0 0.0
  %4115 = vmatprep.subr.mxu0 0.0
  %4116 = vmatpush1.msra.mxu0 0.0
  %4117 = vmatprep.subr.mxu0 0.0
  %4118 = vmatpush1.msra.mxu0 0.0
  %4119 = vmatprep.subr.mxu0 0.0
  %4120 = vmatpush1.msra.mxu0 0.0
  %4121 = vmatprep.subr.mxu0 0.0
  %4122 = vmatpush1.msra.mxu0 0.0
  %4123 = vmatprep.subr.mxu0 0.0
  %4124 = vmatpush1.msra.mxu0 0.0
  %4125 = vmatprep.subr.mxu0 0.0
  %4126 = vmatpush1.msra.mxu0 0.0
  %4127 = vmatprep.subr.mxu0 0.0
  %4128 = vmatpush1.msra.mxu0 0.0
  %4129 = vmatprep.mubr.f32.mxu0 0.0
  %4130 = vmatmul.mubr.f32.gmra.mrb[0].mxu0 %v4042
  %v4131 = vpop.f32.mrb[0].mxu0
  %v4132 = vadd.f32 0.0, %v4131
  %v4133 = vpop.f32.mrb[0].mxu0
  %4134 = vmatprep.mubr.f32.mxu0 0.0
  %4135 = vmatmul.mubr.f32.gmra.mrb[0].mxu0 %v4045
  %v4136 = vpop.f32.mrb[0].mxu0
  %v4137 = vadd.f32 0.0, %v4136
  %v4138 = vpop.f32.mrb[0].mxu0
  %4139 = vmatprep.mubr.f32.mxu0 0.0
  %4140 = vmatmul.mubr.f32.gmra.mrb[0].mxu0 %v4048
  %v4141 = vpop.f32.mrb[0].mxu0
  %v4142 = vadd.f32 0.0, %v4141
  %v4143 = vpop.f32.mrb[0].mxu0
  %4144 = vmatprep.mubr.f32.mxu0 0.0
  %4145 = vmatmul.mubr.f32.gmra.mrb[0].mxu0 %v4051
  %v4146 = vpop.f32.mrb[0].mxu0
  %v4147 = vadd.f32 0.0, %v4146
  %v4148 = vpop.f32.mrb[0].mxu0
  %4149 = vmatprep.mubr.f32.mxu0 0.0
  %4150 = vmatmul.mubr.f32.gmra.mrb[0].mxu0 %v4054
  %v4151 = vpop.f32.mrb[0].mxu0
  %v4152 = vadd.f32 0.0, %v4151
  %v4153 = vpop.f32.mrb[0].mxu0
  %4154 = vmatprep.mubr.f32.mxu0 0.0
  %4155 = vmatmul.mubr.f32.gmra.mrb[0].mxu0 %v4057
  %v4156 = vpop.f32.mrb[0].mxu0
  %v4157 = vadd.f32 0.0, %v4156
  %v4158 = vpop.f32.mrb[0].mxu0
  %4159 = vmatprep.mubr.f32.mxu0 0.0
  %4160 = vmatmul.mubr.f32.gmra.mrb[0].mxu0 %v4060
  %v4161 = vpop.f32.mrb[0].mxu0
  %v4162 = vadd.f32 0.0, %v4161
  %v4163 = vpop.f32.mrb[0].mxu0
  %4164 = vmatprep.mubr.f32.mxu0 0.0
  %4165 = vmatmul.mubr.f32.gmra.mrb[0].mxu0 %v4063
  %v4166 = vpop.f32.mrb[0].mxu0
  %v4167 = vadd.f32 0.0, %v4166
  %v4168 = vpop.f32.mrb[0].mxu0
  %4169 = vdwg.mxu0
  %v4170 = vsel %vm524, %v4132, -inf
  %4171 = vmax.xlane.f32.xlu0 %v4170
  %v4172 = vpop.xlane.xlu0 %4171
  %v4173 = vsel %vm524, %v4137, -inf
  %4174 = vmax.xlane.f32.xlu0 %v4173
  %v4175 = vpop.xlane.xlu0 %4174
  %v4176 = vsel %vm524, %v4142, -inf
  %4177 = vmax.xlane.f32.xlu0 %v4176
  %v4178 = vpop.xlane.xlu0 %4177
  %v4179 = vsel %vm524, %v4147, -inf
  %4180 = vmax.xlane.f32.xlu0 %v4179
  %v4181 = vpop.xlane.xlu0 %4180
  %v4182 = vsel %vm524, %v4152, -inf
  %4183 = vmax.xlane.f32.xlu0 %v4182
  %v4184 = vpop.xlane.xlu0 %4183
  %v4185 = vsel %vm524, %v4157, -inf
  %4186 = vmax.xlane.f32.xlu0 %v4185
  %v4187 = vpop.xlane.xlu0 %4186
  %v4188 = vsel %vm524, %v4162, -inf
  %4189 = vmax.xlane.f32.xlu0 %v4188
  %v4190 = vpop.xlane.xlu0 %4189
  %v4191 = vsel %vm524, %v4167, -inf
  %4192 = vmax.xlane.f32.xlu0 %v4191
  %v4193 = vpop.xlane.xlu0 %4192
  %v4194 = vsub.f32 %v4132, %v4172
  %v4195 = vsub.f32 %v4137, %v4175
  %v4196 = vsub.f32 %v4142, %v4178
  %v4197 = vsub.f32 %v4147, %v4181
  %v4198 = vsub.f32 %v4152, %v4184
  %v4199 = vsub.f32 %v4157, %v4187
  %v4200 = vsub.f32 %v4162, %v4190
  %v4201 = vsub.f32 %v4167, %v4193
  %v4202 = vmul.f32 %v4194, 1.442695
  %v4203 = vpow.pop %v4202
  %v4204 = vmul.f32 %v4195, 1.442695
  %v4205 = vpow.pop %v4204
  %v4206 = vmul.f32 %v4196, 1.442695
  %v4207 = vpow.pop %v4206
  %v4208 = vmul.f32 %v4197, 1.442695
  %v4209 = vpow.pop %v4208
  %v4210 = vmul.f32 %v4198, 1.442695
  %v4211 = vpow.pop %v4210
  %v4212 = vmul.f32 %v4199, 1.442695
  %v4213 = vpow.pop %v4212
  %v4214 = vmul.f32 %v4200, 1.442695
  %v4215 = vpow.pop %v4214
  %v4216 = vmul.f32 %v4201, 1.442695
  %v4217 = vpow.pop %v4216
  %v4218 = vmul.f32 %v4203, 8.0
  %v4219 = vmul.f32 %v4205, 8.0
  %v4220 = vmul.f32 %v4207, 8.0
  %v4221 = vmul.f32 %v4209, 8.0
  %v4222 = vmul.f32 %v4211, 8.0
  %v4223 = vmul.f32 %v4213, 8.0
  %v4224 = vmul.f32 %v4215, 8.0
  %v4225 = vmul.f32 %v4217, 8.0
  %v4226 = vsel %vm524, %v4203, 0.0
  %4227 = vadd.xlane.f32.xlu0 %v4226
  %v4228 = vpop.xlane.xlu0 %4227
  %v4229 = vsel %vm524, %v4205, 0.0
  %4230 = vadd.xlane.f32.xlu0 %v4229
  %v4231 = vpop.xlane.xlu0 %4230
  %v4232 = vsel %vm524, %v4207, 0.0
  %4233 = vadd.xlane.f32.xlu0 %v4232
  %v4234 = vpop.xlane.xlu0 %4233
  %v4235 = vsel %vm524, %v4209, 0.0
  %4236 = vadd.xlane.f32.xlu0 %v4235
  %v4237 = vpop.xlane.xlu0 %4236
  %v4238 = vsel %vm524, %v4211, 0.0
  %4239 = vadd.xlane.f32.xlu0 %v4238
  %v4240 = vpop.xlane.xlu0 %4239
  %v4241 = vsel %vm524, %v4213, 0.0
  %4242 = vadd.xlane.f32.xlu0 %v4241
  %v4243 = vpop.xlane.xlu0 %4242
  %v4244 = vsel %vm524, %v4215, 0.0
  %4245 = vadd.xlane.f32.xlu0 %v4244
  %v4246 = vpop.xlane.xlu0 %4245
  %v4247 = vsel %vm524, %v4217, 0.0
  %4248 = vadd.xlane.f32.xlu0 %v4247
  %v4249 = vpop.xlane.xlu0 %4248
  %v4250 = vrcp.pop %v4228
  %v4251 = vmul.f32 %v4218, %v4250
  %v4252 = vrcp.pop %v4231
  %v4253 = vmul.f32 %v4219, %v4252
  %v4254 = vrcp.pop %v4234
  %v4255 = vmul.f32 %v4220, %v4254
  %v4256 = vrcp.pop %v4237
  %v4257 = vmul.f32 %v4221, %v4256
  %v4258 = vrcp.pop %v4240
  %v4259 = vmul.f32 %v4222, %v4258
  %v4260 = vrcp.pop %v4243
  %v4261 = vmul.f32 %v4223, %v4260
  %v4262 = vrcp.pop %v4246
  %v4263 = vmul.f32 %v4224, %v4262
  %v4264 = vrcp.pop %v4249
  %v4265 = vmul.f32 %v4225, %v4264
  %v4266 = vmul.f32 %v4251, %v3074
  %v4267 = vmul.f32 %v4253, %v3079
  %v4268 = vmul.f32 %v4255, %v3084
  %v4269 = vmul.f32 %v4257, %v3089
  %v4270 = vmul.f32 %v4259, %v3094
  %v4271 = vmul.f32 %v4261, %v3099
  %v4272 = vmul.f32 %v4263, %v3104
  %v4273 = vmul.f32 %v4265, %v3109
  %4274 = vmatprep.subr.mxu0 0.0
  %4275 = vmatpush1.msra.mxu0 %v4266
  %4276 = vmatprep.subr.mxu0 0.0
  %4277 = vmatpush1.msra.mxu0 %v4267
  %4278 = vmatprep.subr.mxu0 0.0
  %4279 = vmatpush1.msra.mxu0 %v4268
  %4280 = vmatprep.subr.mxu0 0.0
  %4281 = vmatpush1.msra.mxu0 %v4269
  %4282 = vmatprep.subr.mxu0 0.0
  %4283 = vmatpush1.msra.mxu0 %v4270
  %4284 = vmatprep.subr.mxu0 0.0
  %4285 = vmatpush1.msra.mxu0 %v4271
  %4286 = vmatprep.subr.mxu0 0.0
  %4287 = vmatpush1.msra.mxu0 %v4272
  %4288 = vmatprep.subr.mxu0 0.0
  %4289 = vmatpush1.msra.mxu0 %v4273
  %4290 = vmatprep.subr.mxu0 0.0
  %4291 = vmatpush1.msra.mxu0 0.0
  %4292 = vmatprep.subr.mxu0 0.0
  %4293 = vmatpush1.msra.mxu0 0.0
  %4294 = vmatprep.subr.mxu0 0.0
  %4295 = vmatpush1.msra.mxu0 0.0
  %4296 = vmatprep.subr.mxu0 0.0
  %4297 = vmatpush1.msra.mxu0 0.0
  %4298 = vmatprep.subr.mxu0 0.0
  %4299 = vmatpush1.msra.mxu0 0.0
  %4300 = vmatprep.subr.mxu0 0.0
  %4301 = vmatpush1.msra.mxu0 0.0
  %4302 = vmatprep.subr.mxu0 0.0
  %4303 = vmatpush1.msra.mxu0 0.0
  %4304 = vmatprep.subr.mxu0 0.0
  %4305 = vmatpush1.msra.mxu0 0.0
  %4306 = vmatprep.subr.mxu0 0.0
  %4307 = vmatpush1.msra.mxu0 0.0
  %4308 = vmatprep.subr.mxu0 0.0
  %4309 = vmatpush1.msra.mxu0 0.0
  %4310 = vmatprep.subr.mxu0 0.0
  %4311 = vmatpush1.msra.mxu0 0.0
  %4312 = vmatprep.subr.mxu0 0.0
  %4313 = vmatpush1.msra.mxu0 0.0
  %4314 = vmatprep.subr.mxu0 0.0
  %4315 = vmatpush1.msra.mxu0 0.0
  %4316 = vmatprep.subr.mxu0 0.0
  %4317 = vmatpush1.msra.mxu0 0.0
  %4318 = vmatprep.subr.mxu0 0.0
  %4319 = vmatpush1.msra.mxu0 0.0
  %4320 = vmatprep.subr.mxu0 0.0
  %4321 = vmatpush1.msra.mxu0 0.0
  %4322 = vmatprep.subr.mxu0 0.0
  %4323 = vmatpush1.msra.mxu0 0.0
  %4324 = vmatprep.subr.mxu0 0.0
  %4325 = vmatpush1.msra.mxu0 0.0
  %4326 = vmatprep.subr.mxu0 0.0
  %4327 = vmatpush1.msra.mxu0 0.0
  %4328 = vmatprep.subr.mxu0 0.0
  %4329 = vmatpush1.msra.mxu0 0.0
  %4330 = vmatprep.subr.mxu0 0.0
  %4331 = vmatpush1.msra.mxu0 0.0
  %4332 = vmatprep.subr.mxu0 0.0
  %4333 = vmatpush1.msra.mxu0 0.0
  %4334 = vmatprep.subr.mxu0 0.0
  %4335 = vmatpush1.msra.mxu0 0.0
  %4336 = vmatprep.subr.mxu0 0.0
  %4337 = vmatpush1.msra.mxu0 0.0
  %4338 = vmatprep.mubr.f32.mxu0 0.0
  %4339 = vmatmul.mubr.f32.gmra.mrb[0].mxu0 %v2469
  %v4340 = vpop.f32.mrb[0].mxu0
  %v4341 = vadd.f32 0.0, %v4340
  %v4342 = vpop.f32.mrb[0].mxu0
  %4343 = vdwg.mxu0
  %v4344 = vmul.f32 %v4341, %v4341
  %v4346 = vsel %vm524, %v4344, 0
  %4348 = vmatprep.subr.mxu0 0.0
  %4349 = vmatpush1.msra.mxu0 %v148
  %4350 = vmatprep.subr.mxu0 0.0
  %4351 = vmatpush1.msra.mxu0 %v149
  %4352 = vmatprep.subr.mxu0 0.0
  %4353 = vmatpush1.msra.mxu0 %v150
  %4354 = vmatprep.subr.mxu0 0.0
  %4355 = vmatpush1.msra.mxu0 %v151
  %4356 = vmatprep.subr.mxu0 0.0
  %4357 = vmatpush1.msra.mxu0 %v152
  %4358 = vmatprep.subr.mxu0 0.0
  %4359 = vmatpush1.msra.mxu0 %v153
  %4360 = vmatprep.subr.mxu0 0.0
  %4361 = vmatpush1.msra.mxu0 %v154
  %4362 = vmatprep.subr.mxu0 0.0
  %4363 = vmatpush1.msra.mxu0 %v155
  %4364 = vmatprep.subr.mxu0 0.0
  %4365 = vmatpush1.msra.mxu0 0.0
  %4366 = vmatprep.subr.mxu0 0.0
  %4367 = vmatpush1.msra.mxu0 0.0
  %4368 = vmatprep.subr.mxu0 0.0
  %4369 = vmatpush1.msra.mxu0 0.0
  %4370 = vmatprep.subr.mxu0 0.0
  %4371 = vmatpush1.msra.mxu0 0.0
  %4372 = vmatprep.subr.mxu0 0.0
  %4373 = vmatpush1.msra.mxu0 0.0
  %4374 = vmatprep.subr.mxu0 0.0
  %4375 = vmatpush1.msra.mxu0 0.0
  %4376 = vmatprep.subr.mxu0 0.0
  %4377 = vmatpush1.msra.mxu0 0.0
  %4378 = vmatprep.subr.mxu0 0.0
  %4379 = vmatpush1.msra.mxu0 0.0
  %4380 = vmatprep.subr.mxu0 0.0
  %4381 = vmatpush1.msra.mxu0 0.0
  %4382 = vmatprep.subr.mxu0 0.0
  %4383 = vmatpush1.msra.mxu0 0.0
  %4384 = vmatprep.subr.mxu0 0.0
  %4385 = vmatpush1.msra.mxu0 0.0
  %4386 = vmatprep.subr.mxu0 0.0
  %4387 = vmatpush1.msra.mxu0 0.0
  %4388 = vmatprep.subr.mxu0 0.0
  %4389 = vmatpush1.msra.mxu0 0.0
  %4390 = vmatprep.subr.mxu0 0.0
  %4391 = vmatpush1.msra.mxu0 0.0
  %4392 = vmatprep.subr.mxu0 0.0
  %4393 = vmatpush1.msra.mxu0 0.0
  %4394 = vmatprep.subr.mxu0 0.0
  %4395 = vmatpush1.msra.mxu0 0.0
  %4396 = vmatprep.subr.mxu0 0.0
  %4397 = vmatpush1.msra.mxu0 0.0
  %4398 = vmatprep.subr.mxu0 0.0
  %4399 = vmatpush1.msra.mxu0 0.0
  %4400 = vmatprep.subr.mxu0 0.0
  %4401 = vmatpush1.msra.mxu0 0.0
  %4402 = vmatprep.subr.mxu0 0.0
  %4403 = vmatpush1.msra.mxu0 0.0
  %4404 = vmatprep.subr.mxu0 0.0
  %4405 = vmatpush1.msra.mxu0 0.0
  %4406 = vmatprep.subr.mxu0 0.0
  %4407 = vmatpush1.msra.mxu0 0.0
  %4408 = vmatprep.subr.mxu0 0.0
  %4409 = vmatpush1.msra.mxu0 0.0
  %4410 = vmatprep.subr.mxu0 0.0
  %4411 = vmatpush1.msra.mxu0 0.0
  %4412 = vmatprep.mubr.f32.mxu0 0.0
  %4413 = vmatmul.mubr.f32.gmra.mrb[0].mxu0 %v4346
  %v4414 = vpop.f32.mrb[0].mxu0
  %v4415 = vadd.f32 1e-07, %v4414
  %v4416 = vpop.f32.mrb[0].mxu0
  %4417 = vdwg.mxu0
  %v4418 = vrsqrt.pop %v4415
  %v4419 = vmul.f32 %v4341, %v4418
  %v4421 = vsel %vm524, %v4419, 0
  %4423 = vmatprep.subr.mxu0 0.0
  %4424 = vmatpush1.msra.mxu0 %v132
  %4425 = vmatprep.subr.mxu0 0.0
  %4426 = vmatpush1.msra.mxu0 %v133
  %4427 = vmatprep.subr.mxu0 0.0
  %4428 = vmatpush1.msra.mxu0 %v134
  %4429 = vmatprep.subr.mxu0 0.0
  %4430 = vmatpush1.msra.mxu0 %v135
  %4431 = vmatprep.subr.mxu0 0.0
  %4432 = vmatpush1.msra.mxu0 %v136
  %4433 = vmatprep.subr.mxu0 0.0
  %4434 = vmatpush1.msra.mxu0 %v137
  %4435 = vmatprep.subr.mxu0 0.0
  %4436 = vmatpush1.msra.mxu0 %v138
  %4437 = vmatprep.subr.mxu0 0.0
  %4438 = vmatpush1.msra.mxu0 %v139
  %4439 = vmatprep.subr.mxu0 0.0
  %4440 = vmatpush1.msra.mxu0 0.0
  %4441 = vmatprep.subr.mxu0 0.0
  %4442 = vmatpush1.msra.mxu0 0.0
  %4443 = vmatprep.subr.mxu0 0.0
  %4444 = vmatpush1.msra.mxu0 0.0
  %4445 = vmatprep.subr.mxu0 0.0
  %4446 = vmatpush1.msra.mxu0 0.0
  %4447 = vmatprep.subr.mxu0 0.0
  %4448 = vmatpush1.msra.mxu0 0.0
  %4449 = vmatprep.subr.mxu0 0.0
  %4450 = vmatpush1.msra.mxu0 0.0
  %4451 = vmatprep.subr.mxu0 0.0
  %4452 = vmatpush1.msra.mxu0 0.0
  %4453 = vmatprep.subr.mxu0 0.0
  %4454 = vmatpush1.msra.mxu0 0.0
  %4455 = vmatprep.subr.mxu0 0.0
  %4456 = vmatpush1.msra.mxu0 0.0
  %4457 = vmatprep.subr.mxu0 0.0
  %4458 = vmatpush1.msra.mxu0 0.0
  %4459 = vmatprep.subr.mxu0 0.0
  %4460 = vmatpush1.msra.mxu0 0.0
  %4461 = vmatprep.subr.mxu0 0.0
  %4462 = vmatpush1.msra.mxu0 0.0
  %4463 = vmatprep.subr.mxu0 0.0
  %4464 = vmatpush1.msra.mxu0 0.0
  %4465 = vmatprep.subr.mxu0 0.0
  %4466 = vmatpush1.msra.mxu0 0.0
  %4467 = vmatprep.subr.mxu0 0.0
  %4468 = vmatpush1.msra.mxu0 0.0
  %4469 = vmatprep.subr.mxu0 0.0
  %4470 = vmatpush1.msra.mxu0 0.0
  %4471 = vmatprep.subr.mxu0 0.0
  %4472 = vmatpush1.msra.mxu0 0.0
  %4473 = vmatprep.subr.mxu0 0.0
  %4474 = vmatpush1.msra.mxu0 0.0
  %4475 = vmatprep.subr.mxu0 0.0
  %4476 = vmatpush1.msra.mxu0 0.0
  %4477 = vmatprep.subr.mxu0 0.0
  %4478 = vmatpush1.msra.mxu0 0.0
  %4479 = vmatprep.subr.mxu0 0.0
  %4480 = vmatpush1.msra.mxu0 0.0
  %4481 = vmatprep.subr.mxu0 0.0
  %4482 = vmatpush1.msra.mxu0 0.0
  %4483 = vmatprep.subr.mxu0 0.0
  %4484 = vmatpush1.msra.mxu0 0.0
  %4485 = vmatprep.subr.mxu0 0.0
  %4486 = vmatpush1.msra.mxu0 0.0
  %4487 = vmatprep.mubr.f32.mxu0 0.0
  %4488 = vmatmul.mubr.f32.gmra.mrb[0].mxu0 %v4421
  %v4489 = vpop.f32.mrb[0].mxu0
  %v4490 = vadd.f32 %v140, %v4489
  %v4491 = vpop.f32.mrb[0].mxu0
  %4492 = vdwg.mxu0
  %v4493 = vmax.f32 %v4490, 0.0
  %v4494 = vmul.f32 %v2617, %v2904
  %v4495 = vmul.f32 %v2617, %v2975
  %v4496 = vmul.f32 %v2617, %v2982
  %v4497 = vmul.f32 %v2617, %v4493
  %v4498 = vmul.f32 %v2904, %v2975
  %v4499 = vmul.f32 %v2904, %v2982
  %v4500 = vmul.f32 %v2904, %v4493
  %v4501 = vmul.f32 %v2975, %v2982
  %v4502 = vmul.f32 %v2975, %v4493
  %v4503 = vmul.f32 %v2982, %v4493
  %4505 = vrot.lane.b32.xlu0 %v2904, 64
  %v4506 = vpop.permute.xlu0 %4505
  %4509 = vrot.lane.b32.xlu0 %v2982, 64
  %v4510 = vpop.permute.xlu0 %4509
  %4513 = vrot.lane.b32.xlu0 %v4494, 64
  %v4514 = vpop.permute.xlu0 %4513
  %4517 = vrot.lane.b32.xlu0 %v4496, 64
  %v4518 = vpop.permute.xlu0 %4517
  %4521 = vrot.lane.b32.xlu0 %v4498, 64
  %v4522 = vpop.permute.xlu0 %4521
  %4525 = vrot.lane.b32.xlu0 %v4500, 64
  %v4526 = vpop.permute.xlu0 %4525
  %4529 = vrot.lane.b32.xlu0 %v4502, 64
  %v4530 = vpop.permute.xlu0 %4529
  %v4532 = vsel %vm524, %v2617, %v4506
  %v4533 = vsel %vm524, %v2975, %v4510
  %v4534 = vsel %vm524, %v4493, %v4514
  %v4535 = vsel %vm524, %v4495, %v4518
  %v4536 = vsel %vm524, %v4497, %v4522
  %v4537 = vsel %vm524, %v4499, %v4526
  %v4538 = vsel %vm524, %v4501, %v4530
  %v4539 = vld [vmem:[%s2] sm:$0xff]
  %v4540 = vld [vmem:[%s2 + $0x8] sm:$0xff]
  %v4541 = vld [vmem:[%s2 + $0x10] sm:$0xff]
  %v4542 = vld [vmem:[%s2 + $0x18] sm:$0xff]
  %v4543 = vld [vmem:[%s2 + $0x20] sm:$0xff]
  %v4544 = vld [vmem:[%s2 + $0x28] sm:$0xff]
  %v4545 = vld [vmem:[%s2 + $0x30] sm:$0xff]
  %v4546 = vld [vmem:[%s2 + $0x38] sm:$0xff]
  %v4547 = vld [vmem:[%s2 + $0x40] sm:$0xff]
  %v4548 = vld [vmem:[%s2 + $0x48] sm:$0xff]
  %v4549 = vld [vmem:[%s2 + $0x50] sm:$0xff]
  %v4550 = vld [vmem:[%s2 + $0x58] sm:$0xff]
  %v4551 = vld [vmem:[%s2 + $0x60] sm:$0xff]
  %v4552 = vld [vmem:[%s2 + $0x68] sm:$0xff]
  %v4553 = vld [vmem:[%s2 + $0x70] sm:$0xff]
  %v4554 = vld [vmem:[%s2 + $0x78] sm:$0xff]
  %v4555 = vld [vmem:[%s2 + $0x80] sm:$0xff]
  %v4556 = vld [vmem:[%s2 + $0x88] sm:$0xff]
  %v4557 = vld [vmem:[%s2 + $0x90] sm:$0xff]
  %v4558 = vld [vmem:[%s2 + $0x98] sm:$0xff]
  %v4559 = vld [vmem:[%s2 + $0xa0] sm:$0xff]
  %v4560 = vld [vmem:[%s2 + $0xa8] sm:$0xff]
  %v4561 = vld [vmem:[%s2 + $0xb0] sm:$0xff]
  %v4562 = vld [vmem:[%s2 + $0xb8] sm:$0xff]
  %v4563 = vld [vmem:[%s2 + $0xc0] sm:$0xff]
  %v4564 = vld [vmem:[%s2 + $0xc8] sm:$0xff]
  %v4565 = vld [vmem:[%s2 + $0xd0] sm:$0xff]
  %v4566 = vld [vmem:[%s2 + $0xd8] sm:$0xff]
  %v4567 = vld [vmem:[%s2 + $0xe0] sm:$0xff]
  %v4568 = vld [vmem:[%s2 + $0xe8] sm:$0xff]
  %v4569 = vld [vmem:[%s2 + $0xf0] sm:$0xff]
  %v4570 = vld [vmem:[%s2 + $0xf8] sm:$0xff]
  %v4571 = vld [vmem:[%s2 + $0x100] sm:$0xff]
  %v4572 = vld [vmem:[%s2 + $0x108] sm:$0xff]
  %v4573 = vld [vmem:[%s2 + $0x110] sm:$0xff]
  %v4574 = vld [vmem:[%s2 + $0x118] sm:$0xff]
  %v4575 = vld [vmem:[%s2 + $0x120] sm:$0xff]
  %v4576 = vld [vmem:[%s2 + $0x128] sm:$0xff]
  %v4577 = vld [vmem:[%s2 + $0x130] sm:$0xff]
  %v4578 = vld [vmem:[%s2 + $0x138] sm:$0xff]
  %v4579 = vld [vmem:[%s2 + $0x140] sm:$0xff]
  %v4580 = vld [vmem:[%s2 + $0x148] sm:$0xff]
  %v4581 = vld [vmem:[%s2 + $0x150] sm:$0xff]
  %v4582 = vld [vmem:[%s2 + $0x158] sm:$0xff]
  %v4583 = vld [vmem:[%s2 + $0x160] sm:$0xff]
  %v4584 = vld [vmem:[%s2 + $0x168] sm:$0xff]
  %v4585 = vld [vmem:[%s2 + $0x170] sm:$0xff]
  %v4586 = vld [vmem:[%s2 + $0x178] sm:$0xff]
  %v4587 = vld [vmem:[%s2 + $0x180] sm:$0xff]
  %v4588 = vld [vmem:[%s2 + $0x188] sm:$0xff]
  %v4589 = vld [vmem:[%s2 + $0x190] sm:$0xff]
  %v4590 = vld [vmem:[%s2 + $0x198] sm:$0xff]
  %v4591 = vld [vmem:[%s2 + $0x1a0] sm:$0xff]
  %v4592 = vld [vmem:[%s2 + $0x1a8] sm:$0xff]
  %v4593 = vld [vmem:[%s2 + $0x1b0] sm:$0xff]
  %v4594 = vld [vmem:[%s2 + $0x1b8] sm:$0xff]
  %v4595 = vld [vmem:[%s2 + $0x1c0] sm:$0xff]
  %v4596 = vld [vmem:[%s2 + $0x1c8] sm:$0xff]
  %v4597 = vld [vmem:[%s2 + $0x1d0] sm:$0xff]
  %v4598 = vld [vmem:[%s2 + $0x1d8] sm:$0xff]
  %v4599 = vld [vmem:[%s2 + $0x1e0] sm:$0xff]
  %v4600 = vld [vmem:[%s2 + $0x1e8] sm:$0xff]
  %v4601 = vld [vmem:[%s2 + $0x1f0] sm:$0xff]
  %v4602 = vld [vmem:[%s2 + $0x1f8] sm:$0xff]
  %v4603 = vld [vmem:[%s2 + $0x200] sm:$0xff]
  %v4604 = vld [vmem:[%s2 + $0x208] sm:$0xff]
  %v4605 = vld [vmem:[%s2 + $0x210] sm:$0xff]
  %v4606 = vld [vmem:[%s2 + $0x218] sm:$0xff]
  %v4607 = vld [vmem:[%s2 + $0x220] sm:$0xff]
  %v4608 = vld [vmem:[%s2 + $0x228] sm:$0xff]
  %v4609 = vld [vmem:[%s2 + $0x230] sm:$0xff]
  %v4610 = vld [vmem:[%s2 + $0x238] sm:$0xff]
  %v4611 = vld [vmem:[%s2 + $0x240] sm:$0xff]
  %v4612 = vld [vmem:[%s2 + $0x248] sm:$0xff]
  %v4613 = vld [vmem:[%s2 + $0x250] sm:$0xff]
  %v4614 = vld [vmem:[%s2 + $0x258] sm:$0xff]
  %v4615 = vld [vmem:[%s2 + $0x260] sm:$0xff]
  %v4616 = vld [vmem:[%s2 + $0x268] sm:$0xff]
  %v4617 = vld [vmem:[%s2 + $0x270] sm:$0xff]
  %v4618 = vld [vmem:[%s2 + $0x278] sm:$0xff]
  %v4619 = vld [vmem:[%s2 + $0x280] sm:$0xff]
  %v4620 = vld [vmem:[%s2 + $0x288] sm:$0xff]
  %v4621 = vld [vmem:[%s2 + $0x290] sm:$0xff]
  %v4622 = vld [vmem:[%s2 + $0x298] sm:$0xff]
  %v4623 = vld [vmem:[%s2 + $0x2a0] sm:$0xff]
  %v4624 = vld [vmem:[%s2 + $0x2a8] sm:$0xff]
  %v4625 = vld [vmem:[%s2 + $0x2b0] sm:$0xff]
  %v4626 = vld [vmem:[%s2 + $0x2b8] sm:$0xff]
  %v4627 = vld [vmem:[%s2 + $0x2c0] sm:$0xff]
  %v4628 = vld [vmem:[%s2 + $0x2c8] sm:$0xff]
  %v4629 = vld [vmem:[%s2 + $0x2d0] sm:$0xff]
  %v4630 = vld [vmem:[%s2 + $0x2d8] sm:$0xff]
  %v4631 = vld [vmem:[%s2 + $0x2e0] sm:$0xff]
  %v4632 = vld [vmem:[%s2 + $0x2e8] sm:$0xff]
  %v4633 = vld [vmem:[%s2 + $0x2f0] sm:$0xff]
  %v4634 = vld [vmem:[%s2 + $0x2f8] sm:$0xff]
  %v4635 = vld [vmem:[%s2 + $0x300] sm:$0xff]
  %v4636 = vld [vmem:[%s2 + $0x308] sm:$0xff]
  %v4637 = vld [vmem:[%s2 + $0x310] sm:$0xff]
  %v4638 = vld [vmem:[%s2 + $0x318] sm:$0xff]
  %v4639 = vld [vmem:[%s2 + $0x320] sm:$0xff]
  %v4640 = vld [vmem:[%s2 + $0x328] sm:$0xff]
  %v4641 = vld [vmem:[%s2 + $0x330] sm:$0xff]
  %v4642 = vld [vmem:[%s2 + $0x338] sm:$0xff]
  %v4643 = vld [vmem:[%s2 + $0x340] sm:$0xff]
  %v4644 = vld [vmem:[%s2 + $0x348] sm:$0xff]
  %v4645 = vld [vmem:[%s2 + $0x350] sm:$0xff]
  %v4646 = vld [vmem:[%s2 + $0x358] sm:$0xff]
  %v4647 = vld [vmem:[%s2 + $0x360] sm:$0xff]
  %v4648 = vld [vmem:[%s2 + $0x368] sm:$0xff]
  %v4649 = vld [vmem:[%s2 + $0x370] sm:$0xff]
  %v4650 = vld [vmem:[%s2 + $0x378] sm:$0xff]
  %v4651 = vld [vmem:[%s2 + $0x380] sm:$0xff]
  %v4652 = vld [vmem:[%s2 + $0x388] sm:$0xff]
  %v4653 = vld [vmem:[%s2 + $0x390] sm:$0xff]
  %v4654 = vld [vmem:[%s2 + $0x398] sm:$0xff]
  %v4655 = vld [vmem:[%s2 + $0x3a0] sm:$0xff]
  %v4656 = vld [vmem:[%s2 + $0x3a8] sm:$0xff]
  %v4657 = vld [vmem:[%s2 + $0x3b0] sm:$0xff]
  %v4658 = vld [vmem:[%s2 + $0x3b8] sm:$0xff]
  %v4660 = vsel %vm524, %v4503, 0
  %4662 = vmatprep.subr.mxu0 0.0
  %4663 = vmatpush1.msra.mxu0 %v4539
  %4664 = vmatprep.subr.mxu0 0.0
  %4665 = vmatpush1.msra.mxu0 %v4540
  %4666 = vmatprep.subr.mxu0 0.0
  %4667 = vmatpush1.msra.mxu0 %v4541
  %4668 = vmatprep.subr.mxu0 0.0
  %4669 = vmatpush1.msra.mxu0 %v4542
  %4670 = vmatprep.subr.mxu0 0.0
  %4671 = vmatpush1.msra.mxu0 %v4543
  %4672 = vmatprep.subr.mxu0 0.0
  %4673 = vmatpush1.msra.mxu0 %v4544
  %4674 = vmatprep.subr.mxu0 0.0
  %4675 = vmatpush1.msra.mxu0 %v4545
  %4676 = vmatprep.subr.mxu0 0.0
  %4677 = vmatpush1.msra.mxu0 %v4546
  %4678 = vmatprep.subr.mxu0 0.0
  %4679 = vmatpush1.msra.mxu0 %v4547
  %4680 = vmatprep.subr.mxu0 0.0
  %4681 = vmatpush1.msra.mxu0 %v4548
  %4682 = vmatprep.subr.mxu0 0.0
  %4683 = vmatpush1.msra.mxu0 %v4549
  %4684 = vmatprep.subr.mxu0 0.0
  %4685 = vmatpush1.msra.mxu0 %v4550
  %4686 = vmatprep.subr.mxu0 0.0
  %4687 = vmatpush1.msra.mxu0 %v4551
  %4688 = vmatprep.subr.mxu0 0.0
  %4689 = vmatpush1.msra.mxu0 %v4552
  %4690 = vmatprep.subr.mxu0 0.0
  %4691 = vmatpush1.msra.mxu0 %v4553
  %4692 = vmatprep.subr.mxu0 0.0
  %4693 = vmatpush1.msra.mxu0 %v4554
  %4694 = vmatprep.subr.mxu0 0.0
  %4695 = vmatpush1.msra.mxu0 %v4555
  %4696 = vmatprep.subr.mxu0 0.0
  %4697 = vmatpush1.msra.mxu0 %v4556
  %4698 = vmatprep.subr.mxu0 0.0
  %4699 = vmatpush1.msra.mxu0 %v4557
  %4700 = vmatprep.subr.mxu0 0.0
  %4701 = vmatpush1.msra.mxu0 %v4558
  %4702 = vmatprep.subr.mxu0 0.0
  %4703 = vmatpush1.msra.mxu0 %v4559
  %4704 = vmatprep.subr.mxu0 0.0
  %4705 = vmatpush1.msra.mxu0 %v4560
  %4706 = vmatprep.subr.mxu0 0.0
  %4707 = vmatpush1.msra.mxu0 %v4561
  %4708 = vmatprep.subr.mxu0 0.0
  %4709 = vmatpush1.msra.mxu0 %v4562
  %4710 = vmatprep.subr.mxu0 0.0
  %4711 = vmatpush1.msra.mxu0 %v4563
  %4712 = vmatprep.subr.mxu0 0.0
  %4713 = vmatpush1.msra.mxu0 %v4564
  %4714 = vmatprep.subr.mxu0 0.0
  %4715 = vmatpush1.msra.mxu0 %v4565
  %4716 = vmatprep.subr.mxu0 0.0
  %4717 = vmatpush1.msra.mxu0 %v4566
  %4718 = vmatprep.subr.mxu0 0.0
  %4719 = vmatpush1.msra.mxu0 %v4567
  %4720 = vmatprep.subr.mxu0 0.0
  %4721 = vmatpush1.msra.mxu0 %v4568
  %4722 = vmatprep.subr.mxu0 0.0
  %4723 = vmatpush1.msra.mxu0 %v4569
  %4724 = vmatprep.subr.mxu0 0.0
  %4725 = vmatpush1.msra.mxu0 %v4570
  %4726 = vmatprep.mubr.f32.mxu0 %v4533
  %4727 = vmatmul.mubr.f32.gmra.mrb[0].mxu0 %v4532
  %v4728 = vpop.f32.mrb[0].mxu0
  %v4729 = vadd.f32 %v141, %v4728
  %v4730 = vpop.f32.mrb[0].mxu0
  %4731 = vdwg.mxu0
  %4732 = vmatprep.subr.mxu0 0.0
  %4733 = vmatpush1.msra.mxu0 %v4571
  %4734 = vmatprep.subr.mxu0 0.0
  %4735 = vmatpush1.msra.mxu0 %v4572
  %4736 = vmatprep.subr.mxu0 0.0
  %4737 = vmatpush1.msra.mxu0 %v4573
  %4738 = vmatprep.subr.mxu0 0.0
  %4739 = vmatpush1.msra.mxu0 %v4574
  %4740 = vmatprep.subr.mxu0 0.0
  %4741 = vmatpush1.msra.mxu0 %v4575
  %4742 = vmatprep.subr.mxu0 0.0
  %4743 = vmatpush1.msra.mxu0 %v4576
  %4744 = vmatprep.subr.mxu0 0.0
  %4745 = vmatpush1.msra.mxu0 %v4577
  %4746 = vmatprep.subr.mxu0 0.0
  %4747 = vmatpush1.msra.mxu0 %v4578
  %4748 = vmatprep.subr.mxu0 0.0
  %4749 = vmatpush1.msra.mxu0 %v4579
  %4750 = vmatprep.subr.mxu0 0.0
  %4751 = vmatpush1.msra.mxu0 %v4580
  %4752 = vmatprep.subr.mxu0 0.0
  %4753 = vmatpush1.msra.mxu0 %v4581
  %4754 = vmatprep.subr.mxu0 0.0
  %4755 = vmatpush1.msra.mxu0 %v4582
  %4756 = vmatprep.subr.mxu0 0.0
  %4757 = vmatpush1.msra.mxu0 %v4583
  %4758 = vmatprep.subr.mxu0 0.0
  %4759 = vmatpush1.msra.mxu0 %v4584
  %4760 = vmatprep.subr.mxu0 0.0
  %4761 = vmatpush1.msra.mxu0 %v4585
  %4762 = vmatprep.subr.mxu0 0.0
  %4763 = vmatpush1.msra.mxu0 %v4586
  %4764 = vmatprep.subr.mxu0 0.0
  %4765 = vmatpush1.msra.mxu0 %v4587
  %4766 = vmatprep.subr.mxu0 0.0
  %4767 = vmatpush1.msra.mxu0 %v4588
  %4768 = vmatprep.subr.mxu0 0.0
  %4769 = vmatpush1.msra.mxu0 %v4589
  %4770 = vmatprep.subr.mxu0 0.0
  %4771 = vmatpush1.msra.mxu0 %v4590
  %4772 = vmatprep.subr.mxu0 0.0
  %4773 = vmatpush1.msra.mxu0 %v4591
  %4774 = vmatprep.subr.mxu0 0.0
  %4775 = vmatpush1.msra.mxu0 %v4592
  %4776 = vmatprep.subr.mxu0 0.0
  %4777 = vmatpush1.msra.mxu0 %v4593
  %4778 = vmatprep.subr.mxu0 0.0
  %4779 = vmatpush1.msra.mxu0 %v4594
  %4780 = vmatprep.subr.mxu0 0.0
  %4781 = vmatpush1.msra.mxu0 %v4595
  %4782 = vmatprep.subr.mxu0 0.0
  %4783 = vmatpush1.msra.mxu0 %v4596
  %4784 = vmatprep.subr.mxu0 0.0
  %4785 = vmatpush1.msra.mxu0 %v4597
  %4786 = vmatprep.subr.mxu0 0.0
  %4787 = vmatpush1.msra.mxu0 %v4598
  %4788 = vmatprep.subr.mxu0 0.0
  %4789 = vmatpush1.msra.mxu0 %v4599
  %4790 = vmatprep.subr.mxu0 0.0
  %4791 = vmatpush1.msra.mxu0 %v4600
  %4792 = vmatprep.subr.mxu0 0.0
  %4793 = vmatpush1.msra.mxu0 %v4601
  %4794 = vmatprep.subr.mxu0 0.0
  %4795 = vmatpush1.msra.mxu0 %v4602
  %4796 = vmatprep.mubr.f32.mxu0 %v4535
  %4797 = vmatmul.mubr.f32.gmra.mrb[0].mxu0 %v4534
  %v4798 = vpop.f32.mrb[0].mxu0
  %v4799 = vadd.f32 %v4729, %v4798
  %v4800 = vpop.f32.mrb[0].mxu0
  %4801 = vdwg.mxu0
  %4802 = vmatprep.subr.mxu0 0.0
  %4803 = vmatpush1.msra.mxu0 %v4603
  %4804 = vmatprep.subr.mxu0 0.0
  %4805 = vmatpush1.msra.mxu0 %v4604
  %4806 = vmatprep.subr.mxu0 0.0
  %4807 = vmatpush1.msra.mxu0 %v4605
  %4808 = vmatprep.subr.mxu0 0.0
  %4809 = vmatpush1.msra.mxu0 %v4606
  %4810 = vmatprep.subr.mxu0 0.0
  %4811 = vmatpush1.msra.mxu0 %v4607
  %4812 = vmatprep.subr.mxu0 0.0
  %4813 = vmatpush1.msra.mxu0 %v4608
  %4814 = vmatprep.subr.mxu0 0.0
  %4815 = vmatpush1.msra.mxu0 %v4609
  %4816 = vmatprep.subr.mxu0 0.0
  %4817 = vmatpush1.msra.mxu0 %v4610
  %4818 = vmatprep.subr.mxu0 0.0
  %4819 = vmatpush1.msra.mxu0 %v4611
  %4820 = vmatprep.subr.mxu0 0.0
  %4821 = vmatpush1.msra.mxu0 %v4612
  %4822 = vmatprep.subr.mxu0 0.0
  %4823 = vmatpush1.msra.mxu0 %v4613
  %4824 = vmatprep.subr.mxu0 0.0
  %4825 = vmatpush1.msra.mxu0 %v4614
  %4826 = vmatprep.subr.mxu0 0.0
  %4827 = vmatpush1.msra.mxu0 %v4615
  %4828 = vmatprep.subr.mxu0 0.0
  %4829 = vmatpush1.msra.mxu0 %v4616
  %4830 = vmatprep.subr.mxu0 0.0
  %4831 = vmatpush1.msra.mxu0 %v4617
  %4832 = vmatprep.subr.mxu0 0.0
  %4833 = vmatpush1.msra.mxu0 %v4618
  %4834 = vmatprep.subr.mxu0 0.0
  %4835 = vmatpush1.msra.mxu0 %v4619
  %4836 = vmatprep.subr.mxu0 0.0
  %4837 = vmatpush1.msra.mxu0 %v4620
  %4838 = vmatprep.subr.mxu0 0.0
  %4839 = vmatpush1.msra.mxu0 %v4621
  %4840 = vmatprep.subr.mxu0 0.0
  %4841 = vmatpush1.msra.mxu0 %v4622
  %4842 = vmatprep.subr.mxu0 0.0
  %4843 = vmatpush1.msra.mxu0 %v4623
  %4844 = vmatprep.subr.mxu0 0.0
  %4845 = vmatpush1.msra.mxu0 %v4624
  %4846 = vmatprep.subr.mxu0 0.0
  %4847 = vmatpush1.msra.mxu0 %v4625
  %4848 = vmatprep.subr.mxu0 0.0
  %4849 = vmatpush1.msra.mxu0 %v4626
  %4850 = vmatprep.subr.mxu0 0.0
  %4851 = vmatpush1.msra.mxu0 %v4627
  %4852 = vmatprep.subr.mxu0 0.0
  %4853 = vmatpush1.msra.mxu0 %v4628
  %4854 = vmatprep.subr.mxu0 0.0
  %4855 = vmatpush1.msra.mxu0 %v4629
  %4856 = vmatprep.subr.mxu0 0.0
  %4857 = vmatpush1.msra.mxu0 %v4630
  %4858 = vmatprep.subr.mxu0 0.0
  %4859 = vmatpush1.msra.mxu0 %v4631
  %4860 = vmatprep.subr.mxu0 0.0
  %4861 = vmatpush1.msra.mxu0 %v4632
  %4862 = vmatprep.subr.mxu0 0.0
  %4863 = vmatpush1.msra.mxu0 %v4633
  %4864 = vmatprep.subr.mxu0 0.0
  %4865 = vmatpush1.msra.mxu0 %v4634
  %4866 = vmatprep.mubr.f32.mxu0 %v4537
  %4867 = vmatmul.mubr.f32.gmra.mrb[0].mxu0 %v4536
  %v4868 = vpop.f32.mrb[0].mxu0
  %v4869 = vadd.f32 %v4799, %v4868
  %v4870 = vpop.f32.mrb[0].mxu0
  %4871 = vdwg.mxu0
  %4872 = vmatprep.subr.mxu0 0.0
  %4873 = vmatpush1.msra.mxu0 %v4635
  %4874 = vmatprep.subr.mxu0 0.0
  %4875 = vmatpush1.msra.mxu0 %v4636
  %4876 = vmatprep.subr.mxu0 0.0
  %4877 = vmatpush1.msra.mxu0 %v4637
  %4878 = vmatprep.subr.mxu0 0.0
  %4879 = vmatpush1.msra.mxu0 %v4638
  %4880 = vmatprep.subr.mxu0 0.0
  %4881 = vmatpush1.msra.mxu0 %v4639
  %4882 = vmatprep.subr.mxu0 0.0
  %4883 = vmatpush1.msra.mxu0 %v4640
  %4884 = vmatprep.subr.mxu0 0.0
  %4885 = vmatpush1.msra.mxu0 %v4641
  %4886 = vmatprep.subr.mxu0 0.0
  %4887 = vmatpush1.msra.mxu0 %v4642
  %4888 = vmatprep.subr.mxu0 0.0
  %4889 = vmatpush1.msra.mxu0 %v4643
  %4890 = vmatprep.subr.mxu0 0.0
  %4891 = vmatpush1.msra.mxu0 %v4644
  %4892 = vmatprep.subr.mxu0 0.0
  %4893 = vmatpush1.msra.mxu0 %v4645
  %4894 = vmatprep.subr.mxu0 0.0
  %4895 = vmatpush1.msra.mxu0 %v4646
  %4896 = vmatprep.subr.mxu0 0.0
  %4897 = vmatpush1.msra.mxu0 %v4647
  %4898 = vmatprep.subr.mxu0 0.0
  %4899 = vmatpush1.msra.mxu0 %v4648
  %4900 = vmatprep.subr.mxu0 0.0
  %4901 = vmatpush1.msra.mxu0 %v4649
  %4902 = vmatprep.subr.mxu0 0.0
  %4903 = vmatpush1.msra.mxu0 %v4650
  %4904 = vmatprep.subr.mxu0 0.0
  %4905 = vmatpush1.msra.mxu0 %v4651
  %4906 = vmatprep.subr.mxu0 0.0
  %4907 = vmatpush1.msra.mxu0 %v4652
  %4908 = vmatprep.subr.mxu0 0.0
  %4909 = vmatpush1.msra.mxu0 %v4653
  %4910 = vmatprep.subr.mxu0 0.0
  %4911 = vmatpush1.msra.mxu0 %v4654
  %4912 = vmatprep.subr.mxu0 0.0
  %4913 = vmatpush1.msra.mxu0 %v4655
  %4914 = vmatprep.subr.mxu0 0.0
  %4915 = vmatpush1.msra.mxu0 %v4656
  %4916 = vmatprep.subr.mxu0 0.0
  %4917 = vmatpush1.msra.mxu0 %v4657
  %4918 = vmatprep.subr.mxu0 0.0
  %4919 = vmatpush1.msra.mxu0 %v4658
  %4920 = vmatprep.subr.mxu0 0.0
  %4921 = vmatpush1.msra.mxu0 0.0
  %4922 = vmatprep.subr.mxu0 0.0
  %4923 = vmatpush1.msra.mxu0 0.0
  %4924 = vmatprep.subr.mxu0 0.0
  %4925 = vmatpush1.msra.mxu0 0.0
  %4926 = vmatprep.subr.mxu0 0.0
  %4927 = vmatpush1.msra.mxu0 0.0
  %4928 = vmatprep.subr.mxu0 0.0
  %4929 = vmatpush1.msra.mxu0 0.0
  %4930 = vmatprep.subr.mxu0 0.0
  %4931 = vmatpush1.msra.mxu0 0.0
  %4932 = vmatprep.subr.mxu0 0.0
  %4933 = vmatpush1.msra.mxu0 0.0
  %4934 = vmatprep.subr.mxu0 0.0
  %4935 = vmatpush1.msra.mxu0 0.0
  %4936 = vmatprep.mubr.f32.mxu0 %v4660
  %4937 = vmatmul.mubr.f32.gmra.mrb[0].mxu0 %v4538
  %v4938 = vpop.f32.mrb[0].mxu0
  %v4939 = vadd.f32 %v4869, %v4938
  %v4940 = vpop.f32.mrb[0].mxu0
  %4941 = vdwg.mxu0
  %v4942 = vmax.f32 %v4939, 0.0
  %v4944 = vsel %vm359, %v4942, 0
  %4946 = vmatprep.subr.mxu0 0.0
  %4947 = vmatpush1.msra.mxu0 %v142
  %4948 = vmatprep.subr.mxu0 0.0
  %4949 = vmatpush1.msra.mxu0 %v143
  %4950 = vmatprep.subr.mxu0 0.0
  %4951 = vmatpush1.msra.mxu0 %v144
  %4952 = vmatprep.subr.mxu0 0.0
  %4953 = vmatpush1.msra.mxu0 %v145
  %4954 = vmatprep.subr.mxu0 0.0
  %4955 = vmatpush1.msra.mxu0 0.0
  %4956 = vmatprep.subr.mxu0 0.0
  %4957 = vmatpush1.msra.mxu0 0.0
  %4958 = vmatprep.subr.mxu0 0.0
  %4959 = vmatpush1.msra.mxu0 0.0
  %4960 = vmatprep.subr.mxu0 0.0
  %4961 = vmatpush1.msra.mxu0 0.0
  %4962 = vmatprep.subr.mxu0 0.0
  %4963 = vmatpush1.msra.mxu0 0.0
  %4964 = vmatprep.subr.mxu0 0.0
  %4965 = vmatpush1.msra.mxu0 0.0
  %4966 = vmatprep.subr.mxu0 0.0
  %4967 = vmatpush1.msra.mxu0 0.0
  %4968 = vmatprep.subr.mxu0 0.0
  %4969 = vmatpush1.msra.mxu0 0.0
  %4970 = vmatprep.subr.mxu0 0.0
  %4971 = vmatpush1.msra.mxu0 0.0
  %4972 = vmatprep.subr.mxu0 0.0
  %4973 = vmatpush1.msra.mxu0 0.0
  %4974 = vmatprep.subr.mxu0 0.0
  %4975 = vmatpush1.msra.mxu0 0.0
  %4976 = vmatprep.subr.mxu0 0.0
  %4977 = vmatpush1.msra.mxu0 0.0
  %4978 = vmatprep.subr.mxu0 0.0
  %4979 = vmatpush1.msra.mxu0 0.0
  %4980 = vmatprep.subr.mxu0 0.0
  %4981 = vmatpush1.msra.mxu0 0.0
  %4982 = vmatprep.subr.mxu0 0.0
  %4983 = vmatpush1.msra.mxu0 0.0
  %4984 = vmatprep.subr.mxu0 0.0
  %4985 = vmatpush1.msra.mxu0 0.0
  %4986 = vmatprep.subr.mxu0 0.0
  %4987 = vmatpush1.msra.mxu0 0.0
  %4988 = vmatprep.subr.mxu0 0.0
  %4989 = vmatpush1.msra.mxu0 0.0
  %4990 = vmatprep.subr.mxu0 0.0
  %4991 = vmatpush1.msra.mxu0 0.0
  %4992 = vmatprep.subr.mxu0 0.0
  %4993 = vmatpush1.msra.mxu0 0.0
  %4994 = vmatprep.subr.mxu0 0.0
  %4995 = vmatpush1.msra.mxu0 0.0
  %4996 = vmatprep.subr.mxu0 0.0
  %4997 = vmatpush1.msra.mxu0 0.0
  %4998 = vmatprep.subr.mxu0 0.0
  %4999 = vmatpush1.msra.mxu0 0.0
  %5000 = vmatprep.subr.mxu0 0.0
  %5001 = vmatpush1.msra.mxu0 0.0
  %5002 = vmatprep.subr.mxu0 0.0
  %5003 = vmatpush1.msra.mxu0 0.0
  %5004 = vmatprep.subr.mxu0 0.0
  %5005 = vmatpush1.msra.mxu0 0.0
  %5006 = vmatprep.subr.mxu0 0.0
  %5007 = vmatpush1.msra.mxu0 0.0
  %5008 = vmatprep.subr.mxu0 0.0
  %5009 = vmatpush1.msra.mxu0 0.0
  %5010 = vmatprep.mubr.f32.mxu0 0.0
  %5011 = vmatmul.mubr.f32.gmra.mrb[0].mxu0 %v4944
  %v5012 = vpop.f32.mrb[0].mxu0
  %v5013 = vadd.f32 %v146, %v5012
  %v5014 = vpop.f32.mrb[0].mxu0
  %5015 = vdwg.mxu0
  %5016 = vst [vmem:[%s3] sm:$0xff] %v5013
  // Predicated region
  $region14: #{capsule_rnn_forward.1} parent=0 // pred_check
    _
  $region15: #{capsule_rnn_forward.1} parent=0 // pred_check_branch
    %5018 = sbr.rel (0) target = $region17
  $region16: #{capsule_rnn_forward.1} parent=0 // pred_region
    _
  $region17: #{capsule_rnn_forward.1} parent=0 // pred_fallthru
    _
  // Predicated region
  $region18: #{capsule_rnn_forward.1} parent=0 // pred_check
    _
  $region19: #{capsule_rnn_forward.1} parent=0 // pred_check_branch
    %5020 = sbr.rel (0) target = $region21
  $region20: #{capsule_rnn_forward.1} parent=0 // pred_region
    _
  $region21: #{capsule_rnn_forward.1} parent=0 // pred_fallthru
    _

</llo_original>
